<compile_context>
chip_gen: v7x
topology: tpu7x:2x2x1
jax: 0.10.0
libtpu: 0.0.40
codegen_flags: <defaults>
</compile_context>

<pallas_src>
import math
import functools

import jax
import jax.numpy as jnp
from jax.experimental import pallas as pl
from jax.experimental.pallas import tpu as pltpu


# ---------------- small (but structurally faithful) hyper-parameters ----------------
KERNEL_SIZE = 5
RESIDUAL_CH = 8
SKIP_CH = 4
DILATION_DEPTH = 3
NUM_STACKS = 2
IN_CH = 1
OUT_CH = 2

DILATIONS = tuple(2 ** i for _ in range(NUM_STACKS) for i in range(DILATION_DEPTH))
NUM_BLOCKS = len(DILATIONS)
MAX_PAD = (KERNEL_SIZE - 1) * max(DILATIONS)   # receptive-field left shift (=16 here)
PAD = 128                                      # lane-aligned carried-state width (>= MAX_PAD)
assert PAD >= MAX_PAD


# --------------------------------- parameter init -----------------------------------
def _uniform(key, shape, fan_in):
    bound = 1.0 / math.sqrt(fan_in)
    return jax.random.uniform(key, shape, jnp.float32, -bound, bound)


def init_params(key):
    """Deterministic synthetic parameters (PyTorch Conv1d weight layout (Cout, Cin, K))."""
    blocks = []
    for d in DILATIONS:
        keys = jax.random.split(key, 11)
        key = keys[0]
        blocks.append(dict(
            dilation=d,
            w_in=_uniform(keys[1], (RESIDUAL_CH, IN_CH), IN_CH),
            b_in=_uniform(keys[2], (RESIDUAL_CH,), IN_CH),
            w_f=_uniform(keys[3], (RESIDUAL_CH, RESIDUAL_CH, KERNEL_SIZE),
                         RESIDUAL_CH * KERNEL_SIZE),
            b_f=_uniform(keys[4], (RESIDUAL_CH,), RESIDUAL_CH * KERNEL_SIZE),
            w_g=_uniform(keys[5], (RESIDUAL_CH, RESIDUAL_CH, KERNEL_SIZE),
                         RESIDUAL_CH * KERNEL_SIZE),
            b_g=_uniform(keys[6], (RESIDUAL_CH,), RESIDUAL_CH * KERNEL_SIZE),
            w_skip=_uniform(keys[7], (SKIP_CH, RESIDUAL_CH), RESIDUAL_CH),
            b_skip=_uniform(keys[8], (SKIP_CH,), RESIDUAL_CH),
            w_out=_uniform(keys[9], (IN_CH, RESIDUAL_CH), RESIDUAL_CH),
            b_out=_uniform(keys[10], (IN_CH,), RESIDUAL_CH),
        ))
    keys = jax.random.split(key, 5)
    return dict(
        blocks=blocks,
        w_f1=_uniform(keys[1], (SKIP_CH, SKIP_CH), SKIP_CH),
        b_f1=_uniform(keys[2], (SKIP_CH,), SKIP_CH),
        w_f2=_uniform(keys[3], (OUT_CH, SKIP_CH), SKIP_CH),
        b_f2=_uniform(keys[4], (OUT_CH,), SKIP_CH),
    )


# ----------------------------------- Pallas kernel -----------------------------------
def _wavenet_kernel(TT,
                    x_ref,
                    w_in_ref, b_in_ref,
                    w_fg_ref, b_fg_ref,
                    w_so_ref, b_so_ref,
                    w_f1_ref, b_f1_ref,
                    w_f2_ref, b_f2_ref,
                    out_ref,
                    shift_ref, carry_ref):
    """One (batch, time-tile) grid step: x tile (1, TT) -> out tile (2, TT)."""
    t = pl.program_id(1)

    # Reset the carried causal state at the start of each batch's time sweep.
    @pl.when(t == 0)
    def _():
        carry_ref[...] = jnp.zeros_like(carry_ref)

    out = x_ref[...]                                   # (1, TT)
    skip_acc = jnp.zeros((SKIP_CH, TT), jnp.float32)

    for blk in range(NUM_BLOCKS):                      # NUM_BLOCKS = 6, fully unrolled
        d = DILATIONS[blk]
        w_in = w_in_ref[blk]                           # (R, 1)
        b_in = b_in_ref[blk]                           # (R, 1)
        w_fg = w_fg_ref[blk]                           # (2R, K*R)
        b_fg = b_fg_ref[blk]                           # (2R, 1)
        w_so = w_so_ref[blk]                           # (S+1, R)
        b_so = b_so_ref[blk]                           # (S+1, 1)

        # 1x1 input conv with Cin == 1: rank-1 broadcast multiply on the VPU.
        residual = w_in * out + b_in                   # (R, TT)

        # Stage [carried tail | residual] so every tap is ONE contiguous shifted read.
        shift_ref[:, :PAD] = carry_ref[blk]
        shift_ref[:, PAD:PAD + TT] = residual
        carry_ref[blk] = residual[:, TT - PAD:TT]      # aligned: TT is a multiple of 128

        # Fused filter+gate dilated causal conv, accumulated over K taps (no im2col buf).
        fg = jnp.zeros((2 * RESIDUAL_CH, TT), jnp.float32)
        for k in range(KERNEL_SIZE):
            s = (KERNEL_SIZE - 1 - k) * d              # tap k sees residual shifted right by s
            tap = shift_ref[:, PAD - s:PAD - s + TT]   # (R, TT)
            fg = fg + jnp.dot(w_fg[:, k * RESIDUAL_CH:(k + 1) * RESIDUAL_CH], tap,
                              preferred_element_type=jnp.float32)
        fg = fg + b_fg                                 # (2R, TT)

        gated = jnp.tanh(fg[:RESIDUAL_CH]) * jax.nn.sigmoid(fg[RESIDUAL_CH:])   # (R, TT)

        # Fused skip + out 1x1 convs: ONE (S+1, R) @ (R, TT) matmul.
        so = jnp.dot(w_so, gated, preferred_element_type=jnp.float32) + b_so    # (S+1, TT)
        skip_acc = skip_acc + so[:SKIP_CH]
        out = so[SKIP_CH:SKIP_CH + 1] + out

    h = jnp.maximum(jnp.dot(w_f1_ref[...], skip_acc,
                            preferred_element_type=jnp.float32) + b_f1_ref[...], 0.0)
    o = jnp.dot(w_f2_ref[...], h,
                preferred_element_type=jnp.float32) + b_f2_ref[...]             # (2, TT)
    # Direct row stores (no concatenate / sublane relayout).
    out_ref[0:1, :] = o[0:1, :]
    out_ref[1:2, :] = jnp.exp(0.5 * o[1:2, :])


# ------------------------------------- wrapper ---------------------------------------
def _zero_map(nd, b, t):
    return (0,) * nd


def wavenet_forward(x, cur_gt, params, t_tile=None):
    """x: (B, 1, T) f32  ->  (means (B, T), stds (B, T)).  cur_gt unused (as in PyTorch)."""
    del cur_gt
    B, _, T = x.shape
    blocks = params["blocks"]

    # Lane-aligned time tile (multiple of 128, >= PAD); pad T up to a tile multiple.
    if t_tile is None:
        t_tile = min(512, ((T + 127) // 128) * 128)
    t_tile = max(128, (t_tile // 128) * 128)
    T_padded = ((T + t_tile - 1) // t_tile) * t_tile
    if T_padded != T:
        x = jnp.pad(x, ((0, 0), (0, 0), (0, T_padded - T)))
    num_t_tiles = T_padded // t_tile

    def pack_taps(w):
        # PyTorch conv weight (Cout, Cin, K) -> (Cout, K*Cin): tap k occupies
        # columns [k*Cin, (k+1)*Cin), matching the staged-residual layout.
        co, ci, k = w.shape
        return jnp.transpose(w, (0, 2, 1)).reshape(co, k * ci)

    w_in = jnp.stack([p["w_in"] for p in blocks])                               # (NB, R, 1)
    b_in = jnp.stack([p["b_in"] for p in blocks])[..., None]                    # (NB, R, 1)
    w_fg = jnp.stack([jnp.concatenate([pack_taps(p["w_f"]), pack_taps(p["w_g"])], axis=0)
                      for p in blocks])                                         # (NB, 2R, K*R)
    b_fg = jnp.stack([jnp.concatenate([p["b_f"], p["b_g"]]) for p in blocks])[..., None]
    w_so = jnp.stack([jnp.concatenate([p["w_skip"], p["w_out"]], axis=0)
                      for p in blocks])                                         # (NB, S+1, R)
    b_so = jnp.stack([jnp.concatenate([p["b_skip"], p["b_out"]]) for p in blocks])[..., None]
    w_f1, b_f1 = params["w_f1"], params["b_f1"][..., None]
    w_f2, b_f2 = params["w_f2"], params["b_f2"][..., None]

    w_args = (w_in, b_in, w_fg, b_fg, w_so, b_so, w_f1, b_f1, w_f2, b_f2)

    # Data specs: batch is a squeezed leading grid dim, time is tiled on the lane axis.
    x_spec = pl.BlockSpec((pl.Squeezed(), IN_CH, t_tile), lambda b, t: (b, 0, t))
    out_spec = pl.BlockSpec((pl.Squeezed(), OUT_CH, t_tile), lambda b, t: (b, 0, t))
    # Weight specs: constant block index -> VMEM-resident across the whole grid.
    w_specs = [pl.BlockSpec(a.shape, functools.partial(_zero_map, a.ndim)) for a in w_args]

    kernel = functools.partial(_wavenet_kernel, t_tile)
    res = pl.pallas_call(
        kernel,
        out_shape=jax.ShapeDtypeStruct((B, OUT_CH, T_padded), jnp.float32),
        grid=(B, num_t_tiles),
        in_specs=[x_spec] + w_specs,
        out_specs=out_spec,
        scratch_shapes=[
            pltpu.VMEM((RESIDUAL_CH, PAD + t_tile), jnp.float32),        # staging buffer
            pltpu.VMEM((NUM_BLOCKS, RESIDUAL_CH, PAD), jnp.float32),     # carried causal state
        ],
        compiler_params=pltpu.CompilerParams(
            dimension_semantics=("parallel", "arbitrary"),   # batch across cores, time sequential
            vmem_limit_bytes=32 * 1024 * 1024,
        ),
    )(x, *w_args)

    res = res[:, :, :T]
    return res[:, 0, :], res[:, 1, :]


# ------------------------------ pure-JAX reference -----------------------------------
def _causal_conv_ref(x, w, b, d):
    k = w.shape[-1]
    y = jax.lax.conv_general_dilated(
        x, w, window_strides=(1,), padding=[((k - 1) * d, 0)],
        rhs_dilation=(d,), dimension_numbers=("NCH", "OIH", "NCH"),
        precision=jax.lax.Precision.HIGHEST)
    return y + b[None, :, None]


def _conv1x1_ref(x, w, b):
    return jnp.einsum("oi,bit->bot", w, x,
                      precision=jax.lax.Precision.HIGHEST) + b[None, :, None]


def forward_ref(x, params):
    out = x
    skip_acc = 0.0
    for p in params["blocks"]:
        residual = _conv1x1_ref(out, p["w_in"], p["b_in"])
        filt = jnp.tanh(_causal_conv_ref(residual, p["w_f"], p["b_f"], p["dilation"]))
        gate = jax.nn.sigmoid(_causal_conv_ref(residual, p["w_g"], p["b_g"], p["dilation"]))
        gated = filt * gate
        skip = _conv1x1_ref(gated, p["w_skip"], p["b_skip"])
        out = _conv1x1_ref(gated, p["w_out"], p["b_out"]) + out
        skip_acc = skip_acc + skip
    h = jax.nn.relu(_conv1x1_ref(skip_acc, params["w_f1"], params["b_f1"]))
    o = _conv1x1_ref(h, params["w_f2"], params["b_f2"])
    return o[:, 0, :], jnp.exp(0.5 * o[:, 1, :])


# ---------------------------------------- main ----------------------------------------
if __name__ == "__main__":
    B, T = 2, 256
    root = jax.random.PRNGKey(0)
    k_param, k_x, k_gt = jax.random.split(root, 3)
    params = init_params(k_param)
    x = jax.random.normal(k_x, (B, IN_CH, T), jnp.float32)
    cur_gt = jax.random.normal(k_gt, (B, T), jnp.float32)   # unused by forward (as in PyTorch)

    # t_tile=128 -> 2 time tiles per batch, exercising the carried causal state.
    means, stds = wavenet_forward(x, cur_gt, params, t_tile=128)
    means, stds = jax.block_until_ready((means, stds))

    m_ref, s_ref = forward_ref(x, params)
    assert means.shape == (B, T) and stds.shape == (B, T)
    assert jnp.allclose(means, m_ref, atol=2e-3, rtol=2e-3), float(jnp.max(jnp.abs(means - m_ref)))
    assert jnp.allclose(stds, s_ref, atol=2e-3, rtol=2e-3), float(jnp.max(jnp.abs(stds - s_ref)))
    print("KERNEL_OK")
</pallas_src>

<mosaic_0001>
module attributes {stable_mosaic.version = 11 : i64} {
  func.func @_wavenet_kernel(%arg0: i32, %arg1: i32, %arg2: memref<1x1x128xf32, #tpu.memory_space<vmem>>, %arg3: memref<6x8x1xf32, #tpu.memory_space<vmem>>, %arg4: memref<6x8x1xf32, #tpu.memory_space<vmem>>, %arg5: memref<6x16x40xf32, #tpu.memory_space<vmem>>, %arg6: memref<6x16x1xf32, #tpu.memory_space<vmem>>, %arg7: memref<6x5x8xf32, #tpu.memory_space<vmem>>, %arg8: memref<6x5x1xf32, #tpu.memory_space<vmem>>, %arg9: memref<4x4xf32, #tpu.memory_space<vmem>>, %arg10: memref<4x1xf32, #tpu.memory_space<vmem>>, %arg11: memref<2x4xf32, #tpu.memory_space<vmem>>, %arg12: memref<2x1xf32, #tpu.memory_space<vmem>>, %arg13: memref<1x2x128xf32, #tpu.memory_space<vmem>>, %arg14: memref<8x256xf32, #tpu.memory_space<vmem>>, %arg15: memref<6x8x128xf32, #tpu.memory_space<vmem>>) attributes {dimension_semantics = [#tpu.dimension_semantics<parallel>, #tpu.dimension_semantics<arbitrary>], iteration_bounds = array<i64: 2, 2>, scalar_prefetch = 0 : i64, scratch_operands = 2 : i64, tpu.core_type = #tpu.core_type<tc>, window_params = [{transform_indices = @transform_0, window_bounds = array<i64: 1, 1, 128>}, {pipeline_mode = #tpu.pipeline_mode<synchronous>, transform_indices = @transform_1, window_bounds = array<i64: 6, 8, 1>}, {pipeline_mode = #tpu.pipeline_mode<synchronous>, transform_indices = @transform_2, window_bounds = array<i64: 6, 8, 1>}, {pipeline_mode = #tpu.pipeline_mode<synchronous>, transform_indices = @transform_3, window_bounds = array<i64: 6, 16, 40>}, {pipeline_mode = #tpu.pipeline_mode<synchronous>, transform_indices = @transform_4, window_bounds = array<i64: 6, 16, 1>}, {pipeline_mode = #tpu.pipeline_mode<synchronous>, transform_indices = @transform_5, window_bounds = array<i64: 6, 5, 8>}, {pipeline_mode = #tpu.pipeline_mode<synchronous>, transform_indices = @transform_6, window_bounds = array<i64: 6, 5, 1>}, {pipeline_mode = #tpu.pipeline_mode<synchronous>, transform_indices = @transform_7, window_bounds = array<i64: 4, 4>}, {pipeline_mode = #tpu.pipeline_mode<synchronous>, transform_indices = @transform_8, window_bounds = array<i64: 4, 1>}, {pipeline_mode = #tpu.pipeline_mode<synchronous>, transform_indices = @transform_9, window_bounds = array<i64: 2, 4>}, {pipeline_mode = #tpu.pipeline_mode<synchronous>, transform_indices = @transform_10, window_bounds = array<i64: 2, 1>}, {transform_indices = @transform_11, window_bounds = array<i64: 1, 2, 128>}]} {
    %c0_i32 = arith.constant 0 : i32
    %0 = arith.cmpi eq, %arg1, %c0_i32 : i32
    %1 = arith.extui %0 : i1 to i32
    %c0_i32_0 = arith.constant 0 : i32
    %2 = arith.cmpi ne, %1, %c0_i32_0 : i32
    scf.if %2 {
      %cst_283 = arith.constant 0.000000e+00 : f32
      %405 = vector.broadcast %cst_283 : f32 to vector<6x8x128xf32>
      %c0_284 = arith.constant 0 : index
      %c0_285 = arith.constant 0 : index
      %c0_286 = arith.constant 0 : index
      %406 = vector.load %arg15[%c0_284, %c0_285, %c0_286] : memref<6x8x128xf32, #tpu.memory_space<vmem>>, vector<6x8x128xf32>
      tpu.vector_store %arg15[%c0_284, %c0_285, %c0_286], %405 {strides = array<i32>} : memref<6x8x128xf32, #tpu.memory_space<vmem>>, vector<6x8x128xf32>,
    } else {
    }
    %c0 = arith.constant 0 : index
    %c0_1 = arith.constant 0 : index
    %c0_2 = arith.constant 0 : index
    %3 = vector.load %arg2[%c0, %c0_1, %c0_2] : memref<1x1x128xf32, #tpu.memory_space<vmem>>, vector<1x1x128xf32>
    %4 = vector.shape_cast %3 : vector<1x1x128xf32> to vector<1x128xf32>
    %cst = arith.constant 0.000000e+00 : f32
    %5 = vector.broadcast %cst : f32 to vector<4x128xf32>
    %c0_3 = arith.constant 0 : index
    %c0_4 = arith.constant 0 : index
    %c0_5 = arith.constant 0 : index
    %6 = vector.load %arg3[%c0_3, %c0_4, %c0_5] : memref<6x8x1xf32, #tpu.memory_space<vmem>>, vector<1x8x1xf32>
    %7 = vector.shape_cast %6 : vector<1x8x1xf32> to vector<8x1xf32>
    %c0_6 = arith.constant 0 : index
    %c0_7 = arith.constant 0 : index
    %c0_8 = arith.constant 0 : index
    %8 = vector.load %arg4[%c0_6, %c0_7, %c0_8] : memref<6x8x1xf32, #tpu.memory_space<vmem>>, vector<1x8x1xf32>
    %9 = vector.shape_cast %8 : vector<1x8x1xf32> to vector<8x1xf32>
    %c0_9 = arith.constant 0 : index
    %c0_10 = arith.constant 0 : index
    %c0_11 = arith.constant 0 : index
    %10 = vector.load %arg5[%c0_9, %c0_10, %c0_11] : memref<6x16x40xf32, #tpu.memory_space<vmem>>, vector<1x16x40xf32>
    %11 = vector.shape_cast %10 : vector<1x16x40xf32> to vector<16x40xf32>
    %c0_12 = arith.constant 0 : index
    %c0_13 = arith.constant 0 : index
    %c0_14 = arith.constant 0 : index
    %12 = vector.load %arg6[%c0_12, %c0_13, %c0_14] : memref<6x16x1xf32, #tpu.memory_space<vmem>>, vector<1x16x1xf32>
    %13 = vector.shape_cast %12 : vector<1x16x1xf32> to vector<16x1xf32>
    %c0_15 = arith.constant 0 : index
    %c0_16 = arith.constant 0 : index
    %c0_17 = arith.constant 0 : index
    %14 = vector.load %arg7[%c0_15, %c0_16, %c0_17] : memref<6x5x8xf32, #tpu.memory_space<vmem>>, vector<1x5x8xf32>
    %15 = vector.shape_cast %14 : vector<1x5x8xf32> to vector<5x8xf32>
    %c0_18 = arith.constant 0 : index
    %c0_19 = arith.constant 0 : index
    %c0_20 = arith.constant 0 : index
    %16 = vector.load %arg8[%c0_18, %c0_19, %c0_20] : memref<6x5x1xf32, #tpu.memory_space<vmem>>, vector<1x5x1xf32>
    %17 = vector.shape_cast %16 : vector<1x5x1xf32> to vector<5x1xf32>
    %18 = vector.broadcast %7 : vector<8x1xf32> to vector<8x128xf32>
    %19 = vector.broadcast %4 : vector<1x128xf32> to vector<8x128xf32>
    %20 = arith.mulf %18, %19 : vector<8x128xf32>
    %21 = vector.broadcast %9 : vector<8x1xf32> to vector<8x128xf32>
    %22 = arith.addf %20, %21 : vector<8x128xf32>
    %c0_21 = arith.constant 0 : index
    %c0_22 = arith.constant 0 : index
    %c0_23 = arith.constant 0 : index
    %23 = vector.load %arg15[%c0_21, %c0_22, %c0_23] : memref<6x8x128xf32, #tpu.memory_space<vmem>>, vector<1x8x128xf32>
    %24 = vector.shape_cast %23 : vector<1x8x128xf32> to vector<8x128xf32>
    %c0_24 = arith.constant 0 : index
    %c0_25 = arith.constant 0 : index
    %25 = vector.load %arg14[%c0_24, %c0_25] : memref<8x256xf32, #tpu.memory_space<vmem>>, vector<8x128xf32>
    tpu.vector_store %arg14[%c0_24, %c0_25], %24 {strides = array<i32>} : memref<8x256xf32, #tpu.memory_space<vmem>>, vector<8x128xf32>,
    %c0_26 = arith.constant 0 : index
    %c128 = arith.constant 128 : index
    %26 = vector.load %arg14[%c0_26, %c128] : memref<8x256xf32, #tpu.memory_space<vmem>>, vector<8x128xf32>
    tpu.vector_store %arg14[%c0_26, %c128], %22 {strides = array<i32>} : memref<8x256xf32, #tpu.memory_space<vmem>>, vector<8x128xf32>,
    %c0_27 = arith.constant 0 : index
    %c0_28 = arith.constant 0 : index
    %c0_29 = arith.constant 0 : index
    %27 = vector.load %arg15[%c0_27, %c0_28, %c0_29] : memref<6x8x128xf32, #tpu.memory_space<vmem>>, vector<1x8x128xf32>
    %28 = vector.shape_cast %27 : vector<1x8x128xf32> to vector<8x128xf32>
    %29 = vector.shape_cast %22 : vector<8x128xf32> to vector<1x8x128xf32>
    tpu.vector_store %arg15[%c0_27, %c0_28, %c0_29], %29 {strides = array<i32>} : memref<6x8x128xf32, #tpu.memory_space<vmem>>, vector<1x8x128xf32>,
    %cst_30 = arith.constant 0.000000e+00 : f32
    %30 = vector.broadcast %cst_30 : f32 to vector<16x128xf32>
    %c0_31 = arith.constant 0 : index
    %c124 = arith.constant 124 : index
    %31 = vector.load %arg14[%c0_31, %c124] : memref<8x256xf32, #tpu.memory_space<vmem>>, vector<8x128xf32>
    %32 = vector.extract_strided_slice %11 {offsets = [0, 0], sizes = [16, 8], strides = [1, 1]} : vector<16x40xf32> to vector<16x8xf32>
    %cst_32 = arith.constant dense<0.000000e+00> : vector<16x128xf32>
    %33 = tpu.matmul %32, %31, %cst_32 {dimension_numbers = #tpu.dot_dimension_numbers<[1], [0], [0], [1], [0, 0, 1, 1], [], []>} : vector<16x8xf32>, vector<8x128xf32>, vector<16x128xf32> -> vector<16x128xf32>
    %34 = arith.addf %30, %33 : vector<16x128xf32>
    %c0_33 = arith.constant 0 : index
    %c125 = arith.constant 125 : index
    %35 = vector.load %arg14[%c0_33, %c125] : memref<8x256xf32, #tpu.memory_space<vmem>>, vector<8x128xf32>
    %36 = vector.extract_strided_slice %11 {offsets = [0, 8], sizes = [16, 8], strides = [1, 1]} : vector<16x40xf32> to vector<16x8xf32>
    %cst_34 = arith.constant dense<0.000000e+00> : vector<16x128xf32>
    %37 = tpu.matmul %36, %35, %cst_34 {dimension_numbers = #tpu.dot_dimension_numbers<[1], [0], [0], [1], [0, 0, 1, 1], [], []>} : vector<16x8xf32>, vector<8x128xf32>, vector<16x128xf32> -> vector<16x128xf32>
    %38 = arith.addf %34, %37 : vector<16x128xf32>
    %c0_35 = arith.constant 0 : index
    %c126 = arith.constant 126 : index
    %39 = vector.load %arg14[%c0_35, %c126] : memref<8x256xf32, #tpu.memory_space<vmem>>, vector<8x128xf32>
    %40 = vector.extract_strided_slice %11 {offsets = [0, 16], sizes = [16, 8], strides = [1, 1]} : vector<16x40xf32> to vector<16x8xf32>
    %cst_36 = arith.constant dense<0.000000e+00> : vector<16x128xf32>
    %41 = tpu.matmul %40, %39, %cst_36 {dimension_numbers = #tpu.dot_dimension_numbers<[1], [0], [0], [1], [0, 0, 1, 1], [], []>} : vector<16x8xf32>, vector<8x128xf32>, vector<16x128xf32> -> vector<16x128xf32>
    %42 = arith.addf %38, %41 : vector<16x128xf32>
    %c0_37 = arith.constant 0 : index
    %c127 = arith.constant 127 : index
    %43 = vector.load %arg14[%c0_37, %c127] : memref<8x256xf32, #tpu.memory_space<vmem>>, vector<8x128xf32>
    %44 = vector.extract_strided_slice %11 {offsets = [0, 24], sizes = [16, 8], strides = [1, 1]} : vector<16x40xf32> to vector<16x8xf32>
    %cst_38 = arith.constant dense<0.000000e+00> : vector<16x128xf32>
    %45 = tpu.matmul %44, %43, %cst_38 {dimension_numbers = #tpu.dot_dimension_numbers<[1], [0], [0], [1], [0, 0, 1, 1], [], []>} : vector<16x8xf32>, vector<8x128xf32>, vector<16x128xf32> -> vector<16x128xf32>
    %46 = arith.addf %42, %45 : vector<16x128xf32>
    %c0_39 = arith.constant 0 : index
    %c128_40 = arith.constant 128 : index
    %47 = vector.load %arg14[%c0_39, %c128_40] : memref<8x256xf32, #tpu.memory_space<vmem>>, vector<8x128xf32>
    %48 = vector.extract_strided_slice %11 {offsets = [0, 32], sizes = [16, 8], strides = [1, 1]} : vector<16x40xf32> to vector<16x8xf32>
    %cst_41 = arith.constant dense<0.000000e+00> : vector<16x128xf32>
    %49 = tpu.matmul %48, %47, %cst_41 {dimension_numbers = #tpu.dot_dimension_numbers<[1], [0], [0], [1], [0, 0, 1, 1], [], []>} : vector<16x8xf32>, vector<8x128xf32>, vector<16x128xf32> -> vector<16x128xf32>
    %50 = arith.addf %46, %49 : vector<16x128xf32>
    %51 = vector.broadcast %13 : vector<16x1xf32> to vector<16x128xf32>
    %52 = arith.addf %50, %51 : vector<16x128xf32>
    %53 = vector.extract_strided_slice %52 {offsets = [0, 0], sizes = [8, 128], strides = [1, 1]} : vector<16x128xf32> to vector<8x128xf32>
    %54 = math.tanh %53 : vector<8x128xf32>
    %55 = vector.extract_strided_slice %52 {offsets = [8, 0], sizes = [8, 128], strides = [1, 1]} : vector<16x128xf32> to vector<8x128xf32>
    %56 = arith.negf %55 : vector<8x128xf32>
    %57 = math.exp %56 : vector<8x128xf32>
    %cst_42 = arith.constant 1.000000e+00 : f32
    %58 = vector.broadcast %cst_42 : f32 to vector<8x128xf32>
    %59 = arith.addf %58, %57 : vector<8x128xf32>
    %60 = arith.divf %58, %59 : vector<8x128xf32>
    %61 = arith.mulf %54, %60 : vector<8x128xf32>
    %cst_43 = arith.constant dense<0.000000e+00> : vector<5x128xf32>
    %62 = tpu.matmul %15, %61, %cst_43 {dimension_numbers = #tpu.dot_dimension_numbers<[1], [0], [0], [1], [0, 0, 1, 1], [], []>} : vector<5x8xf32>, vector<8x128xf32>, vector<5x128xf32> -> vector<5x128xf32>
    %63 = vector.broadcast %17 : vector<5x1xf32> to vector<5x128xf32>
    %64 = arith.addf %62, %63 : vector<5x128xf32>
    %65 = vector.extract_strided_slice %64 {offsets = [0, 0], sizes = [4, 128], strides = [1, 1]} : vector<5x128xf32> to vector<4x128xf32>
    %66 = arith.addf %5, %65 : vector<4x128xf32>
    %67 = vector.extract_strided_slice %64 {offsets = [4, 0], sizes = [1, 128], strides = [1, 1]} : vector<5x128xf32> to vector<1x128xf32>
    %68 = arith.addf %67, %4 : vector<1x128xf32>
    %c1 = arith.constant 1 : index
    %c0_44 = arith.constant 0 : index
    %c0_45 = arith.constant 0 : index
    %69 = vector.load %arg3[%c1, %c0_44, %c0_45] : memref<6x8x1xf32, #tpu.memory_space<vmem>>, vector<1x8x1xf32>
    %70 = vector.shape_cast %69 : vector<1x8x1xf32> to vector<8x1xf32>
    %c1_46 = arith.constant 1 : index
    %c0_47 = arith.constant 0 : index
    %c0_48 = arith.constant 0 : index
    %71 = vector.load %arg4[%c1_46, %c0_47, %c0_48] : memref<6x8x1xf32, #tpu.memory_space<vmem>>, vector<1x8x1xf32>
    %72 = vector.shape_cast %71 : vector<1x8x1xf32> to vector<8x1xf32>
    %c1_49 = arith.constant 1 : index
    %c0_50 = arith.constant 0 : index
    %c0_51 = arith.constant 0 : index
    %73 = vector.load %arg5[%c1_49, %c0_50, %c0_51] : memref<6x16x40xf32, #tpu.memory_space<vmem>>, vector<1x16x40xf32>
    %74 = vector.shape_cast %73 : vector<1x16x40xf32> to vector<16x40xf32>
    %c1_52 = arith.constant 1 : index
    %c0_53 = arith.constant 0 : index
    %c0_54 = arith.constant 0 : index
    %75 = vector.load %arg6[%c1_52, %c0_53, %c0_54] : memref<6x16x1xf32, #tpu.memory_space<vmem>>, vector<1x16x1xf32>
    %76 = vector.shape_cast %75 : vector<1x16x1xf32> to vector<16x1xf32>
    %c1_55 = arith.constant 1 : index
    %c0_56 = arith.constant 0 : index
    %c0_57 = arith.constant 0 : index
    %77 = vector.load %arg7[%c1_55, %c0_56, %c0_57] : memref<6x5x8xf32, #tpu.memory_space<vmem>>, vector<1x5x8xf32>
    %78 = vector.shape_cast %77 : vector<1x5x8xf32> to vector<5x8xf32>
    %c1_58 = arith.constant 1 : index
    %c0_59 = arith.constant 0 : index
    %c0_60 = arith.constant 0 : index
    %79 = vector.load %arg8[%c1_58, %c0_59, %c0_60] : memref<6x5x1xf32, #tpu.memory_space<vmem>>, vector<1x5x1xf32>
    %80 = vector.shape_cast %79 : vector<1x5x1xf32> to vector<5x1xf32>
    %81 = vector.broadcast %70 : vector<8x1xf32> to vector<8x128xf32>
    %82 = vector.broadcast %68 : vector<1x128xf32> to vector<8x128xf32>
    %83 = arith.mulf %81, %82 : vector<8x128xf32>
    %84 = vector.broadcast %72 : vector<8x1xf32> to vector<8x128xf32>
    %85 = arith.addf %83, %84 : vector<8x128xf32>
    %c1_61 = arith.constant 1 : index
    %c0_62 = arith.constant 0 : index
    %c0_63 = arith.constant 0 : index
    %86 = vector.load %arg15[%c1_61, %c0_62, %c0_63] : memref<6x8x128xf32, #tpu.memory_space<vmem>>, vector<1x8x128xf32>
    %87 = vector.shape_cast %86 : vector<1x8x128xf32> to vector<8x128xf32>
    %c0_64 = arith.constant 0 : index
    %c0_65 = arith.constant 0 : index
    %88 = vector.load %arg14[%c0_64, %c0_65] : memref<8x256xf32, #tpu.memory_space<vmem>>, vector<8x128xf32>
    tpu.vector_store %arg14[%c0_64, %c0_65], %87 {strides = array<i32>} : memref<8x256xf32, #tpu.memory_space<vmem>>, vector<8x128xf32>,
    %c0_66 = arith.constant 0 : index
    %c128_67 = arith.constant 128 : index
    %89 = vector.load %arg14[%c0_66, %c128_67] : memref<8x256xf32, #tpu.memory_space<vmem>>, vector<8x128xf32>
    tpu.vector_store %arg14[%c0_66, %c128_67], %85 {strides = array<i32>} : memref<8x256xf32, #tpu.memory_space<vmem>>, vector<8x128xf32>,
    %c1_68 = arith.constant 1 : index
    %c0_69 = arith.constant 0 : index
    %c0_70 = arith.constant 0 : index
    %90 = vector.load %arg15[%c1_68, %c0_69, %c0_70] : memref<6x8x128xf32, #tpu.memory_space<vmem>>, vector<1x8x128xf32>
    %91 = vector.shape_cast %90 : vector<1x8x128xf32> to vector<8x128xf32>
    %92 = vector.shape_cast %85 : vector<8x128xf32> to vector<1x8x128xf32>
    tpu.vector_store %arg15[%c1_68, %c0_69, %c0_70], %92 {strides = array<i32>} : memref<6x8x128xf32, #tpu.memory_space<vmem>>, vector<1x8x128xf32>,
    %cst_71 = arith.constant 0.000000e+00 : f32
    %93 = vector.broadcast %cst_71 : f32 to vector<16x128xf32>
    %c0_72 = arith.constant 0 : index
    %c120 = arith.constant 120 : index
    %94 = vector.load %arg14[%c0_72, %c120] : memref<8x256xf32, #tpu.memory_space<vmem>>, vector<8x128xf32>
    %95 = vector.extract_strided_slice %74 {offsets = [0, 0], sizes = [16, 8], strides = [1, 1]} : vector<16x40xf32> to vector<16x8xf32>
    %cst_73 = arith.constant dense<0.000000e+00> : vector<16x128xf32>
    %96 = tpu.matmul %95, %94, %cst_73 {dimension_numbers = #tpu.dot_dimension_numbers<[1], [0], [0], [1], [0, 0, 1, 1], [], []>} : vector<16x8xf32>, vector<8x128xf32>, vector<16x128xf32> -> vector<16x128xf32>
    %97 = arith.addf %93, %96 : vector<16x128xf32>
    %c0_74 = arith.constant 0 : index
    %c122 = arith.constant 122 : index
    %98 = vector.load %arg14[%c0_74, %c122] : memref<8x256xf32, #tpu.memory_space<vmem>>, vector<8x128xf32>
    %99 = vector.extract_strided_slice %74 {offsets = [0, 8], sizes = [16, 8], strides = [1, 1]} : vector<16x40xf32> to vector<16x8xf32>
    %cst_75 = arith.constant dense<0.000000e+00> : vector<16x128xf32>
    %100 = tpu.matmul %99, %98, %cst_75 {dimension_numbers = #tpu.dot_dimension_numbers<[1], [0], [0], [1], [0, 0, 1, 1], [], []>} : vector<16x8xf32>, vector<8x128xf32>, vector<16x128xf32> -> vector<16x128xf32>
    %101 = arith.addf %97, %100 : vector<16x128xf32>
    %c0_76 = arith.constant 0 : index
    %c124_77 = arith.constant 124 : index
    %102 = vector.load %arg14[%c0_76, %c124_77] : memref<8x256xf32, #tpu.memory_space<vmem>>, vector<8x128xf32>
    %103 = vector.extract_strided_slice %74 {offsets = [0, 16], sizes = [16, 8], strides = [1, 1]} : vector<16x40xf32> to vector<16x8xf32>
    %cst_78 = arith.constant dense<0.000000e+00> : vector<16x128xf32>
    %104 = tpu.matmul %103, %102, %cst_78 {dimension_numbers = #tpu.dot_dimension_numbers<[1], [0], [0], [1], [0, 0, 1, 1], [], []>} : vector<16x8xf32>, vector<8x128xf32>, vector<16x128xf32> -> vector<16x128xf32>
    %105 = arith.addf %101, %104 : vector<16x128xf32>
    %c0_79 = arith.constant 0 : index
    %c126_80 = arith.constant 126 : index
    %106 = vector.load %arg14[%c0_79, %c126_80] : memref<8x256xf32, #tpu.memory_space<vmem>>, vector<8x128xf32>
    %107 = vector.extract_strided_slice %74 {offsets = [0, 24], sizes = [16, 8], strides = [1, 1]} : vector<16x40xf32> to vector<16x8xf32>
    %cst_81 = arith.constant dense<0.000000e+00> : vector<16x128xf32>
    %108 = tpu.matmul %107, %106, %cst_81 {dimension_numbers = #tpu.dot_dimension_numbers<[1], [0], [0], [1], [0, 0, 1, 1], [], []>} : vector<16x8xf32>, vector<8x128xf32>, vector<16x128xf32> -> vector<16x128xf32>
    %109 = arith.addf %105, %108 : vector<16x128xf32>
    %c0_82 = arith.constant 0 : index
    %c128_83 = arith.constant 128 : index
    %110 = vector.load %arg14[%c0_82, %c128_83] : memref<8x256xf32, #tpu.memory_space<vmem>>, vector<8x128xf32>
    %111 = vector.extract_strided_slice %74 {offsets = [0, 32], sizes = [16, 8], strides = [1, 1]} : vector<16x40xf32> to vector<16x8xf32>
    %cst_84 = arith.constant dense<0.000000e+00> : vector<16x128xf32>
    %112 = tpu.matmul %111, %110, %cst_84 {dimension_numbers = #tpu.dot_dimension_numbers<[1], [0], [0], [1], [0, 0, 1, 1], [], []>} : vector<16x8xf32>, vector<8x128xf32>, vector<16x128xf32> -> vector<16x128xf32>
    %113 = arith.addf %109, %112 : vector<16x128xf32>
    %114 = vector.broadcast %76 : vector<16x1xf32> to vector<16x128xf32>
    %115 = arith.addf %113, %114 : vector<16x128xf32>
    %116 = vector.extract_strided_slice %115 {offsets = [0, 0], sizes = [8, 128], strides = [1, 1]} : vector<16x128xf32> to vector<8x128xf32>
    %117 = math.tanh %116 : vector<8x128xf32>
    %118 = vector.extract_strided_slice %115 {offsets = [8, 0], sizes = [8, 128], strides = [1, 1]} : vector<16x128xf32> to vector<8x128xf32>
    %119 = arith.negf %118 : vector<8x128xf32>
    %120 = math.exp %119 : vector<8x128xf32>
    %cst_85 = arith.constant 1.000000e+00 : f32
    %121 = vector.broadcast %cst_85 : f32 to vector<8x128xf32>
    %122 = arith.addf %121, %120 : vector<8x128xf32>
    %123 = arith.divf %121, %122 : vector<8x128xf32>
    %124 = arith.mulf %117, %123 : vector<8x128xf32>
    %cst_86 = arith.constant dense<0.000000e+00> : vector<5x128xf32>
    %125 = tpu.matmul %78, %124, %cst_86 {dimension_numbers = #tpu.dot_dimension_numbers<[1], [0], [0], [1], [0, 0, 1, 1], [], []>} : vector<5x8xf32>, vector<8x128xf32>, vector<5x128xf32> -> vector<5x128xf32>
    %126 = vector.broadcast %80 : vector<5x1xf32> to vector<5x128xf32>
    %127 = arith.addf %125, %126 : vector<5x128xf32>
    %128 = vector.extract_strided_slice %127 {offsets = [0, 0], sizes = [4, 128], strides = [1, 1]} : vector<5x128xf32> to vector<4x128xf32>
    %129 = arith.addf %66, %128 : vector<4x128xf32>
    %130 = vector.extract_strided_slice %127 {offsets = [4, 0], sizes = [1, 128], strides = [1, 1]} : vector<5x128xf32> to vector<1x128xf32>
    %131 = arith.addf %130, %68 : vector<1x128xf32>
    %c2 = arith.constant 2 : index
    %c0_87 = arith.constant 0 : index
    %c0_88 = arith.constant 0 : index
    %132 = vector.load %arg3[%c2, %c0_87, %c0_88] : memref<6x8x1xf32, #tpu.memory_space<vmem>>, vector<1x8x1xf32>
    %133 = vector.shape_cast %132 : vector<1x8x1xf32> to vector<8x1xf32>
    %c2_89 = arith.constant 2 : index
    %c0_90 = arith.constant 0 : index
    %c0_91 = arith.constant 0 : index
    %134 = vector.load %arg4[%c2_89, %c0_90, %c0_91] : memref<6x8x1xf32, #tpu.memory_space<vmem>>, vector<1x8x1xf32>
    %135 = vector.shape_cast %134 : vector<1x8x1xf32> to vector<8x1xf32>
    %c2_92 = arith.constant 2 : index
    %c0_93 = arith.constant 0 : index
    %c0_94 = arith.constant 0 : index
    %136 = vector.load %arg5[%c2_92, %c0_93, %c0_94] : memref<6x16x40xf32, #tpu.memory_space<vmem>>, vector<1x16x40xf32>
    %137 = vector.shape_cast %136 : vector<1x16x40xf32> to vector<16x40xf32>
    %c2_95 = arith.constant 2 : index
    %c0_96 = arith.constant 0 : index
    %c0_97 = arith.constant 0 : index
    %138 = vector.load %arg6[%c2_95, %c0_96, %c0_97] : memref<6x16x1xf32, #tpu.memory_space<vmem>>, vector<1x16x1xf32>
    %139 = vector.shape_cast %138 : vector<1x16x1xf32> to vector<16x1xf32>
    %c2_98 = arith.constant 2 : index
    %c0_99 = arith.constant 0 : index
    %c0_100 = arith.constant 0 : index
    %140 = vector.load %arg7[%c2_98, %c0_99, %c0_100] : memref<6x5x8xf32, #tpu.memory_space<vmem>>, vector<1x5x8xf32>
    %141 = vector.shape_cast %140 : vector<1x5x8xf32> to vector<5x8xf32>
    %c2_101 = arith.constant 2 : index
    %c0_102 = arith.constant 0 : index
    %c0_103 = arith.constant 0 : index
    %142 = vector.load %arg8[%c2_101, %c0_102, %c0_103] : memref<6x5x1xf32, #tpu.memory_space<vmem>>, vector<1x5x1xf32>
    %143 = vector.shape_cast %142 : vector<1x5x1xf32> to vector<5x1xf32>
    %144 = vector.broadcast %133 : vector<8x1xf32> to vector<8x128xf32>
    %145 = vector.broadcast %131 : vector<1x128xf32> to vector<8x128xf32>
    %146 = arith.mulf %144, %145 : vector<8x128xf32>
    %147 = vector.broadcast %135 : vector<8x1xf32> to vector<8x128xf32>
    %148 = arith.addf %146, %147 : vector<8x128xf32>
    %c2_104 = arith.constant 2 : index
    %c0_105 = arith.constant 0 : index
    %c0_106 = arith.constant 0 : index
    %149 = vector.load %arg15[%c2_104, %c0_105, %c0_106] : memref<6x8x128xf32, #tpu.memory_space<vmem>>, vector<1x8x128xf32>
    %150 = vector.shape_cast %149 : vector<1x8x128xf32> to vector<8x128xf32>
    %c0_107 = arith.constant 0 : index
    %c0_108 = arith.constant 0 : index
    %151 = vector.load %arg14[%c0_107, %c0_108] : memref<8x256xf32, #tpu.memory_space<vmem>>, vector<8x128xf32>
    tpu.vector_store %arg14[%c0_107, %c0_108], %150 {strides = array<i32>} : memref<8x256xf32, #tpu.memory_space<vmem>>, vector<8x128xf32>,
    %c0_109 = arith.constant 0 : index
    %c128_110 = arith.constant 128 : index
    %152 = vector.load %arg14[%c0_109, %c128_110] : memref<8x256xf32, #tpu.memory_space<vmem>>, vector<8x128xf32>
    tpu.vector_store %arg14[%c0_109, %c128_110], %148 {strides = array<i32>} : memref<8x256xf32, #tpu.memory_space<vmem>>, vector<8x128xf32>,
    %c2_111 = arith.constant 2 : index
    %c0_112 = arith.constant 0 : index
    %c0_113 = arith.constant 0 : index
    %153 = vector.load %arg15[%c2_111, %c0_112, %c0_113] : memref<6x8x128xf32, #tpu.memory_space<vmem>>, vector<1x8x128xf32>
    %154 = vector.shape_cast %153 : vector<1x8x128xf32> to vector<8x128xf32>
    %155 = vector.shape_cast %148 : vector<8x128xf32> to vector<1x8x128xf32>
    tpu.vector_store %arg15[%c2_111, %c0_112, %c0_113], %155 {strides = array<i32>} : memref<6x8x128xf32, #tpu.memory_space<vmem>>, vector<1x8x128xf32>,
    %cst_114 = arith.constant 0.000000e+00 : f32
    %156 = vector.broadcast %cst_114 : f32 to vector<16x128xf32>
    %c0_115 = arith.constant 0 : index
    %c112 = arith.constant 112 : index
    %157 = vector.load %arg14[%c0_115, %c112] : memref<8x256xf32, #tpu.memory_space<vmem>>, vector<8x128xf32>
    %158 = vector.extract_strided_slice %137 {offsets = [0, 0], sizes = [16, 8], strides = [1, 1]} : vector<16x40xf32> to vector<16x8xf32>
    %cst_116 = arith.constant dense<0.000000e+00> : vector<16x128xf32>
    %159 = tpu.matmul %158, %157, %cst_116 {dimension_numbers = #tpu.dot_dimension_numbers<[1], [0], [0], [1], [0, 0, 1, 1], [], []>} : vector<16x8xf32>, vector<8x128xf32>, vector<16x128xf32> -> vector<16x128xf32>
    %160 = arith.addf %156, %159 : vector<16x128xf32>
    %c0_117 = arith.constant 0 : index
    %c116 = arith.constant 116 : index
    %161 = vector.load %arg14[%c0_117, %c116] : memref<8x256xf32, #tpu.memory_space<vmem>>, vector<8x128xf32>
    %162 = vector.extract_strided_slice %137 {offsets = [0, 8], sizes = [16, 8], strides = [1, 1]} : vector<16x40xf32> to vector<16x8xf32>
    %cst_118 = arith.constant dense<0.000000e+00> : vector<16x128xf32>
    %163 = tpu.matmul %162, %161, %cst_118 {dimension_numbers = #tpu.dot_dimension_numbers<[1], [0], [0], [1], [0, 0, 1, 1], [], []>} : vector<16x8xf32>, vector<8x128xf32>, vector<16x128xf32> -> vector<16x128xf32>
    %164 = arith.addf %160, %163 : vector<16x128xf32>
    %c0_119 = arith.constant 0 : index
    %c120_120 = arith.constant 120 : index
    %165 = vector.load %arg14[%c0_119, %c120_120] : memref<8x256xf32, #tpu.memory_space<vmem>>, vector<8x128xf32>
    %166 = vector.extract_strided_slice %137 {offsets = [0, 16], sizes = [16, 8], strides = [1, 1]} : vector<16x40xf32> to vector<16x8xf32>
    %cst_121 = arith.constant dense<0.000000e+00> : vector<16x128xf32>
    %167 = tpu.matmul %166, %165, %cst_121 {dimension_numbers = #tpu.dot_dimension_numbers<[1], [0], [0], [1], [0, 0, 1, 1], [], []>} : vector<16x8xf32>, vector<8x128xf32>, vector<16x128xf32> -> vector<16x128xf32>
    %168 = arith.addf %164, %167 : vector<16x128xf32>
    %c0_122 = arith.constant 0 : index
    %c124_123 = arith.constant 124 : index
    %169 = vector.load %arg14[%c0_122, %c124_123] : memref<8x256xf32, #tpu.memory_space<vmem>>, vector<8x128xf32>
    %170 = vector.extract_strided_slice %137 {offsets = [0, 24], sizes = [16, 8], strides = [1, 1]} : vector<16x40xf32> to vector<16x8xf32>
    %cst_124 = arith.constant dense<0.000000e+00> : vector<16x128xf32>
    %171 = tpu.matmul %170, %169, %cst_124 {dimension_numbers = #tpu.dot_dimension_numbers<[1], [0], [0], [1], [0, 0, 1, 1], [], []>} : vector<16x8xf32>, vector<8x128xf32>, vector<16x128xf32> -> vector<16x128xf32>
    %172 = arith.addf %168, %171 : vector<16x128xf32>
    %c0_125 = arith.constant 0 : index
    %c128_126 = arith.constant 128 : index
    %173 = vector.load %arg14[%c0_125, %c128_126] : memref<8x256xf32, #tpu.memory_space<vmem>>, vector<8x128xf32>
    %174 = vector.extract_strided_slice %137 {offsets = [0, 32], sizes = [16, 8], strides = [1, 1]} : vector<16x40xf32> to vector<16x8xf32>
    %cst_127 = arith.constant dense<0.000000e+00> : vector<16x128xf32>
    %175 = tpu.matmul %174, %173, %cst_127 {dimension_numbers = #tpu.dot_dimension_numbers<[1], [0], [0], [1], [0, 0, 1, 1], [], []>} : vector<16x8xf32>, vector<8x128xf32>, vector<16x128xf32> -> vector<16x128xf32>
    %176 = arith.addf %172, %175 : vector<16x128xf32>
    %177 = vector.broadcast %139 : vector<16x1xf32> to vector<16x128xf32>
    %178 = arith.addf %176, %177 : vector<16x128xf32>
    %179 = vector.extract_strided_slice %178 {offsets = [0, 0], sizes = [8, 128], strides = [1, 1]} : vector<16x128xf32> to vector<8x128xf32>
    %180 = math.tanh %179 : vector<8x128xf32>
    %181 = vector.extract_strided_slice %178 {offsets = [8, 0], sizes = [8, 128], strides = [1, 1]} : vector<16x128xf32> to vector<8x128xf32>
    %182 = arith.negf %181 : vector<8x128xf32>
    %183 = math.exp %182 : vector<8x128xf32>
    %cst_128 = arith.constant 1.000000e+00 : f32
    %184 = vector.broadcast %cst_128 : f32 to vector<8x128xf32>
    %185 = arith.addf %184, %183 : vector<8x128xf32>
    %186 = arith.divf %184, %185 : vector<8x128xf32>
    %187 = arith.mulf %180, %186 : vector<8x128xf32>
    %cst_129 = arith.constant dense<0.000000e+00> : vector<5x128xf32>
    %188 = tpu.matmul %141, %187, %cst_129 {dimension_numbers = #tpu.dot_dimension_numbers<[1], [0], [0], [1], [0, 0, 1, 1], [], []>} : vector<5x8xf32>, vector<8x128xf32>, vector<5x128xf32> -> vector<5x128xf32>
    %189 = vector.broadcast %143 : vector<5x1xf32> to vector<5x128xf32>
    %190 = arith.addf %188, %189 : vector<5x128xf32>
    %191 = vector.extract_strided_slice %190 {offsets = [0, 0], sizes = [4, 128], strides = [1, 1]} : vector<5x128xf32> to vector<4x128xf32>
    %192 = arith.addf %129, %191 : vector<4x128xf32>
    %193 = vector.extract_strided_slice %190 {offsets = [4, 0], sizes = [1, 128], strides = [1, 1]} : vector<5x128xf32> to vector<1x128xf32>
    %194 = arith.addf %193, %131 : vector<1x128xf32>
    %c3 = arith.constant 3 : index
    %c0_130 = arith.constant 0 : index
    %c0_131 = arith.constant 0 : index
    %195 = vector.load %arg3[%c3, %c0_130, %c0_131] : memref<6x8x1xf32, #tpu.memory_space<vmem>>, vector<1x8x1xf32>
    %196 = vector.shape_cast %195 : vector<1x8x1xf32> to vector<8x1xf32>
    %c3_132 = arith.constant 3 : index
    %c0_133 = arith.constant 0 : index
    %c0_134 = arith.constant 0 : index
    %197 = vector.load %arg4[%c3_132, %c0_133, %c0_134] : memref<6x8x1xf32, #tpu.memory_space<vmem>>, vector<1x8x1xf32>
    %198 = vector.shape_cast %197 : vector<1x8x1xf32> to vector<8x1xf32>
    %c3_135 = arith.constant 3 : index
    %c0_136 = arith.constant 0 : index
    %c0_137 = arith.constant 0 : index
    %199 = vector.load %arg5[%c3_135, %c0_136, %c0_137] : memref<6x16x40xf32, #tpu.memory_space<vmem>>, vector<1x16x40xf32>
    %200 = vector.shape_cast %199 : vector<1x16x40xf32> to vector<16x40xf32>
    %c3_138 = arith.constant 3 : index
    %c0_139 = arith.constant 0 : index
    %c0_140 = arith.constant 0 : index
    %201 = vector.load %arg6[%c3_138, %c0_139, %c0_140] : memref<6x16x1xf32, #tpu.memory_space<vmem>>, vector<1x16x1xf32>
    %202 = vector.shape_cast %201 : vector<1x16x1xf32> to vector<16x1xf32>
    %c3_141 = arith.constant 3 : index
    %c0_142 = arith.constant 0 : index
    %c0_143 = arith.constant 0 : index
    %203 = vector.load %arg7[%c3_141, %c0_142, %c0_143] : memref<6x5x8xf32, #tpu.memory_space<vmem>>, vector<1x5x8xf32>
    %204 = vector.shape_cast %203 : vector<1x5x8xf32> to vector<5x8xf32>
    %c3_144 = arith.constant 3 : index
    %c0_145 = arith.constant 0 : index
    %c0_146 = arith.constant 0 : index
    %205 = vector.load %arg8[%c3_144, %c0_145, %c0_146] : memref<6x5x1xf32, #tpu.memory_space<vmem>>, vector<1x5x1xf32>
    %206 = vector.shape_cast %205 : vector<1x5x1xf32> to vector<5x1xf32>
    %207 = vector.broadcast %196 : vector<8x1xf32> to vector<8x128xf32>
    %208 = vector.broadcast %194 : vector<1x128xf32> to vector<8x128xf32>
    %209 = arith.mulf %207, %208 : vector<8x128xf32>
    %210 = vector.broadcast %198 : vector<8x1xf32> to vector<8x128xf32>
    %211 = arith.addf %209, %210 : vector<8x128xf32>
    %c3_147 = arith.constant 3 : index
    %c0_148 = arith.constant 0 : index
    %c0_149 = arith.constant 0 : index
    %212 = vector.load %arg15[%c3_147, %c0_148, %c0_149] : memref<6x8x128xf32, #tpu.memory_space<vmem>>, vector<1x8x128xf32>
    %213 = vector.shape_cast %212 : vector<1x8x128xf32> to vector<8x128xf32>
    %c0_150 = arith.constant 0 : index
    %c0_151 = arith.constant 0 : index
    %214 = vector.load %arg14[%c0_150, %c0_151] : memref<8x256xf32, #tpu.memory_space<vmem>>, vector<8x128xf32>
    tpu.vector_store %arg14[%c0_150, %c0_151], %213 {strides = array<i32>} : memref<8x256xf32, #tpu.memory_space<vmem>>, vector<8x128xf32>,
    %c0_152 = arith.constant 0 : index
    %c128_153 = arith.constant 128 : index
    %215 = vector.load %arg14[%c0_152, %c128_153] : memref<8x256xf32, #tpu.memory_space<vmem>>, vector<8x128xf32>
    tpu.vector_store %arg14[%c0_152, %c128_153], %211 {strides = array<i32>} : memref<8x256xf32, #tpu.memory_space<vmem>>, vector<8x128xf32>,
    %c3_154 = arith.constant 3 : index
    %c0_155 = arith.constant 0 : index
    %c0_156 = arith.constant 0 : index
    %216 = vector.load %arg15[%c3_154, %c0_155, %c0_156] : memref<6x8x128xf32, #tpu.memory_space<vmem>>, vector<1x8x128xf32>
    %217 = vector.shape_cast %216 : vector<1x8x128xf32> to vector<8x128xf32>
    %218 = vector.shape_cast %211 : vector<8x128xf32> to vector<1x8x128xf32>
    tpu.vector_store %arg15[%c3_154, %c0_155, %c0_156], %218 {strides = array<i32>} : memref<6x8x128xf32, #tpu.memory_space<vmem>>, vector<1x8x128xf32>,
    %cst_157 = arith.constant 0.000000e+00 : f32
    %219 = vector.broadcast %cst_157 : f32 to vector<16x128xf32>
    %c0_158 = arith.constant 0 : index
    %c124_159 = arith.constant 124 : index
    %220 = vector.load %arg14[%c0_158, %c124_159] : memref<8x256xf32, #tpu.memory_space<vmem>>, vector<8x128xf32>
    %221 = vector.extract_strided_slice %200 {offsets = [0, 0], sizes = [16, 8], strides = [1, 1]} : vector<16x40xf32> to vector<16x8xf32>
    %cst_160 = arith.constant dense<0.000000e+00> : vector<16x128xf32>
    %222 = tpu.matmul %221, %220, %cst_160 {dimension_numbers = #tpu.dot_dimension_numbers<[1], [0], [0], [1], [0, 0, 1, 1], [], []>} : vector<16x8xf32>, vector<8x128xf32>, vector<16x128xf32> -> vector<16x128xf32>
    %223 = arith.addf %219, %222 : vector<16x128xf32>
    %c0_161 = arith.constant 0 : index
    %c125_162 = arith.constant 125 : index
    %224 = vector.load %arg14[%c0_161, %c125_162] : memref<8x256xf32, #tpu.memory_space<vmem>>, vector<8x128xf32>
    %225 = vector.extract_strided_slice %200 {offsets = [0, 8], sizes = [16, 8], strides = [1, 1]} : vector<16x40xf32> to vector<16x8xf32>
    %cst_163 = arith.constant dense<0.000000e+00> : vector<16x128xf32>
    %226 = tpu.matmul %225, %224, %cst_163 {dimension_numbers = #tpu.dot_dimension_numbers<[1], [0], [0], [1], [0, 0, 1, 1], [], []>} : vector<16x8xf32>, vector<8x128xf32>, vector<16x128xf32> -> vector<16x128xf32>
    %227 = arith.addf %223, %226 : vector<16x128xf32>
    %c0_164 = arith.constant 0 : index
    %c126_165 = arith.constant 126 : index
    %228 = vector.load %arg14[%c0_164, %c126_165] : memref<8x256xf32, #tpu.memory_space<vmem>>, vector<8x128xf32>
    %229 = vector.extract_strided_slice %200 {offsets = [0, 16], sizes = [16, 8], strides = [1, 1]} : vector<16x40xf32> to vector<16x8xf32>
    %cst_166 = arith.constant dense<0.000000e+00> : vector<16x128xf32>
    %230 = tpu.matmul %229, %228, %cst_166 {dimension_numbers = #tpu.dot_dimension_numbers<[1], [0], [0], [1], [0, 0, 1, 1], [], []>} : vector<16x8xf32>, vector<8x128xf32>, vector<16x128xf32> -> vector<16x128xf32>
    %231 = arith.addf %227, %230 : vector<16x128xf32>
    %c0_167 = arith.constant 0 : index
    %c127_168 = arith.constant 127 : index
    %232 = vector.load %arg14[%c0_167, %c127_168] : memref<8x256xf32, #tpu.memory_space<vmem>>, vector<8x128xf32>
    %233 = vector.extract_strided_slice %200 {offsets = [0, 24], sizes = [16, 8], strides = [1, 1]} : vector<16x40xf32> to vector<16x8xf32>
    %cst_169 = arith.constant dense<0.000000e+00> : vector<16x128xf32>
    %234 = tpu.matmul %233, %232, %cst_169 {dimension_numbers = #tpu.dot_dimension_numbers<[1], [0], [0], [1], [0, 0, 1, 1], [], []>} : vector<16x8xf32>, vector<8x128xf32>, vector<16x128xf32> -> vector<16x128xf32>
    %235 = arith.addf %231, %234 : vector<16x128xf32>
    %c0_170 = arith.constant 0 : index
    %c128_171 = arith.constant 128 : index
    %236 = vector.load %arg14[%c0_170, %c128_171] : memref<8x256xf32, #tpu.memory_space<vmem>>, vector<8x128xf32>
    %237 = vector.extract_strided_slice %200 {offsets = [0, 32], sizes = [16, 8], strides = [1, 1]} : vector<16x40xf32> to vector<16x8xf32>
    %cst_172 = arith.constant dense<0.000000e+00> : vector<16x128xf32>
    %238 = tpu.matmul %237, %236, %cst_172 {dimension_numbers = #tpu.dot_dimension_numbers<[1], [0], [0], [1], [0, 0, 1, 1], [], []>} : vector<16x8xf32>, vector<8x128xf32>, vector<16x128xf32> -> vector<16x128xf32>
    %239 = arith.addf %235, %238 : vector<16x128xf32>
    %240 = vector.broadcast %202 : vector<16x1xf32> to vector<16x128xf32>
    %241 = arith.addf %239, %240 : vector<16x128xf32>
    %242 = vector.extract_strided_slice %241 {offsets = [0, 0], sizes = [8, 128], strides = [1, 1]} : vector<16x128xf32> to vector<8x128xf32>
    %243 = math.tanh %242 : vector<8x128xf32>
    %244 = vector.extract_strided_slice %241 {offsets = [8, 0], sizes = [8, 128], strides = [1, 1]} : vector<16x128xf32> to vector<8x128xf32>
    %245 = arith.negf %244 : vector<8x128xf32>
    %246 = math.exp %245 : vector<8x128xf32>
    %cst_173 = arith.constant 1.000000e+00 : f32
    %247 = vector.broadcast %cst_173 : f32 to vector<8x128xf32>
    %248 = arith.addf %247, %246 : vector<8x128xf32>
    %249 = arith.divf %247, %248 : vector<8x128xf32>
    %250 = arith.mulf %243, %249 : vector<8x128xf32>
    %cst_174 = arith.constant dense<0.000000e+00> : vector<5x128xf32>
    %251 = tpu.matmul %204, %250, %cst_174 {dimension_numbers = #tpu.dot_dimension_numbers<[1], [0], [0], [1], [0, 0, 1, 1], [], []>} : vector<5x8xf32>, vector<8x128xf32>, vector<5x128xf32> -> vector<5x128xf32>
    %252 = vector.broadcast %206 : vector<5x1xf32> to vector<5x128xf32>
    %253 = arith.addf %251, %252 : vector<5x128xf32>
    %254 = vector.extract_strided_slice %253 {offsets = [0, 0], sizes = [4, 128], strides = [1, 1]} : vector<5x128xf32> to vector<4x128xf32>
    %255 = arith.addf %192, %254 : vector<4x128xf32>
    %256 = vector.extract_strided_slice %253 {offsets = [4, 0], sizes = [1, 128], strides = [1, 1]} : vector<5x128xf32> to vector<1x128xf32>
    %257 = arith.addf %256, %194 : vector<1x128xf32>
    %c4 = arith.constant 4 : index
    %c0_175 = arith.constant 0 : index
    %c0_176 = arith.constant 0 : index
    %258 = vector.load %arg3[%c4, %c0_175, %c0_176] : memref<6x8x1xf32, #tpu.memory_space<vmem>>, vector<1x8x1xf32>
    %259 = vector.shape_cast %258 : vector<1x8x1xf32> to vector<8x1xf32>
    %c4_177 = arith.constant 4 : index
    %c0_178 = arith.constant 0 : index
    %c0_179 = arith.constant 0 : index
    %260 = vector.load %arg4[%c4_177, %c0_178, %c0_179] : memref<6x8x1xf32, #tpu.memory_space<vmem>>, vector<1x8x1xf32>
    %261 = vector.shape_cast %260 : vector<1x8x1xf32> to vector<8x1xf32>
    %c4_180 = arith.constant 4 : index
    %c0_181 = arith.constant 0 : index
    %c0_182 = arith.constant 0 : index
    %262 = vector.load %arg5[%c4_180, %c0_181, %c0_182] : memref<6x16x40xf32, #tpu.memory_space<vmem>>, vector<1x16x40xf32>
    %263 = vector.shape_cast %262 : vector<1x16x40xf32> to vector<16x40xf32>
    %c4_183 = arith.constant 4 : index
    %c0_184 = arith.constant 0 : index
    %c0_185 = arith.constant 0 : index
    %264 = vector.load %arg6[%c4_183, %c0_184, %c0_185] : memref<6x16x1xf32, #tpu.memory_space<vmem>>, vector<1x16x1xf32>
    %265 = vector.shape_cast %264 : vector<1x16x1xf32> to vector<16x1xf32>
    %c4_186 = arith.constant 4 : index
    %c0_187 = arith.constant 0 : index
    %c0_188 = arith.constant 0 : index
    %266 = vector.load %arg7[%c4_186, %c0_187, %c0_188] : memref<6x5x8xf32, #tpu.memory_space<vmem>>, vector<1x5x8xf32>
    %267 = vector.shape_cast %266 : vector<1x5x8xf32> to vector<5x8xf32>
    %c4_189 = arith.constant 4 : index
    %c0_190 = arith.constant 0 : index
    %c0_191 = arith.constant 0 : index
    %268 = vector.load %arg8[%c4_189, %c0_190, %c0_191] : memref<6x5x1xf32, #tpu.memory_space<vmem>>, vector<1x5x1xf32>
    %269 = vector.shape_cast %268 : vector<1x5x1xf32> to vector<5x1xf32>
    %270 = vector.broadcast %259 : vector<8x1xf32> to vector<8x128xf32>
    %271 = vector.broadcast %257 : vector<1x128xf32> to vector<8x128xf32>
    %272 = arith.mulf %270, %271 : vector<8x128xf32>
    %273 = vector.broadcast %261 : vector<8x1xf32> to vector<8x128xf32>
    %274 = arith.addf %272, %273 : vector<8x128xf32>
    %c4_192 = arith.constant 4 : index
    %c0_193 = arith.constant 0 : index
    %c0_194 = arith.constant 0 : index
    %275 = vector.load %arg15[%c4_192, %c0_193, %c0_194] : memref<6x8x128xf32, #tpu.memory_space<vmem>>, vector<1x8x128xf32>
    %276 = vector.shape_cast %275 : vector<1x8x128xf32> to vector<8x128xf32>
    %c0_195 = arith.constant 0 : index
    %c0_196 = arith.constant 0 : index
    %277 = vector.load %arg14[%c0_195, %c0_196] : memref<8x256xf32, #tpu.memory_space<vmem>>, vector<8x128xf32>
    tpu.vector_store %arg14[%c0_195, %c0_196], %276 {strides = array<i32>} : memref<8x256xf32, #tpu.memory_space<vmem>>, vector<8x128xf32>,
    %c0_197 = arith.constant 0 : index
    %c128_198 = arith.constant 128 : index
    %278 = vector.load %arg14[%c0_197, %c128_198] : memref<8x256xf32, #tpu.memory_space<vmem>>, vector<8x128xf32>
    tpu.vector_store %arg14[%c0_197, %c128_198], %274 {strides = array<i32>} : memref<8x256xf32, #tpu.memory_space<vmem>>, vector<8x128xf32>,
    %c4_199 = arith.constant 4 : index
    %c0_200 = arith.constant 0 : index
    %c0_201 = arith.constant 0 : index
    %279 = vector.load %arg15[%c4_199, %c0_200, %c0_201] : memref<6x8x128xf32, #tpu.memory_space<vmem>>, vector<1x8x128xf32>
    %280 = vector.shape_cast %279 : vector<1x8x128xf32> to vector<8x128xf32>
    %281 = vector.shape_cast %274 : vector<8x128xf32> to vector<1x8x128xf32>
    tpu.vector_store %arg15[%c4_199, %c0_200, %c0_201], %281 {strides = array<i32>} : memref<6x8x128xf32, #tpu.memory_space<vmem>>, vector<1x8x128xf32>,
    %cst_202 = arith.constant 0.000000e+00 : f32
    %282 = vector.broadcast %cst_202 : f32 to vector<16x128xf32>
    %c0_203 = arith.constant 0 : index
    %c120_204 = arith.constant 120 : index
    %283 = vector.load %arg14[%c0_203, %c120_204] : memref<8x256xf32, #tpu.memory_space<vmem>>, vector<8x128xf32>
    %284 = vector.extract_strided_slice %263 {offsets = [0, 0], sizes = [16, 8], strides = [1, 1]} : vector<16x40xf32> to vector<16x8xf32>
    %cst_205 = arith.constant dense<0.000000e+00> : vector<16x128xf32>
    %285 = tpu.matmul %284, %283, %cst_205 {dimension_numbers = #tpu.dot_dimension_numbers<[1], [0], [0], [1], [0, 0, 1, 1], [], []>} : vector<16x8xf32>, vector<8x128xf32>, vector<16x128xf32> -> vector<16x128xf32>
    %286 = arith.addf %282, %285 : vector<16x128xf32>
    %c0_206 = arith.constant 0 : index
    %c122_207 = arith.constant 122 : index
    %287 = vector.load %arg14[%c0_206, %c122_207] : memref<8x256xf32, #tpu.memory_space<vmem>>, vector<8x128xf32>
    %288 = vector.extract_strided_slice %263 {offsets = [0, 8], sizes = [16, 8], strides = [1, 1]} : vector<16x40xf32> to vector<16x8xf32>
    %cst_208 = arith.constant dense<0.000000e+00> : vector<16x128xf32>
    %289 = tpu.matmul %288, %287, %cst_208 {dimension_numbers = #tpu.dot_dimension_numbers<[1], [0], [0], [1], [0, 0, 1, 1], [], []>} : vector<16x8xf32>, vector<8x128xf32>, vector<16x128xf32> -> vector<16x128xf32>
    %290 = arith.addf %286, %289 : vector<16x128xf32>
    %c0_209 = arith.constant 0 : index
    %c124_210 = arith.constant 124 : index
    %291 = vector.load %arg14[%c0_209, %c124_210] : memref<8x256xf32, #tpu.memory_space<vmem>>, vector<8x128xf32>
    %292 = vector.extract_strided_slice %263 {offsets = [0, 16], sizes = [16, 8], strides = [1, 1]} : vector<16x40xf32> to vector<16x8xf32>
    %cst_211 = arith.constant dense<0.000000e+00> : vector<16x128xf32>
    %293 = tpu.matmul %292, %291, %cst_211 {dimension_numbers = #tpu.dot_dimension_numbers<[1], [0], [0], [1], [0, 0, 1, 1], [], []>} : vector<16x8xf32>, vector<8x128xf32>, vector<16x128xf32> -> vector<16x128xf32>
    %294 = arith.addf %290, %293 : vector<16x128xf32>
    %c0_212 = arith.constant 0 : index
    %c126_213 = arith.constant 126 : index
    %295 = vector.load %arg14[%c0_212, %c126_213] : memref<8x256xf32, #tpu.memory_space<vmem>>, vector<8x128xf32>
    %296 = vector.extract_strided_slice %263 {offsets = [0, 24], sizes = [16, 8], strides = [1, 1]} : vector<16x40xf32> to vector<16x8xf32>
    %cst_214 = arith.constant dense<0.000000e+00> : vector<16x128xf32>
    %297 = tpu.matmul %296, %295, %cst_214 {dimension_numbers = #tpu.dot_dimension_numbers<[1], [0], [0], [1], [0, 0, 1, 1], [], []>} : vector<16x8xf32>, vector<8x128xf32>, vector<16x128xf32> -> vector<16x128xf32>
    %298 = arith.addf %294, %297 : vector<16x128xf32>
    %c0_215 = arith.constant 0 : index
    %c128_216 = arith.constant 128 : index
    %299 = vector.load %arg14[%c0_215, %c128_216] : memref<8x256xf32, #tpu.memory_space<vmem>>, vector<8x128xf32>
    %300 = vector.extract_strided_slice %263 {offsets = [0, 32], sizes = [16, 8], strides = [1, 1]} : vector<16x40xf32> to vector<16x8xf32>
    %cst_217 = arith.constant dense<0.000000e+00> : vector<16x128xf32>
    %301 = tpu.matmul %300, %299, %cst_217 {dimension_numbers = #tpu.dot_dimension_numbers<[1], [0], [0], [1], [0, 0, 1, 1], [], []>} : vector<16x8xf32>, vector<8x128xf32>, vector<16x128xf32> -> vector<16x128xf32>
    %302 = arith.addf %298, %301 : vector<16x128xf32>
    %303 = vector.broadcast %265 : vector<16x1xf32> to vector<16x128xf32>
    %304 = arith.addf %302, %303 : vector<16x128xf32>
    %305 = vector.extract_strided_slice %304 {offsets = [0, 0], sizes = [8, 128], strides = [1, 1]} : vector<16x128xf32> to vector<8x128xf32>
    %306 = math.tanh %305 : vector<8x128xf32>
    %307 = vector.extract_strided_slice %304 {offsets = [8, 0], sizes = [8, 128], strides = [1, 1]} : vector<16x128xf32> to vector<8x128xf32>
    %308 = arith.negf %307 : vector<8x128xf32>
    %309 = math.exp %308 : vector<8x128xf32>
    %cst_218 = arith.constant 1.000000e+00 : f32
    %310 = vector.broadcast %cst_218 : f32 to vector<8x128xf32>
    %311 = arith.addf %310, %309 : vector<8x128xf32>
    %312 = arith.divf %310, %311 : vector<8x128xf32>
    %313 = arith.mulf %306, %312 : vector<8x128xf32>
    %cst_219 = arith.constant dense<0.000000e+00> : vector<5x128xf32>
    %314 = tpu.matmul %267, %313, %cst_219 {dimension_numbers = #tpu.dot_dimension_numbers<[1], [0], [0], [1], [0, 0, 1, 1], [], []>} : vector<5x8xf32>, vector<8x128xf32>, vector<5x128xf32> -> vector<5x128xf32>
    %315 = vector.broadcast %269 : vector<5x1xf32> to vector<5x128xf32>
    %316 = arith.addf %314, %315 : vector<5x128xf32>
    %317 = vector.extract_strided_slice %316 {offsets = [0, 0], sizes = [4, 128], strides = [1, 1]} : vector<5x128xf32> to vector<4x128xf32>
    %318 = arith.addf %255, %317 : vector<4x128xf32>
    %319 = vector.extract_strided_slice %316 {offsets = [4, 0], sizes = [1, 128], strides = [1, 1]} : vector<5x128xf32> to vector<1x128xf32>
    %320 = arith.addf %319, %257 : vector<1x128xf32>
    %c5 = arith.constant 5 : index
    %c0_220 = arith.constant 0 : index
    %c0_221 = arith.constant 0 : index
    %321 = vector.load %arg3[%c5, %c0_220, %c0_221] : memref<6x8x1xf32, #tpu.memory_space<vmem>>, vector<1x8x1xf32>
    %322 = vector.shape_cast %321 : vector<1x8x1xf32> to vector<8x1xf32>
    %c5_222 = arith.constant 5 : index
    %c0_223 = arith.constant 0 : index
    %c0_224 = arith.constant 0 : index
    %323 = vector.load %arg4[%c5_222, %c0_223, %c0_224] : memref<6x8x1xf32, #tpu.memory_space<vmem>>, vector<1x8x1xf32>
    %324 = vector.shape_cast %323 : vector<1x8x1xf32> to vector<8x1xf32>
    %c5_225 = arith.constant 5 : index
    %c0_226 = arith.constant 0 : index
    %c0_227 = arith.constant 0 : index
    %325 = vector.load %arg5[%c5_225, %c0_226, %c0_227] : memref<6x16x40xf32, #tpu.memory_space<vmem>>, vector<1x16x40xf32>
    %326 = vector.shape_cast %325 : vector<1x16x40xf32> to vector<16x40xf32>
    %c5_228 = arith.constant 5 : index
    %c0_229 = arith.constant 0 : index
    %c0_230 = arith.constant 0 : index
    %327 = vector.load %arg6[%c5_228, %c0_229, %c0_230] : memref<6x16x1xf32, #tpu.memory_space<vmem>>, vector<1x16x1xf32>
    %328 = vector.shape_cast %327 : vector<1x16x1xf32> to vector<16x1xf32>
    %c5_231 = arith.constant 5 : index
    %c0_232 = arith.constant 0 : index
    %c0_233 = arith.constant 0 : index
    %329 = vector.load %arg7[%c5_231, %c0_232, %c0_233] : memref<6x5x8xf32, #tpu.memory_space<vmem>>, vector<1x5x8xf32>
    %330 = vector.shape_cast %329 : vector<1x5x8xf32> to vector<5x8xf32>
    %c5_234 = arith.constant 5 : index
    %c0_235 = arith.constant 0 : index
    %c0_236 = arith.constant 0 : index
    %331 = vector.load %arg8[%c5_234, %c0_235, %c0_236] : memref<6x5x1xf32, #tpu.memory_space<vmem>>, vector<1x5x1xf32>
    %332 = vector.shape_cast %331 : vector<1x5x1xf32> to vector<5x1xf32>
    %333 = vector.broadcast %322 : vector<8x1xf32> to vector<8x128xf32>
    %334 = vector.broadcast %320 : vector<1x128xf32> to vector<8x128xf32>
    %335 = arith.mulf %333, %334 : vector<8x128xf32>
    %336 = vector.broadcast %324 : vector<8x1xf32> to vector<8x128xf32>
    %337 = arith.addf %335, %336 : vector<8x128xf32>
    %c5_237 = arith.constant 5 : index
    %c0_238 = arith.constant 0 : index
    %c0_239 = arith.constant 0 : index
    %338 = vector.load %arg15[%c5_237, %c0_238, %c0_239] : memref<6x8x128xf32, #tpu.memory_space<vmem>>, vector<1x8x128xf32>
    %339 = vector.shape_cast %338 : vector<1x8x128xf32> to vector<8x128xf32>
    %c0_240 = arith.constant 0 : index
    %c0_241 = arith.constant 0 : index
    %340 = vector.load %arg14[%c0_240, %c0_241] : memref<8x256xf32, #tpu.memory_space<vmem>>, vector<8x128xf32>
    tpu.vector_store %arg14[%c0_240, %c0_241], %339 {strides = array<i32>} : memref<8x256xf32, #tpu.memory_space<vmem>>, vector<8x128xf32>,
    %c0_242 = arith.constant 0 : index
    %c128_243 = arith.constant 128 : index
    %341 = vector.load %arg14[%c0_242, %c128_243] : memref<8x256xf32, #tpu.memory_space<vmem>>, vector<8x128xf32>
    tpu.vector_store %arg14[%c0_242, %c128_243], %337 {strides = array<i32>} : memref<8x256xf32, #tpu.memory_space<vmem>>, vector<8x128xf32>,
    %c5_244 = arith.constant 5 : index
    %c0_245 = arith.constant 0 : index
    %c0_246 = arith.constant 0 : index
    %342 = vector.load %arg15[%c5_244, %c0_245, %c0_246] : memref<6x8x128xf32, #tpu.memory_space<vmem>>, vector<1x8x128xf32>
    %343 = vector.shape_cast %342 : vector<1x8x128xf32> to vector<8x128xf32>
    %344 = vector.shape_cast %337 : vector<8x128xf32> to vector<1x8x128xf32>
    tpu.vector_store %arg15[%c5_244, %c0_245, %c0_246], %344 {strides = array<i32>} : memref<6x8x128xf32, #tpu.memory_space<vmem>>, vector<1x8x128xf32>,
    %cst_247 = arith.constant 0.000000e+00 : f32
    %345 = vector.broadcast %cst_247 : f32 to vector<16x128xf32>
    %c0_248 = arith.constant 0 : index
    %c112_249 = arith.constant 112 : index
    %346 = vector.load %arg14[%c0_248, %c112_249] : memref<8x256xf32, #tpu.memory_space<vmem>>, vector<8x128xf32>
    %347 = vector.extract_strided_slice %326 {offsets = [0, 0], sizes = [16, 8], strides = [1, 1]} : vector<16x40xf32> to vector<16x8xf32>
    %cst_250 = arith.constant dense<0.000000e+00> : vector<16x128xf32>
    %348 = tpu.matmul %347, %346, %cst_250 {dimension_numbers = #tpu.dot_dimension_numbers<[1], [0], [0], [1], [0, 0, 1, 1], [], []>} : vector<16x8xf32>, vector<8x128xf32>, vector<16x128xf32> -> vector<16x128xf32>
    %349 = arith.addf %345, %348 : vector<16x128xf32>
    %c0_251 = arith.constant 0 : index
    %c116_252 = arith.constant 116 : index
    %350 = vector.load %arg14[%c0_251, %c116_252] : memref<8x256xf32, #tpu.memory_space<vmem>>, vector<8x128xf32>
    %351 = vector.extract_strided_slice %326 {offsets = [0, 8], sizes = [16, 8], strides = [1, 1]} : vector<16x40xf32> to vector<16x8xf32>
    %cst_253 = arith.constant dense<0.000000e+00> : vector<16x128xf32>
    %352 = tpu.matmul %351, %350, %cst_253 {dimension_numbers = #tpu.dot_dimension_numbers<[1], [0], [0], [1], [0, 0, 1, 1], [], []>} : vector<16x8xf32>, vector<8x128xf32>, vector<16x128xf32> -> vector<16x128xf32>
    %353 = arith.addf %349, %352 : vector<16x128xf32>
    %c0_254 = arith.constant 0 : index
    %c120_255 = arith.constant 120 : index
    %354 = vector.load %arg14[%c0_254, %c120_255] : memref<8x256xf32, #tpu.memory_space<vmem>>, vector<8x128xf32>
    %355 = vector.extract_strided_slice %326 {offsets = [0, 16], sizes = [16, 8], strides = [1, 1]} : vector<16x40xf32> to vector<16x8xf32>
    %cst_256 = arith.constant dense<0.000000e+00> : vector<16x128xf32>
    %356 = tpu.matmul %355, %354, %cst_256 {dimension_numbers = #tpu.dot_dimension_numbers<[1], [0], [0], [1], [0, 0, 1, 1], [], []>} : vector<16x8xf32>, vector<8x128xf32>, vector<16x128xf32> -> vector<16x128xf32>
    %357 = arith.addf %353, %356 : vector<16x128xf32>
    %c0_257 = arith.constant 0 : index
    %c124_258 = arith.constant 124 : index
    %358 = vector.load %arg14[%c0_257, %c124_258] : memref<8x256xf32, #tpu.memory_space<vmem>>, vector<8x128xf32>
    %359 = vector.extract_strided_slice %326 {offsets = [0, 24], sizes = [16, 8], strides = [1, 1]} : vector<16x40xf32> to vector<16x8xf32>
    %cst_259 = arith.constant dense<0.000000e+00> : vector<16x128xf32>
    %360 = tpu.matmul %359, %358, %cst_259 {dimension_numbers = #tpu.dot_dimension_numbers<[1], [0], [0], [1], [0, 0, 1, 1], [], []>} : vector<16x8xf32>, vector<8x128xf32>, vector<16x128xf32> -> vector<16x128xf32>
    %361 = arith.addf %357, %360 : vector<16x128xf32>
    %c0_260 = arith.constant 0 : index
    %c128_261 = arith.constant 128 : index
    %362 = vector.load %arg14[%c0_260, %c128_261] : memref<8x256xf32, #tpu.memory_space<vmem>>, vector<8x128xf32>
    %363 = vector.extract_strided_slice %326 {offsets = [0, 32], sizes = [16, 8], strides = [1, 1]} : vector<16x40xf32> to vector<16x8xf32>
    %cst_262 = arith.constant dense<0.000000e+00> : vector<16x128xf32>
    %364 = tpu.matmul %363, %362, %cst_262 {dimension_numbers = #tpu.dot_dimension_numbers<[1], [0], [0], [1], [0, 0, 1, 1], [], []>} : vector<16x8xf32>, vector<8x128xf32>, vector<16x128xf32> -> vector<16x128xf32>
    %365 = arith.addf %361, %364 : vector<16x128xf32>
    %366 = vector.broadcast %328 : vector<16x1xf32> to vector<16x128xf32>
    %367 = arith.addf %365, %366 : vector<16x128xf32>
    %368 = vector.extract_strided_slice %367 {offsets = [0, 0], sizes = [8, 128], strides = [1, 1]} : vector<16x128xf32> to vector<8x128xf32>
    %369 = math.tanh %368 : vector<8x128xf32>
    %370 = vector.extract_strided_slice %367 {offsets = [8, 0], sizes = [8, 128], strides = [1, 1]} : vector<16x128xf32> to vector<8x128xf32>
    %371 = arith.negf %370 : vector<8x128xf32>
    %372 = math.exp %371 : vector<8x128xf32>
    %cst_263 = arith.constant 1.000000e+00 : f32
    %373 = vector.broadcast %cst_263 : f32 to vector<8x128xf32>
    %374 = arith.addf %373, %372 : vector<8x128xf32>
    %375 = arith.divf %373, %374 : vector<8x128xf32>
    %376 = arith.mulf %369, %375 : vector<8x128xf32>
    %cst_264 = arith.constant dense<0.000000e+00> : vector<5x128xf32>
    %377 = tpu.matmul %330, %376, %cst_264 {dimension_numbers = #tpu.dot_dimension_numbers<[1], [0], [0], [1], [0, 0, 1, 1], [], []>} : vector<5x8xf32>, vector<8x128xf32>, vector<5x128xf32> -> vector<5x128xf32>
    %378 = vector.broadcast %332 : vector<5x1xf32> to vector<5x128xf32>
    %379 = arith.addf %377, %378 : vector<5x128xf32>
    %380 = vector.extract_strided_slice %379 {offsets = [0, 0], sizes = [4, 128], strides = [1, 1]} : vector<5x128xf32> to vector<4x128xf32>
    %381 = arith.addf %318, %380 : vector<4x128xf32>
    %c0_265 = arith.constant 0 : index
    %c0_266 = arith.constant 0 : index
    %382 = vector.load %arg9[%c0_265, %c0_266] : memref<4x4xf32, #tpu.memory_space<vmem>>, vector<4x4xf32>
    %cst_267 = arith.constant dense<0.000000e+00> : vector<4x128xf32>
    %383 = tpu.matmul %382, %381, %cst_267 {dimension_numbers = #tpu.dot_dimension_numbers<[1], [0], [0], [1], [0, 0, 1, 1], [], []>} : vector<4x4xf32>, vector<4x128xf32>, vector<4x128xf32> -> vector<4x128xf32>
    %c0_268 = arith.constant 0 : index
    %c0_269 = arith.constant 0 : index
    %384 = vector.load %arg10[%c0_268, %c0_269] : memref<4x1xf32, #tpu.memory_space<vmem>>, vector<4x1xf32>
    %385 = vector.broadcast %384 : vector<4x1xf32> to vector<4x128xf32>
    %386 = arith.addf %383, %385 : vector<4x128xf32>
    %cst_270 = arith.constant 0.000000e+00 : f32
    %387 = vector.broadcast %cst_270 : f32 to vector<4x128xf32>
    %388 = arith.maximumf %386, %387 : vector<4x128xf32>
    %c0_271 = arith.constant 0 : index
    %c0_272 = arith.constant 0 : index
    %389 = vector.load %arg11[%c0_271, %c0_272] : memref<2x4xf32, #tpu.memory_space<vmem>>, vector<2x4xf32>
    %cst_273 = arith.constant dense<0.000000e+00> : vector<2x128xf32>
    %390 = tpu.matmul %389, %388, %cst_273 {dimension_numbers = #tpu.dot_dimension_numbers<[1], [0], [0], [1], [0, 0, 1, 1], [], []>} : vector<2x4xf32>, vector<4x128xf32>, vector<2x128xf32> -> vector<2x128xf32>
    %c0_274 = arith.constant 0 : index
    %c0_275 = arith.constant 0 : index
    %391 = vector.load %arg12[%c0_274, %c0_275] : memref<2x1xf32, #tpu.memory_space<vmem>>, vector<2x1xf32>
    %392 = vector.broadcast %391 : vector<2x1xf32> to vector<2x128xf32>
    %393 = arith.addf %390, %392 : vector<2x128xf32>
    %394 = vector.extract_strided_slice %393 {offsets = [0, 0], sizes = [1, 128], strides = [1, 1]} : vector<2x128xf32> to vector<1x128xf32>
    %c0_276 = arith.constant 0 : index
    %c0_277 = arith.constant 0 : index
    %c0_278 = arith.constant 0 : index
    %395 = vector.load %arg13[%c0_276, %c0_277, %c0_278] : memref<1x2x128xf32, #tpu.memory_space<vmem>>, vector<1x1x128xf32>
    %396 = vector.shape_cast %395 : vector<1x1x128xf32> to vector<1x128xf32>
    %397 = vector.shape_cast %394 : vector<1x128xf32> to vector<1x1x128xf32>
    tpu.vector_store %arg13[%c0_276, %c0_277, %c0_278], %397 {strides = array<i32>} : memref<1x2x128xf32, #tpu.memory_space<vmem>>, vector<1x1x128xf32>,
    %398 = vector.extract_strided_slice %393 {offsets = [1, 0], sizes = [1, 128], strides = [1, 1]} : vector<2x128xf32> to vector<1x128xf32>
    %cst_279 = arith.constant 5.000000e-01 : f32
    %399 = vector.broadcast %cst_279 : f32 to vector<1x128xf32>
    %400 = arith.mulf %399, %398 : vector<1x128xf32>
    %401 = math.exp %400 : vector<1x128xf32>
    %c0_280 = arith.constant 0 : index
    %c1_281 = arith.constant 1 : index
    %c0_282 = arith.constant 0 : index
    %402 = vector.load %arg13[%c0_280, %c1_281, %c0_282] : memref<1x2x128xf32, #tpu.memory_space<vmem>>, vector<1x1x128xf32>
    %403 = vector.shape_cast %402 : vector<1x1x128xf32> to vector<1x128xf32>
    %404 = vector.shape_cast %401 : vector<1x128xf32> to vector<1x1x128xf32>
    tpu.vector_store %arg13[%c0_280, %c1_281, %c0_282], %404 {strides = array<i32>} : memref<1x2x128xf32, #tpu.memory_space<vmem>>, vector<1x1x128xf32>,
    return
  }
  func.func @transform_0(%arg0: i32, %arg1: i32) -> (i32, i32, i32) {
    %c0_i32 = arith.constant 0 : i32
    %c0_i32_0 = arith.constant 0 : i32
    return %arg0, %c0_i32, %arg1 : i32, i32, i32
  }
  func.func @transform_1(%arg0: i32, %arg1: i32) -> (i32, i32, i32) {
    %c0_i32 = arith.constant 0 : i32
    %c0_i32_0 = arith.constant 0 : i32
    %c0_i32_1 = arith.constant 0 : i32
    %c0_i32_2 = arith.constant 0 : i32
    return %c0_i32, %c0_i32_0, %c0_i32_1 : i32, i32, i32
  }
  func.func @transform_2(%arg0: i32, %arg1: i32) -> (i32, i32, i32) {
    %c0_i32 = arith.constant 0 : i32
    %c0_i32_0 = arith.constant 0 : i32
    %c0_i32_1 = arith.constant 0 : i32
    %c0_i32_2 = arith.constant 0 : i32
    return %c0_i32, %c0_i32_0, %c0_i32_1 : i32, i32, i32
  }
  func.func @transform_3(%arg0: i32, %arg1: i32) -> (i32, i32, i32) {
    %c0_i32 = arith.constant 0 : i32
    %c0_i32_0 = arith.constant 0 : i32
    %c0_i32_1 = arith.constant 0 : i32
    %c0_i32_2 = arith.constant 0 : i32
    return %c0_i32, %c0_i32_0, %c0_i32_1 : i32, i32, i32
  }
  func.func @transform_4(%arg0: i32, %arg1: i32) -> (i32, i32, i32) {
    %c0_i32 = arith.constant 0 : i32
    %c0_i32_0 = arith.constant 0 : i32
    %c0_i32_1 = arith.constant 0 : i32
    %c0_i32_2 = arith.constant 0 : i32
    return %c0_i32, %c0_i32_0, %c0_i32_1 : i32, i32, i32
  }
  func.func @transform_5(%arg0: i32, %arg1: i32) -> (i32, i32, i32) {
    %c0_i32 = arith.constant 0 : i32
    %c0_i32_0 = arith.constant 0 : i32
    %c0_i32_1 = arith.constant 0 : i32
    %c0_i32_2 = arith.constant 0 : i32
    return %c0_i32, %c0_i32_0, %c0_i32_1 : i32, i32, i32
  }
  func.func @transform_6(%arg0: i32, %arg1: i32) -> (i32, i32, i32) {
    %c0_i32 = arith.constant 0 : i32
    %c0_i32_0 = arith.constant 0 : i32
    %c0_i32_1 = arith.constant 0 : i32
    %c0_i32_2 = arith.constant 0 : i32
    return %c0_i32, %c0_i32_0, %c0_i32_1 : i32, i32, i32
  }
  func.func @transform_7(%arg0: i32, %arg1: i32) -> (i32, i32) {
    %c0_i32 = arith.constant 0 : i32
    %c0_i32_0 = arith.constant 0 : i32
    %c0_i32_1 = arith.constant 0 : i32
    return %c0_i32, %c0_i32_0 : i32, i32
  }
  func.func @transform_8(%arg0: i32, %arg1: i32) -> (i32, i32) {
    %c0_i32 = arith.constant 0 : i32
    %c0_i32_0 = arith.constant 0 : i32
    %c0_i32_1 = arith.constant 0 : i32
    return %c0_i32, %c0_i32_0 : i32, i32
  }
  func.func @transform_9(%arg0: i32, %arg1: i32) -> (i32, i32) {
    %c0_i32 = arith.constant 0 : i32
    %c0_i32_0 = arith.constant 0 : i32
    %c0_i32_1 = arith.constant 0 : i32
    return %c0_i32, %c0_i32_0 : i32, i32
  }
  func.func @transform_10(%arg0: i32, %arg1: i32) -> (i32, i32) {
    %c0_i32 = arith.constant 0 : i32
    %c0_i32_0 = arith.constant 0 : i32
    %c0_i32_1 = arith.constant 0 : i32
    return %c0_i32, %c0_i32_0 : i32, i32
  }
  func.func @transform_11(%arg0: i32, %arg1: i32) -> (i32, i32, i32) {
    %c0_i32 = arith.constant 0 : i32
    %c0_i32_0 = arith.constant 0 : i32
    return %arg0, %c0_i32, %arg1 : i32, i32, i32
  }
}

</mosaic_0001>

<llo_original>
// kernel: tpu_custom_call.1
$region0: #{tpu_custom_call.1}
  #allocation0 [shape = 'u32[]', space=smem, size = 0x4, offset = 0x4, fixed_abs, tag = 'smem constant byte address 0x4 - core index']
  #allocation1 [shape = 'u32[144,128]{1,0:T(1,128)}', space=vmem, size = 0x12000, scoped, tag = 'internal scratch']
  #allocation2 [shape = 'f32[8,256]{1,0:T(8,128)}', space=vmem, size = 0x2000, scoped, tag = 'scratch operand']
  #allocation3 [shape = 'f32[6,8,128]{2,1,0:T(8,128)}', space=vmem, size = 0x6000, scoped, tag = 'scratch operand']
  %s0 = inlined_call_operand.vmem [shape: f32[2,1,256], index: 0, kind: input, shape index: {}]
  %s1 = inlined_call_operand.vmem [shape: f32[6,8,1], index: 1, kind: input, shape index: {}]
  %s2 = inlined_call_operand.vmem [shape: f32[6,8,1], index: 2, kind: input, shape index: {}]
  %s3 = inlined_call_operand.vmem [shape: f32[6,16,40], index: 3, kind: input, shape index: {}]
  %s4 = inlined_call_operand.vmem [shape: f32[6,16,1], index: 4, kind: input, shape index: {}]
  %s5 = inlined_call_operand.vmem [shape: f32[6,5,8], index: 5, kind: input, shape index: {}]
  %s6 = inlined_call_operand.vmem [shape: f32[6,5,1], index: 6, kind: input, shape index: {}]
  %s7 = inlined_call_operand.vmem [shape: f32[4,4], index: 7, kind: input, shape index: {}]
  %s8 = inlined_call_operand.vmem [shape: f32[4,1], index: 8, kind: input, shape index: {}]
  %s9 = inlined_call_operand.vmem [shape: f32[2,4], index: 9, kind: input, shape index: {}]
  %s10 = inlined_call_operand.vmem [shape: f32[2,1], index: 10, kind: input, shape index: {}]
  %s11 = inlined_call_operand.hbm [shape: f32[2,2,256], index: 11, kind: output, shape index: {}]
  %s12 = sld [smem:[#allocation0]]
  $region81: #{tpu_custom_call.1} parent=0
    _
  %s14 = ssub.s32 1, %s12
  %s15 = scalar_select 0, %s14, %s12
  $region1: #{tpu_custom_call.1} parent=0
    #allocation4 [shape = 'u8[2048]{0}', space=vmem, size = 0x800, scoped, tag = 'output window, operand 0']
    #allocation5 [shape = 's32[2]{0}', space=sflag, size = 0x8, scoped, tag = 'scoped memory for tpu_custom_call.1']
    %16 = vsyncpa [#allocation5], 0
    %s17 = scalar_lea.sflag [#allocation5], 1
    %18 = vsyncpa %s17, 0
    loop: start=0, step=1, limit=6
    $region2: #{tpu_custom_call.1} parent=1 // loop_pre_header
      _
    $region3: #{tpu_custom_call.1} parent=1 // loop_header
      %s20 = sphi 0, %s24
      %p21 = scmp.ge.s32.totalorder %s20, 6
      %s27 = sphi 0, %s39
      %s28 = sphi 0, %s35
      %s29 = sphi 0, %s27
      %s30 = sphi 0, %s28
      %s31 = sphi 0, %s29
      %s32 = sphi 0, %s30
      %s44 = sphi 0, %s46
      %s47 = sphi 0, %s44
      %s48 = sphi 0, %s47
      %s64 = sphi 0, %s48
      %s68 = sphi 0, %s68
      %s70 = sphi 0, %s68
      %s71 = sphi 0, %s70
      %s85 = sphi 0, %s71
      %s89 = sphi 0, %s89
      %s91 = sphi 0, %s89
      %s92 = sphi 0, %s91
      %s106 = sphi 0, %s92
      %s110 = sphi 0, %s110
      %s112 = sphi 0, %s110
      %s113 = sphi 0, %s112
      %s127 = sphi 0, %s113
      %s131 = sphi 0, %s131
      %s133 = sphi 0, %s131
      %s134 = sphi 0, %s133
      %s148 = sphi 0, %s134
      %s152 = sphi 0, %s152
      %s154 = sphi 0, %s152
      %s155 = sphi 0, %s154
      %s169 = sphi 0, %s155
      %s173 = sphi 0, %s173
      %s175 = sphi 0, %s173
      %s176 = sphi 0, %s175
      %s190 = sphi 0, %s176
      %s194 = sphi 0, %s194
      %s196 = sphi 0, %s194
      %s197 = sphi 0, %s196
      %s211 = sphi 0, %s197
      %s215 = sphi 0, %s215
      %s217 = sphi 0, %s215
      %s218 = sphi 0, %s217
      %s232 = sphi 0, %s218
      %s236 = sphi 0, %s236
      %s238 = sphi 0, %s236
      %s239 = sphi 0, %s238
      %s253 = sphi 0, %s239
      %s257 = sphi 0, %s257
      %s259 = sphi 0, %s257
      %s260 = sphi 0, %s259
      %s274 = sphi 0, %s260
      %s282 = sphi 0, %s284
      %s285 = sphi 0, %s282
      %s286 = sphi 0, %s285
      %s302 = sphi 0, %s286
    $region4: #{tpu_custom_call.1} parent=1 // loop_header_branch
      %23 = sbr.rel (%p21) target = $region8
    $region5: #{tpu_custom_call.1} parent=1 // loop_body
      %s25 = ssub.s32 %s20, 1
      %s26 = ssub.s32 %s20, 2
      %s33 = sadd.s32 1, %s28
      %p34 = scmp.ge.s32.totalorder %s33, 2
      %s35 = scalar_select %p34, 0, %s33
      %s36 = sadd.s32 1, %s27
      %s37 = scalar_select %p34, %s36, %s27
      %p38 = scmp.ge.s32.totalorder %s37, 2
      %s39 = scalar_select %p38, 0, %s37
      %s40 = ssub.s32 %s27, %s39
      %s41 = ssub.s32 %s28, %s35
      %s42 = sor.u32 %s40, %s41
      %p43 = scmp.eq.s32.totalorder %s42, 0
      %s45 = sadd.s32 %s44, 1
      %s46 = scalar_select %p43, %s44, %s45
      %p49 = pneg %p43
      %p50 = scmp.eq.s32.totalorder %s20, 3
      %p51 = por %p49, %p50
      %p52 = scmp.ne.s32.totalorder %s44, %s47
      %p53 = scmp.eq.s32.totalorder %s20, 0
      %p54 = por %p52, %p53
      %p55 = scmp.ne.s32.totalorder %s44, %s47
      %p56 = scmp.eq.s32.totalorder %s25, 3
      %p57 = por %p55, %p56
      %p58 = scmp.ne.s32.totalorder %s47, %s48
      %p59 = scmp.eq.s32.totalorder %s25, 0
      %p60 = por %p58, %p59
      %p61 = scmp.ne.s32.totalorder %s47, %s48
      %p62 = scmp.eq.s32.totalorder %s26, 3
      %p63 = por %p61, %p62
      %p65 = scmp.ne.s32.totalorder %s48, %s64
      %p66 = scmp.eq.s32.totalorder %s26, 0
      %p67 = por %p65, %p66
      %s69 = sadd.s32 %s68, 1
      %p72 = scmp.eq.s32.totalorder %s20, 3
      %p73 = scmp.ne.s32.totalorder %s68, %s70
      %p74 = scmp.eq.s32.totalorder %s20, 0
      %p75 = por %p73, %p74
      %p76 = scmp.ne.s32.totalorder %s68, %s70
      %p77 = scmp.eq.s32.totalorder %s25, 3
      %p78 = por %p76, %p77
      %p79 = scmp.ne.s32.totalorder %s70, %s71
      %p80 = scmp.eq.s32.totalorder %s25, 0
      %p81 = por %p79, %p80
      %p82 = scmp.ne.s32.totalorder %s70, %s71
      %p83 = scmp.eq.s32.totalorder %s26, 3
      %p84 = por %p82, %p83
      %p86 = scmp.ne.s32.totalorder %s71, %s85
      %p87 = scmp.eq.s32.totalorder %s26, 0
      %p88 = por %p86, %p87
      %s90 = sadd.s32 %s89, 1
      %p93 = scmp.eq.s32.totalorder %s20, 3
      %p94 = scmp.ne.s32.totalorder %s89, %s91
      %p95 = scmp.eq.s32.totalorder %s20, 0
      %p96 = por %p94, %p95
      %p97 = scmp.ne.s32.totalorder %s89, %s91
      %p98 = scmp.eq.s32.totalorder %s25, 3
      %p99 = por %p97, %p98
      %p100 = scmp.ne.s32.totalorder %s91, %s92
      %p101 = scmp.eq.s32.totalorder %s25, 0
      %p102 = por %p100, %p101
      %p103 = scmp.ne.s32.totalorder %s91, %s92
      %p104 = scmp.eq.s32.totalorder %s26, 3
      %p105 = por %p103, %p104
      %p107 = scmp.ne.s32.totalorder %s92, %s106
      %p108 = scmp.eq.s32.totalorder %s26, 0
      %p109 = por %p107, %p108
      %s111 = sadd.s32 %s110, 1
      %p114 = scmp.eq.s32.totalorder %s20, 3
      %p115 = scmp.ne.s32.totalorder %s110, %s112
      %p116 = scmp.eq.s32.totalorder %s20, 0
      %p117 = por %p115, %p116
      %p118 = scmp.ne.s32.totalorder %s110, %s112
      %p119 = scmp.eq.s32.totalorder %s25, 3
      %p120 = por %p118, %p119
      %p121 = scmp.ne.s32.totalorder %s112, %s113
      %p122 = scmp.eq.s32.totalorder %s25, 0
      %p123 = por %p121, %p122
      %p124 = scmp.ne.s32.totalorder %s112, %s113
      %p125 = scmp.eq.s32.totalorder %s26, 3
      %p126 = por %p124, %p125
      %p128 = scmp.ne.s32.totalorder %s113, %s127
      %p129 = scmp.eq.s32.totalorder %s26, 0
      %p130 = por %p128, %p129
      %s132 = sadd.s32 %s131, 1
      %p135 = scmp.eq.s32.totalorder %s20, 3
      %p136 = scmp.ne.s32.totalorder %s131, %s133
      %p137 = scmp.eq.s32.totalorder %s20, 0
      %p138 = por %p136, %p137
      %p139 = scmp.ne.s32.totalorder %s131, %s133
      %p140 = scmp.eq.s32.totalorder %s25, 3
      %p141 = por %p139, %p140
      %p142 = scmp.ne.s32.totalorder %s133, %s134
      %p143 = scmp.eq.s32.totalorder %s25, 0
      %p144 = por %p142, %p143
      %p145 = scmp.ne.s32.totalorder %s133, %s134
      %p146 = scmp.eq.s32.totalorder %s26, 3
      %p147 = por %p145, %p146
      %p149 = scmp.ne.s32.totalorder %s134, %s148
      %p150 = scmp.eq.s32.totalorder %s26, 0
      %p151 = por %p149, %p150
      %s153 = sadd.s32 %s152, 1
      %p156 = scmp.eq.s32.totalorder %s20, 3
      %p157 = scmp.ne.s32.totalorder %s152, %s154
      %p158 = scmp.eq.s32.totalorder %s20, 0
      %p159 = por %p157, %p158
      %p160 = scmp.ne.s32.totalorder %s152, %s154
      %p161 = scmp.eq.s32.totalorder %s25, 3
      %p162 = por %p160, %p161
      %p163 = scmp.ne.s32.totalorder %s154, %s155
      %p164 = scmp.eq.s32.totalorder %s25, 0
      %p165 = por %p163, %p164
      %p166 = scmp.ne.s32.totalorder %s154, %s155
      %p167 = scmp.eq.s32.totalorder %s26, 3
      %p168 = por %p166, %p167
      %p170 = scmp.ne.s32.totalorder %s155, %s169
      %p171 = scmp.eq.s32.totalorder %s26, 0
      %p172 = por %p170, %p171
      %s174 = sadd.s32 %s173, 1
      %p177 = scmp.eq.s32.totalorder %s20, 3
      %p178 = scmp.ne.s32.totalorder %s173, %s175
      %p179 = scmp.eq.s32.totalorder %s20, 0
      %p180 = por %p178, %p179
      %p181 = scmp.ne.s32.totalorder %s173, %s175
      %p182 = scmp.eq.s32.totalorder %s25, 3
      %p183 = por %p181, %p182
      %p184 = scmp.ne.s32.totalorder %s175, %s176
      %p185 = scmp.eq.s32.totalorder %s25, 0
      %p186 = por %p184, %p185
      %p187 = scmp.ne.s32.totalorder %s175, %s176
      %p188 = scmp.eq.s32.totalorder %s26, 3
      %p189 = por %p187, %p188
      %p191 = scmp.ne.s32.totalorder %s176, %s190
      %p192 = scmp.eq.s32.totalorder %s26, 0
      %p193 = por %p191, %p192
      %s195 = sadd.s32 %s194, 1
      %p198 = scmp.eq.s32.totalorder %s20, 3
      %p199 = scmp.ne.s32.totalorder %s194, %s196
      %p200 = scmp.eq.s32.totalorder %s20, 0
      %p201 = por %p199, %p200
      %p202 = scmp.ne.s32.totalorder %s194, %s196
      %p203 = scmp.eq.s32.totalorder %s25, 3
      %p204 = por %p202, %p203
      %p205 = scmp.ne.s32.totalorder %s196, %s197
      %p206 = scmp.eq.s32.totalorder %s25, 0
      %p207 = por %p205, %p206
      %p208 = scmp.ne.s32.totalorder %s196, %s197
      %p209 = scmp.eq.s32.totalorder %s26, 3
      %p210 = por %p208, %p209
      %p212 = scmp.ne.s32.totalorder %s197, %s211
      %p213 = scmp.eq.s32.totalorder %s26, 0
      %p214 = por %p212, %p213
      %s216 = sadd.s32 %s215, 1
      %p219 = scmp.eq.s32.totalorder %s20, 3
      %p220 = scmp.ne.s32.totalorder %s215, %s217
      %p221 = scmp.eq.s32.totalorder %s20, 0
      %p222 = por %p220, %p221
      %p223 = scmp.ne.s32.totalorder %s215, %s217
      %p224 = scmp.eq.s32.totalorder %s25, 3
      %p225 = por %p223, %p224
      %p226 = scmp.ne.s32.totalorder %s217, %s218
      %p227 = scmp.eq.s32.totalorder %s25, 0
      %p228 = por %p226, %p227
      %p229 = scmp.ne.s32.totalorder %s217, %s218
      %p230 = scmp.eq.s32.totalorder %s26, 3
      %p231 = por %p229, %p230
      %p233 = scmp.ne.s32.totalorder %s218, %s232
      %p234 = scmp.eq.s32.totalorder %s26, 0
      %p235 = por %p233, %p234
      %s237 = sadd.s32 %s236, 1
      %p240 = scmp.eq.s32.totalorder %s20, 3
      %p241 = scmp.ne.s32.totalorder %s236, %s238
      %p242 = scmp.eq.s32.totalorder %s20, 0
      %p243 = por %p241, %p242
      %p244 = scmp.ne.s32.totalorder %s236, %s238
      %p245 = scmp.eq.s32.totalorder %s25, 3
      %p246 = por %p244, %p245
      %p247 = scmp.ne.s32.totalorder %s238, %s239
      %p248 = scmp.eq.s32.totalorder %s25, 0
      %p249 = por %p247, %p248
      %p250 = scmp.ne.s32.totalorder %s238, %s239
      %p251 = scmp.eq.s32.totalorder %s26, 3
      %p252 = por %p250, %p251
      %p254 = scmp.ne.s32.totalorder %s239, %s253
      %p255 = scmp.eq.s32.totalorder %s26, 0
      %p256 = por %p254, %p255
      %s258 = sadd.s32 %s257, 1
      %p261 = scmp.eq.s32.totalorder %s20, 3
      %p262 = scmp.ne.s32.totalorder %s257, %s259
      %p263 = scmp.eq.s32.totalorder %s20, 0
      %p264 = por %p262, %p263
      %p265 = scmp.ne.s32.totalorder %s257, %s259
      %p266 = scmp.eq.s32.totalorder %s25, 3
      %p267 = por %p265, %p266
      %p268 = scmp.ne.s32.totalorder %s259, %s260
      %p269 = scmp.eq.s32.totalorder %s25, 0
      %p270 = por %p268, %p269
      %p271 = scmp.ne.s32.totalorder %s259, %s260
      %p272 = scmp.eq.s32.totalorder %s26, 3
      %p273 = por %p271, %p272
      %p275 = scmp.ne.s32.totalorder %s260, %s274
      %p276 = scmp.eq.s32.totalorder %s26, 0
      %p277 = por %p275, %p276
      %s278 = ssub.s32 %s27, %s39
      %s279 = ssub.s32 %s28, %s35
      %s280 = sor.u32 %s278, %s279
      %p281 = scmp.eq.s32.totalorder %s280, 0
      %s283 = sadd.s32 %s282, 1
      %s284 = scalar_select %p281, %s282, %s283
      %p287 = pneg %p281
      %p288 = scmp.eq.s32.totalorder %s20, 3
      %p289 = por %p287, %p288
      %p290 = scmp.ne.s32.totalorder %s282, %s285
      %p291 = scmp.eq.s32.totalorder %s20, 0
      %p292 = por %p290, %p291
      %p293 = scmp.ne.s32.totalorder %s282, %s285
      %p294 = scmp.eq.s32.totalorder %s25, 3
      %p295 = por %p293, %p294
      %p296 = scmp.ne.s32.totalorder %s285, %s286
      %p297 = scmp.eq.s32.totalorder %s25, 0
      %p298 = por %p296, %p297
      %p299 = scmp.ne.s32.totalorder %s285, %s286
      %p300 = scmp.eq.s32.totalorder %s26, 3
      %p301 = por %p299, %p300
      %p303 = scmp.ne.s32.totalorder %s286, %s302
      %p304 = scmp.eq.s32.totalorder %s26, 0
      %p305 = por %p303, %p304
      %p306 = scmp.le.s32.totalorder 1, %s20
      %p307 = scmp.lt.s32.totalorder %s20, 5
      %p308 = pnand %p306, %p307
      %p309 = pneg %p308
      // Predicated region
      $region9: #{tpu_custom_call.1} parent=5 // pred_check
        _
      $region10: #{tpu_custom_call.1} parent=5 // pred_check_branch
        %311 = sbr.rel (%p308) target = $region12
      $region11: #{tpu_custom_call.1} parent=5 // pred_region
        %s312 = ssub.s32 %s20, 1
        // Predicated region
        $region13: #{tpu_custom_call.1} parent=11 // pred_check
          %p313 = pneg %p81
        $region14: #{tpu_custom_call.1} parent=11 // pred_check_branch
          %315 = sbr.rel (%p313) target = $region16
        $region15: #{tpu_custom_call.1} parent=11 // pred_region
          _
        $region16: #{tpu_custom_call.1} parent=11 // pred_fallthru
          _
        // Predicated region
        $region17: #{tpu_custom_call.1} parent=11 // pred_check
          %p316 = pneg %p102
        $region18: #{tpu_custom_call.1} parent=11 // pred_check_branch
          %318 = sbr.rel (%p316) target = $region20
        $region19: #{tpu_custom_call.1} parent=11 // pred_region
          _
        $region20: #{tpu_custom_call.1} parent=11 // pred_fallthru
          _
        // Predicated region
        $region21: #{tpu_custom_call.1} parent=11 // pred_check
          %p319 = pneg %p123
        $region22: #{tpu_custom_call.1} parent=11 // pred_check_branch
          %321 = sbr.rel (%p319) target = $region24
        $region23: #{tpu_custom_call.1} parent=11 // pred_region
          _
        $region24: #{tpu_custom_call.1} parent=11 // pred_fallthru
          _
        // Predicated region
        $region25: #{tpu_custom_call.1} parent=11 // pred_check
          %p322 = pneg %p144
        $region26: #{tpu_custom_call.1} parent=11 // pred_check_branch
          %324 = sbr.rel (%p322) target = $region28
        $region27: #{tpu_custom_call.1} parent=11 // pred_region
          _
        $region28: #{tpu_custom_call.1} parent=11 // pred_fallthru
          _
        // Predicated region
        $region29: #{tpu_custom_call.1} parent=11 // pred_check
          %p325 = pneg %p165
        $region30: #{tpu_custom_call.1} parent=11 // pred_check_branch
          %327 = sbr.rel (%p325) target = $region32
        $region31: #{tpu_custom_call.1} parent=11 // pred_region
          _
        $region32: #{tpu_custom_call.1} parent=11 // pred_fallthru
          _
        // Predicated region
        $region33: #{tpu_custom_call.1} parent=11 // pred_check
          %p328 = pneg %p186
        $region34: #{tpu_custom_call.1} parent=11 // pred_check_branch
          %330 = sbr.rel (%p328) target = $region36
        $region35: #{tpu_custom_call.1} parent=11 // pred_region
          _
        $region36: #{tpu_custom_call.1} parent=11 // pred_fallthru
          _
        // Predicated region
        $region37: #{tpu_custom_call.1} parent=11 // pred_check
          %p331 = pneg %p207
        $region38: #{tpu_custom_call.1} parent=11 // pred_check_branch
          %333 = sbr.rel (%p331) target = $region40
        $region39: #{tpu_custom_call.1} parent=11 // pred_region
          _
        $region40: #{tpu_custom_call.1} parent=11 // pred_fallthru
          _
        // Predicated region
        $region41: #{tpu_custom_call.1} parent=11 // pred_check
          %p334 = pneg %p228
        $region42: #{tpu_custom_call.1} parent=11 // pred_check_branch
          %336 = sbr.rel (%p334) target = $region44
        $region43: #{tpu_custom_call.1} parent=11 // pred_region
          _
        $region44: #{tpu_custom_call.1} parent=11 // pred_fallthru
          _
        // Predicated region
        $region45: #{tpu_custom_call.1} parent=11 // pred_check
          %p337 = pneg %p249
        $region46: #{tpu_custom_call.1} parent=11 // pred_check_branch
          %339 = sbr.rel (%p337) target = $region48
        $region47: #{tpu_custom_call.1} parent=11 // pred_region
          _
        $region48: #{tpu_custom_call.1} parent=11 // pred_fallthru
          _
        // Predicated region
        $region49: #{tpu_custom_call.1} parent=11 // pred_check
          %p340 = pneg %p270
        $region50: #{tpu_custom_call.1} parent=11 // pred_check_branch
          %342 = sbr.rel (%p340) target = $region52
        $region51: #{tpu_custom_call.1} parent=11 // pred_region
          _
        $region52: #{tpu_custom_call.1} parent=11 // pred_fallthru
          _
      $region12: #{tpu_custom_call.1} parent=5 // pred_fallthru
        _
      %p343 = scmp.lt.s32.totalorder %s20, 4
      // Predicated region
      $region53: #{tpu_custom_call.1} parent=5 // pred_check
        %p344 = pneg %p343
      $region54: #{tpu_custom_call.1} parent=5 // pred_check_branch
        %346 = sbr.rel (%p344) target = $region56
      $region55: #{tpu_custom_call.1} parent=5 // pred_region
        // Predicated region
        $region57: #{tpu_custom_call.1} parent=55 // pred_check
          %p347 = pneg %p54
        $region58: #{tpu_custom_call.1} parent=55 // pred_check_branch
          %349 = sbr.rel (%p347) target = $region60
        $region59: #{tpu_custom_call.1} parent=55 // pred_region
          %p350 = scmp.lt.s32.totalorder %s27, 1
          %s351 = scalar_select %p350, %s27, 1
          %p352 = scmp.lt.s32.totalorder %s28, 1
          %s353 = scalar_select %p352, %s28, 1
          %s354 = smul.addr %s351, 2
          %s355 = sadd.s32 %s353, %s354
          %s356 = scalar_lea.vmem %s0, %s355
        $region60: #{tpu_custom_call.1} parent=55 // pred_fallthru
          _
      $region56: #{tpu_custom_call.1} parent=5 // pred_fallthru
        _
      %p357 = scmp.le.s32.totalorder 1, %s20
      %p358 = scmp.lt.s32.totalorder %s20, 5
      %p359 = pnand %p357, %p358
      %p360 = pneg %p359
      // Predicated region
      $region61: #{tpu_custom_call.1} parent=5 // pred_check
        _
      $region62: #{tpu_custom_call.1} parent=5 // pred_check_branch
        %362 = sbr.rel (%p359) target = $region64
      $region63: #{tpu_custom_call.1} parent=5 // pred_region
        %s363 = ssub.s32 %s20, 1
        %p364 = scmp.lt.s32.totalorder %s29, 1
        %s365 = scalar_select %p364, %s29, 1
        %p366 = scmp.lt.s32.totalorder %s30, 1
        %s367 = scalar_select %p366, %s30, 1
        %s368 = smul.addr %s365, 2
        %s369 = sadd.s32 %s367, %s368
        %s370 = scalar_lea.vmem %s0, %s369
        %p371 = pneg %p60
        %p372 = pneg %p57
        %p373 = pneg %p81
        %p374 = pneg %p78
        %p375 = pneg %p102
        %p376 = pneg %p99
        %p377 = pneg %p123
        %p378 = pneg %p120
        %p379 = pneg %p144
        %p380 = pneg %p141
        %p381 = pneg %p165
        %p382 = pneg %p162
        %p383 = pneg %p186
        %p384 = pneg %p183
        %p385 = pneg %p207
        %p386 = pneg %p204
        %p387 = pneg %p228
        %p388 = pneg %p225
        %p389 = pneg %p249
        %p390 = pneg %p246
        %p391 = pneg %p270
        %p392 = pneg %p267
        %p393 = pneg %p298
        %p394 = pneg %p295
        %s395 = sand.u32 %s285, 1
        %s396 = scalar_lea.sflag [#allocation5], %s395
        %s397 = sand.u32 %s285, 1
        %s398 = smul.addr %s397, 2
        %s399 = scalar_lea.vmem [#allocation4], %s398
        %p400 = scmp.lt.s32.totalorder %s29, 1
        %s401 = scalar_select %p400, %s29, 1
        %p402 = scmp.lt.s32.totalorder %s30, 1
        %s403 = scalar_select %p402, %s30, 1
        %s404 = smul.addr %s401, 2
        %s405 = sadd.s32 %s403, %s404
        %s406 = scalar_lea.vmem %s0, %s405
        %p407 = scmp.eq.s32.totalorder %s30, 0
        // Predicated region
        $region65: #{tpu_custom_call.1} parent=63 // pred_check
          %p408 = pneg %p407
        $region66: #{tpu_custom_call.1} parent=63 // pred_check_branch
          %410 = sbr.rel (%p408) target = $region68
        $region67: #{tpu_custom_call.1} parent=63 // pred_region
          %411 = vst [vmem:[#allocation3] sm:$0xff] 0.0
          %412 = vst [vmem:[#allocation3 + $0x8] sm:$0xff] 0.0
          %413 = vst [vmem:[#allocation3 + $0x10] sm:$0xff] 0.0
          %414 = vst [vmem:[#allocation3 + $0x18] sm:$0xff] 0.0
          %415 = vst [vmem:[#allocation3 + $0x20] sm:$0xff] 0.0
          %416 = vst [vmem:[#allocation3 + $0x28] sm:$0xff] 0.0
        $region68: #{tpu_custom_call.1} parent=63 // pred_fallthru
          _
        %v417 = vld [vmem:[%s406] sm:$0x1]
        %v418 = vld [vmem:[%s1] sm:$0xff]
        %v419 = vld [vmem:[%s2] sm:$0xff]
        %v420 = vld [vmem:[%s3] sm:$0xff]
        %v421 = vld [vmem:[%s3 + $0x8] sm:$0xff]
        %v422 = vld [vmem:[%s4] sm:$0xff]
        %v423 = vld [vmem:[%s4 + $0x8] sm:$0xff]
        %v424 = vld [vmem:[%s5] sm:$0x1f]
        %v425 = vld [vmem:[%s6] sm:$0x1f]
        %427 = vset.pattern.permute.xlu0 0
        %428 = vperm.xlu0 %427, %v418
        %v429 = vpop.permute.xlu0 %428
        %v432 = vlaneseq
        %v433 = vshrl.u32 %v432, 7
        %v434 = vsub.s32 0, %v433
        %v435 = vrot.slane %v417, %v434
        %v437 = vmul.f32 %v429, %v435
        %439 = vset.pattern.permute.xlu0 0
        %440 = vperm.xlu0 %439, %v419
        %v441 = vpop.permute.xlu0 %440
        %v443 = vadd.f32 %v437, %v441
        %v444 = vld [vmem:[#allocation3] sm:$0xff]
        %445 = vst [vmem:[#allocation2] sm:$0xff] %v444
        %446 = vst [vmem:[#allocation2 + $0x8] sm:$0xff] %v443
        %447 = vst [vmem:[#allocation3] sm:$0xff] %v443
        %v448 = vld [vmem:[#allocation2] sm:$0xff]
        %v449 = vld [vmem:[#allocation2 + $0x8] sm:$0xff]
        %452 = vrot.lane.b32.xlu0 %v420, 120
        %v453 = vpop.permute.xlu0 %452
        %454 = vrot.lane.b32.xlu0 %v421, 120
        %v455 = vpop.permute.xlu0 %454
        %458 = vrot.lane.b32.xlu0 %v448, 3
        %v459 = vpop.permute.xlu0 %458
        %460 = vrot.lane.b32.xlu0 %v449, 3
        %v461 = vpop.permute.xlu0 %460
        %vm462 = vcmask 23552
        %v463 = vsel %vm462, %v459, %v461
        %vm465 = vcmask 64512
        %v466 = vsel %vm465, %v453, 0
        %v468 = vsel %vm465, %v455, 0
        %470 = vmatprep.subr.mxu0 0.0
        %471 = vmatpush1.msra.mxu0 %v463
        %472 = vmatprep.subr.mxu0 0.0
        %473 = vmatpush1.msra.mxu0 0.0
        %474 = vmatprep.subr.mxu0 0.0
        %475 = vmatpush1.msra.mxu0 0.0
        %476 = vmatprep.subr.mxu0 0.0
        %477 = vmatpush1.msra.mxu0 0.0
        %478 = vmatprep.subr.mxu0 0.0
        %479 = vmatpush1.msra.mxu0 0.0
        %480 = vmatprep.subr.mxu0 0.0
        %481 = vmatpush1.msra.mxu0 0.0
        %482 = vmatprep.subr.mxu0 0.0
        %483 = vmatpush1.msra.mxu0 0.0
        %484 = vmatprep.subr.mxu0 0.0
        %485 = vmatpush1.msra.mxu0 0.0
        %486 = vmatprep.subr.mxu0 0.0
        %487 = vmatpush1.msra.mxu0 0.0
        %488 = vmatprep.subr.mxu0 0.0
        %489 = vmatpush1.msra.mxu0 0.0
        %490 = vmatprep.subr.mxu0 0.0
        %491 = vmatpush1.msra.mxu0 0.0
        %492 = vmatprep.subr.mxu0 0.0
        %493 = vmatpush1.msra.mxu0 0.0
        %494 = vmatprep.subr.mxu0 0.0
        %495 = vmatpush1.msra.mxu0 0.0
        %496 = vmatprep.subr.mxu0 0.0
        %497 = vmatpush1.msra.mxu0 0.0
        %498 = vmatprep.subr.mxu0 0.0
        %499 = vmatpush1.msra.mxu0 0.0
        %500 = vmatprep.subr.mxu0 0.0
        %501 = vmatpush1.msra.mxu0 0.0
        %502 = vmatprep.subr.mxu0 0.0
        %503 = vmatpush1.msra.mxu0 0.0
        %504 = vmatprep.subr.mxu0 0.0
        %505 = vmatpush1.msra.mxu0 0.0
        %506 = vmatprep.subr.mxu0 0.0
        %507 = vmatpush1.msra.mxu0 0.0
        %508 = vmatprep.subr.mxu0 0.0
        %509 = vmatpush1.msra.mxu0 0.0
        %510 = vmatprep.subr.mxu0 0.0
        %511 = vmatpush1.msra.mxu0 0.0
        %512 = vmatprep.subr.mxu0 0.0
        %513 = vmatpush1.msra.mxu0 0.0
        %514 = vmatprep.subr.mxu0 0.0
        %515 = vmatpush1.msra.mxu0 0.0
        %516 = vmatprep.subr.mxu0 0.0
        %517 = vmatpush1.msra.mxu0 0.0
        %518 = vmatprep.subr.mxu0 0.0
        %519 = vmatpush1.msra.mxu0 0.0
        %520 = vmatprep.subr.mxu0 0.0
        %521 = vmatpush1.msra.mxu0 0.0
        %522 = vmatprep.subr.mxu0 0.0
        %523 = vmatpush1.msra.mxu0 0.0
        %524 = vmatprep.subr.mxu0 0.0
        %525 = vmatpush1.msra.mxu0 0.0
        %526 = vmatprep.subr.mxu0 0.0
        %527 = vmatpush1.msra.mxu0 0.0
        %528 = vmatprep.subr.mxu0 0.0
        %529 = vmatpush1.msra.mxu0 0.0
        %530 = vmatprep.subr.mxu0 0.0
        %531 = vmatpush1.msra.mxu0 0.0
        %532 = vmatprep.subr.mxu0 0.0
        %533 = vmatpush1.msra.mxu0 0.0
        %534 = vmatprep.mubr.f32.mxu0 0.0
        %535 = vmatmul.mubr.f32.gmra.mrb[0].mxu0 %v466
        %v536 = vpop.f32.mrb[0].mxu0
        %v537 = vadd.f32 0.0, %v536
        %v538 = vpop.f32.mrb[0].mxu0
        %539 = vmatprep.mubr.f32.mxu0 0.0
        %540 = vmatmul.mubr.f32.gmra.mrb[0].mxu0 %v468
        %v541 = vpop.f32.mrb[0].mxu0
        %v542 = vadd.f32 0.0, %v541
        %v543 = vpop.f32.mrb[0].mxu0
        %544 = vdwg.mxu0
        %545 = vrot.lane.b32.xlu0 %v448, 4
        %v546 = vpop.permute.xlu0 %545
        %547 = vrot.lane.b32.xlu0 %v449, 4
        %v548 = vpop.permute.xlu0 %547
        %vm549 = vcmask 31744
        %v550 = vsel %vm549, %v546, %v548
        %v552 = vsel %vm465, %v420, 0
        %v554 = vsel %vm465, %v421, 0
        %556 = vmatprep.subr.mxu0 0.0
        %557 = vmatpush1.msra.mxu0 %v550
        %558 = vmatprep.subr.mxu0 0.0
        %559 = vmatpush1.msra.mxu0 0.0
        %560 = vmatprep.subr.mxu0 0.0
        %561 = vmatpush1.msra.mxu0 0.0
        %562 = vmatprep.subr.mxu0 0.0
        %563 = vmatpush1.msra.mxu0 0.0
        %564 = vmatprep.subr.mxu0 0.0
        %565 = vmatpush1.msra.mxu0 0.0
        %566 = vmatprep.subr.mxu0 0.0
        %567 = vmatpush1.msra.mxu0 0.0
        %568 = vmatprep.subr.mxu0 0.0
        %569 = vmatpush1.msra.mxu0 0.0
        %570 = vmatprep.subr.mxu0 0.0
        %571 = vmatpush1.msra.mxu0 0.0
        %572 = vmatprep.subr.mxu0 0.0
        %573 = vmatpush1.msra.mxu0 0.0
        %574 = vmatprep.subr.mxu0 0.0
        %575 = vmatpush1.msra.mxu0 0.0
        %576 = vmatprep.subr.mxu0 0.0
        %577 = vmatpush1.msra.mxu0 0.0
        %578 = vmatprep.subr.mxu0 0.0
        %579 = vmatpush1.msra.mxu0 0.0
        %580 = vmatprep.subr.mxu0 0.0
        %581 = vmatpush1.msra.mxu0 0.0
        %582 = vmatprep.subr.mxu0 0.0
        %583 = vmatpush1.msra.mxu0 0.0
        %584 = vmatprep.subr.mxu0 0.0
        %585 = vmatpush1.msra.mxu0 0.0
        %586 = vmatprep.subr.mxu0 0.0
        %587 = vmatpush1.msra.mxu0 0.0
        %588 = vmatprep.subr.mxu0 0.0
        %589 = vmatpush1.msra.mxu0 0.0
        %590 = vmatprep.subr.mxu0 0.0
        %591 = vmatpush1.msra.mxu0 0.0
        %592 = vmatprep.subr.mxu0 0.0
        %593 = vmatpush1.msra.mxu0 0.0
        %594 = vmatprep.subr.mxu0 0.0
        %595 = vmatpush1.msra.mxu0 0.0
        %596 = vmatprep.subr.mxu0 0.0
        %597 = vmatpush1.msra.mxu0 0.0
        %598 = vmatprep.subr.mxu0 0.0
        %599 = vmatpush1.msra.mxu0 0.0
        %600 = vmatprep.subr.mxu0 0.0
        %601 = vmatpush1.msra.mxu0 0.0
        %602 = vmatprep.subr.mxu0 0.0
        %603 = vmatpush1.msra.mxu0 0.0
        %604 = vmatprep.subr.mxu0 0.0
        %605 = vmatpush1.msra.mxu0 0.0
        %606 = vmatprep.subr.mxu0 0.0
        %607 = vmatpush1.msra.mxu0 0.0
        %608 = vmatprep.subr.mxu0 0.0
        %609 = vmatpush1.msra.mxu0 0.0
        %610 = vmatprep.subr.mxu0 0.0
        %611 = vmatpush1.msra.mxu0 0.0
        %612 = vmatprep.subr.mxu0 0.0
        %613 = vmatpush1.msra.mxu0 0.0
        %614 = vmatprep.subr.mxu0 0.0
        %615 = vmatpush1.msra.mxu0 0.0
        %616 = vmatprep.subr.mxu0 0.0
        %617 = vmatpush1.msra.mxu0 0.0
        %618 = vmatprep.subr.mxu0 0.0
        %619 = vmatpush1.msra.mxu0 0.0
        %620 = vmatprep.mubr.f32.mxu0 0.0
        %621 = vmatmul.mubr.f32.gmra.mrb[0].mxu0 %v552
        %v622 = vpop.f32.mrb[0].mxu0
        %v623 = vadd.f32 %v537, %v622
        %v624 = vpop.f32.mrb[0].mxu0
        %625 = vmatprep.mubr.f32.mxu0 0.0
        %626 = vmatmul.mubr.f32.gmra.mrb[0].mxu0 %v554
        %v627 = vpop.f32.mrb[0].mxu0
        %v628 = vadd.f32 %v542, %v627
        %v629 = vpop.f32.mrb[0].mxu0
        %630 = vdwg.mxu0
        %631 = vrot.lane.b32.xlu0 %v420, 112
        %v632 = vpop.permute.xlu0 %631
        %633 = vrot.lane.b32.xlu0 %v421, 112
        %v634 = vpop.permute.xlu0 %633
        %635 = vrot.lane.b32.xlu0 %v448, 2
        %v636 = vpop.permute.xlu0 %635
        %637 = vrot.lane.b32.xlu0 %v449, 2
        %v638 = vpop.permute.xlu0 %637
        %vm639 = vcmask 15360
        %v640 = vsel %vm639, %v636, %v638
        %v642 = vsel %vm465, %v632, 0
        %v644 = vsel %vm465, %v634, 0
        %646 = vmatprep.subr.mxu0 0.0
        %647 = vmatpush1.msra.mxu0 %v640
        %648 = vmatprep.subr.mxu0 0.0
        %649 = vmatpush1.msra.mxu0 0.0
        %650 = vmatprep.subr.mxu0 0.0
        %651 = vmatpush1.msra.mxu0 0.0
        %652 = vmatprep.subr.mxu0 0.0
        %653 = vmatpush1.msra.mxu0 0.0
        %654 = vmatprep.subr.mxu0 0.0
        %655 = vmatpush1.msra.mxu0 0.0
        %656 = vmatprep.subr.mxu0 0.0
        %657 = vmatpush1.msra.mxu0 0.0
        %658 = vmatprep.subr.mxu0 0.0
        %659 = vmatpush1.msra.mxu0 0.0
        %660 = vmatprep.subr.mxu0 0.0
        %661 = vmatpush1.msra.mxu0 0.0
        %662 = vmatprep.subr.mxu0 0.0
        %663 = vmatpush1.msra.mxu0 0.0
        %664 = vmatprep.subr.mxu0 0.0
        %665 = vmatpush1.msra.mxu0 0.0
        %666 = vmatprep.subr.mxu0 0.0
        %667 = vmatpush1.msra.mxu0 0.0
        %668 = vmatprep.subr.mxu0 0.0
        %669 = vmatpush1.msra.mxu0 0.0
        %670 = vmatprep.subr.mxu0 0.0
        %671 = vmatpush1.msra.mxu0 0.0
        %672 = vmatprep.subr.mxu0 0.0
        %673 = vmatpush1.msra.mxu0 0.0
        %674 = vmatprep.subr.mxu0 0.0
        %675 = vmatpush1.msra.mxu0 0.0
        %676 = vmatprep.subr.mxu0 0.0
        %677 = vmatpush1.msra.mxu0 0.0
        %678 = vmatprep.subr.mxu0 0.0
        %679 = vmatpush1.msra.mxu0 0.0
        %680 = vmatprep.subr.mxu0 0.0
        %681 = vmatpush1.msra.mxu0 0.0
        %682 = vmatprep.subr.mxu0 0.0
        %683 = vmatpush1.msra.mxu0 0.0
        %684 = vmatprep.subr.mxu0 0.0
        %685 = vmatpush1.msra.mxu0 0.0
        %686 = vmatprep.subr.mxu0 0.0
        %687 = vmatpush1.msra.mxu0 0.0
        %688 = vmatprep.subr.mxu0 0.0
        %689 = vmatpush1.msra.mxu0 0.0
        %690 = vmatprep.subr.mxu0 0.0
        %691 = vmatpush1.msra.mxu0 0.0
        %692 = vmatprep.subr.mxu0 0.0
        %693 = vmatpush1.msra.mxu0 0.0
        %694 = vmatprep.subr.mxu0 0.0
        %695 = vmatpush1.msra.mxu0 0.0
        %696 = vmatprep.subr.mxu0 0.0
        %697 = vmatpush1.msra.mxu0 0.0
        %698 = vmatprep.subr.mxu0 0.0
        %699 = vmatpush1.msra.mxu0 0.0
        %700 = vmatprep.subr.mxu0 0.0
        %701 = vmatpush1.msra.mxu0 0.0
        %702 = vmatprep.subr.mxu0 0.0
        %703 = vmatpush1.msra.mxu0 0.0
        %704 = vmatprep.subr.mxu0 0.0
        %705 = vmatpush1.msra.mxu0 0.0
        %706 = vmatprep.subr.mxu0 0.0
        %707 = vmatpush1.msra.mxu0 0.0
        %708 = vmatprep.subr.mxu0 0.0
        %709 = vmatpush1.msra.mxu0 0.0
        %710 = vmatprep.mubr.f32.mxu0 0.0
        %711 = vmatmul.mubr.f32.gmra.mrb[0].mxu0 %v642
        %v712 = vpop.f32.mrb[0].mxu0
        %v713 = vadd.f32 0.0, %v712
        %v714 = vpop.f32.mrb[0].mxu0
        %715 = vmatprep.mubr.f32.mxu0 0.0
        %716 = vmatmul.mubr.f32.gmra.mrb[0].mxu0 %v644
        %v717 = vpop.f32.mrb[0].mxu0
        %v718 = vadd.f32 0.0, %v717
        %v719 = vpop.f32.mrb[0].mxu0
        %720 = vdwg.mxu0
        %v721 = vadd.f32 %v623, %v713
        %v722 = vadd.f32 %v628, %v718
        %723 = vrot.lane.b32.xlu0 %v420, 104
        %v724 = vpop.permute.xlu0 %723
        %725 = vrot.lane.b32.xlu0 %v421, 104
        %v726 = vpop.permute.xlu0 %725
        %727 = vrot.lane.b32.xlu0 %v448, 1
        %v728 = vpop.permute.xlu0 %727
        %729 = vrot.lane.b32.xlu0 %v449, 1
        %v730 = vpop.permute.xlu0 %729
        %vm731 = vcmask 7168
        %v732 = vsel %vm731, %v728, %v730
        %v734 = vsel %vm465, %v724, 0
        %v736 = vsel %vm465, %v726, 0
        %738 = vmatprep.subr.mxu0 0.0
        %739 = vmatpush1.msra.mxu0 %v732
        %740 = vmatprep.subr.mxu0 0.0
        %741 = vmatpush1.msra.mxu0 0.0
        %742 = vmatprep.subr.mxu0 0.0
        %743 = vmatpush1.msra.mxu0 0.0
        %744 = vmatprep.subr.mxu0 0.0
        %745 = vmatpush1.msra.mxu0 0.0
        %746 = vmatprep.subr.mxu0 0.0
        %747 = vmatpush1.msra.mxu0 0.0
        %748 = vmatprep.subr.mxu0 0.0
        %749 = vmatpush1.msra.mxu0 0.0
        %750 = vmatprep.subr.mxu0 0.0
        %751 = vmatpush1.msra.mxu0 0.0
        %752 = vmatprep.subr.mxu0 0.0
        %753 = vmatpush1.msra.mxu0 0.0
        %754 = vmatprep.subr.mxu0 0.0
        %755 = vmatpush1.msra.mxu0 0.0
        %756 = vmatprep.subr.mxu0 0.0
        %757 = vmatpush1.msra.mxu0 0.0
        %758 = vmatprep.subr.mxu0 0.0
        %759 = vmatpush1.msra.mxu0 0.0
        %760 = vmatprep.subr.mxu0 0.0
        %761 = vmatpush1.msra.mxu0 0.0
        %762 = vmatprep.subr.mxu0 0.0
        %763 = vmatpush1.msra.mxu0 0.0
        %764 = vmatprep.subr.mxu0 0.0
        %765 = vmatpush1.msra.mxu0 0.0
        %766 = vmatprep.subr.mxu0 0.0
        %767 = vmatpush1.msra.mxu0 0.0
        %768 = vmatprep.subr.mxu0 0.0
        %769 = vmatpush1.msra.mxu0 0.0
        %770 = vmatprep.subr.mxu0 0.0
        %771 = vmatpush1.msra.mxu0 0.0
        %772 = vmatprep.subr.mxu0 0.0
        %773 = vmatpush1.msra.mxu0 0.0
        %774 = vmatprep.subr.mxu0 0.0
        %775 = vmatpush1.msra.mxu0 0.0
        %776 = vmatprep.subr.mxu0 0.0
        %777 = vmatpush1.msra.mxu0 0.0
        %778 = vmatprep.subr.mxu0 0.0
        %779 = vmatpush1.msra.mxu0 0.0
        %780 = vmatprep.subr.mxu0 0.0
        %781 = vmatpush1.msra.mxu0 0.0
        %782 = vmatprep.subr.mxu0 0.0
        %783 = vmatpush1.msra.mxu0 0.0
        %784 = vmatprep.subr.mxu0 0.0
        %785 = vmatpush1.msra.mxu0 0.0
        %786 = vmatprep.subr.mxu0 0.0
        %787 = vmatpush1.msra.mxu0 0.0
        %788 = vmatprep.subr.mxu0 0.0
        %789 = vmatpush1.msra.mxu0 0.0
        %790 = vmatprep.subr.mxu0 0.0
        %791 = vmatpush1.msra.mxu0 0.0
        %792 = vmatprep.subr.mxu0 0.0
        %793 = vmatpush1.msra.mxu0 0.0
        %794 = vmatprep.subr.mxu0 0.0
        %795 = vmatpush1.msra.mxu0 0.0
        %796 = vmatprep.subr.mxu0 0.0
        %797 = vmatpush1.msra.mxu0 0.0
        %798 = vmatprep.subr.mxu0 0.0
        %799 = vmatpush1.msra.mxu0 0.0
        %800 = vmatprep.subr.mxu0 0.0
        %801 = vmatpush1.msra.mxu0 0.0
        %802 = vmatprep.mubr.f32.mxu0 0.0
        %803 = vmatmul.mubr.f32.gmra.mrb[0].mxu0 %v734
        %v804 = vpop.f32.mrb[0].mxu0
        %v805 = vadd.f32 0.0, %v804
        %v806 = vpop.f32.mrb[0].mxu0
        %807 = vmatprep.mubr.f32.mxu0 0.0
        %808 = vmatmul.mubr.f32.gmra.mrb[0].mxu0 %v736
        %v809 = vpop.f32.mrb[0].mxu0
        %v810 = vadd.f32 0.0, %v809
        %v811 = vpop.f32.mrb[0].mxu0
        %812 = vdwg.mxu0
        %v813 = vadd.f32 %v721, %v805
        %v814 = vadd.f32 %v722, %v810
        %815 = vrot.lane.b32.xlu0 %v420, 96
        %v816 = vpop.permute.xlu0 %815
        %817 = vrot.lane.b32.xlu0 %v421, 96
        %v818 = vpop.permute.xlu0 %817
        %v819 = vsel %vm465, %v816, 0
        %v821 = vsel %vm465, %v818, 0
        %823 = vmatprep.subr.mxu0 0.0
        %824 = vmatpush1.msra.mxu0 %v449
        %825 = vmatprep.subr.mxu0 0.0
        %826 = vmatpush1.msra.mxu0 0.0
        %827 = vmatprep.subr.mxu0 0.0
        %828 = vmatpush1.msra.mxu0 0.0
        %829 = vmatprep.subr.mxu0 0.0
        %830 = vmatpush1.msra.mxu0 0.0
        %831 = vmatprep.subr.mxu0 0.0
        %832 = vmatpush1.msra.mxu0 0.0
        %833 = vmatprep.subr.mxu0 0.0
        %834 = vmatpush1.msra.mxu0 0.0
        %835 = vmatprep.subr.mxu0 0.0
        %836 = vmatpush1.msra.mxu0 0.0
        %837 = vmatprep.subr.mxu0 0.0
        %838 = vmatpush1.msra.mxu0 0.0
        %839 = vmatprep.subr.mxu0 0.0
        %840 = vmatpush1.msra.mxu0 0.0
        %841 = vmatprep.subr.mxu0 0.0
        %842 = vmatpush1.msra.mxu0 0.0
        %843 = vmatprep.subr.mxu0 0.0
        %844 = vmatpush1.msra.mxu0 0.0
        %845 = vmatprep.subr.mxu0 0.0
        %846 = vmatpush1.msra.mxu0 0.0
        %847 = vmatprep.subr.mxu0 0.0
        %848 = vmatpush1.msra.mxu0 0.0
        %849 = vmatprep.subr.mxu0 0.0
        %850 = vmatpush1.msra.mxu0 0.0
        %851 = vmatprep.subr.mxu0 0.0
        %852 = vmatpush1.msra.mxu0 0.0
        %853 = vmatprep.subr.mxu0 0.0
        %854 = vmatpush1.msra.mxu0 0.0
        %855 = vmatprep.subr.mxu0 0.0
        %856 = vmatpush1.msra.mxu0 0.0
        %857 = vmatprep.subr.mxu0 0.0
        %858 = vmatpush1.msra.mxu0 0.0
        %859 = vmatprep.subr.mxu0 0.0
        %860 = vmatpush1.msra.mxu0 0.0
        %861 = vmatprep.subr.mxu0 0.0
        %862 = vmatpush1.msra.mxu0 0.0
        %863 = vmatprep.subr.mxu0 0.0
        %864 = vmatpush1.msra.mxu0 0.0
        %865 = vmatprep.subr.mxu0 0.0
        %866 = vmatpush1.msra.mxu0 0.0
        %867 = vmatprep.subr.mxu0 0.0
        %868 = vmatpush1.msra.mxu0 0.0
        %869 = vmatprep.subr.mxu0 0.0
        %870 = vmatpush1.msra.mxu0 0.0
        %871 = vmatprep.subr.mxu0 0.0
        %872 = vmatpush1.msra.mxu0 0.0
        %873 = vmatprep.subr.mxu0 0.0
        %874 = vmatpush1.msra.mxu0 0.0
        %875 = vmatprep.subr.mxu0 0.0
        %876 = vmatpush1.msra.mxu0 0.0
        %877 = vmatprep.subr.mxu0 0.0
        %878 = vmatpush1.msra.mxu0 0.0
        %879 = vmatprep.subr.mxu0 0.0
        %880 = vmatpush1.msra.mxu0 0.0
        %881 = vmatprep.subr.mxu0 0.0
        %882 = vmatpush1.msra.mxu0 0.0
        %883 = vmatprep.subr.mxu0 0.0
        %884 = vmatpush1.msra.mxu0 0.0
        %885 = vmatprep.subr.mxu0 0.0
        %886 = vmatpush1.msra.mxu0 0.0
        %887 = vmatprep.mubr.f32.mxu0 0.0
        %888 = vmatmul.mubr.f32.gmra.mrb[0].mxu0 %v819
        %v889 = vpop.f32.mrb[0].mxu0
        %v890 = vadd.f32 0.0, %v889
        %v891 = vpop.f32.mrb[0].mxu0
        %892 = vmatprep.mubr.f32.mxu0 0.0
        %893 = vmatmul.mubr.f32.gmra.mrb[0].mxu0 %v821
        %v894 = vpop.f32.mrb[0].mxu0
        %v895 = vadd.f32 0.0, %v894
        %v896 = vpop.f32.mrb[0].mxu0
        %897 = vdwg.mxu0
        %v898 = vadd.f32 %v813, %v890
        %v899 = vadd.f32 %v814, %v895
        %901 = vset.pattern.permute.xlu0 0
        %902 = vperm.xlu0 %901, %v422
        %v903 = vpop.permute.xlu0 %902
        %906 = vset.pattern.permute.xlu0 0
        %907 = vperm.xlu0 %906, %v423
        %v908 = vpop.permute.xlu0 %907
        %v910 = vadd.f32 %v898, %v903
        %v911 = vadd.f32 %v899, %v908
        %v912 = vtanh.pop %v910
        %v913 = vxor.u32 %v911, 2147483648
        %v914 = vmul.f32 %v913, 1.442695
        %v915 = vpow.pop %v914
        %v916 = vadd.f32 %v915, 1.0
        %v917 = vrcp.pop %v916
        %v918 = vmul.f32 1.0, %v917
        %v919 = vmul.f32 %v912, %v918
        %921 = vset.pattern.permute.xlu0 0
        %922 = vperm.xlu0 %921, %v425
        %v923 = vpop.permute.xlu0 %922
        %v926 = vsel %vm465, %v424, 0
        %928 = vmatprep.subr.mxu0 0.0
        %929 = vmatpush1.msra.mxu0 %v919
        %930 = vmatprep.subr.mxu0 0.0
        %931 = vmatpush1.msra.mxu0 0.0
        %932 = vmatprep.subr.mxu0 0.0
        %933 = vmatpush1.msra.mxu0 0.0
        %934 = vmatprep.subr.mxu0 0.0
        %935 = vmatpush1.msra.mxu0 0.0
        %936 = vmatprep.subr.mxu0 0.0
        %937 = vmatpush1.msra.mxu0 0.0
        %938 = vmatprep.subr.mxu0 0.0
        %939 = vmatpush1.msra.mxu0 0.0
        %940 = vmatprep.subr.mxu0 0.0
        %941 = vmatpush1.msra.mxu0 0.0
        %942 = vmatprep.subr.mxu0 0.0
        %943 = vmatpush1.msra.mxu0 0.0
        %944 = vmatprep.subr.mxu0 0.0
        %945 = vmatpush1.msra.mxu0 0.0
        %946 = vmatprep.subr.mxu0 0.0
        %947 = vmatpush1.msra.mxu0 0.0
        %948 = vmatprep.subr.mxu0 0.0
        %949 = vmatpush1.msra.mxu0 0.0
        %950 = vmatprep.subr.mxu0 0.0
        %951 = vmatpush1.msra.mxu0 0.0
        %952 = vmatprep.subr.mxu0 0.0
        %953 = vmatpush1.msra.mxu0 0.0
        %954 = vmatprep.subr.mxu0 0.0
        %955 = vmatpush1.msra.mxu0 0.0
        %956 = vmatprep.subr.mxu0 0.0
        %957 = vmatpush1.msra.mxu0 0.0
        %958 = vmatprep.subr.mxu0 0.0
        %959 = vmatpush1.msra.mxu0 0.0
        %960 = vmatprep.subr.mxu0 0.0
        %961 = vmatpush1.msra.mxu0 0.0
        %962 = vmatprep.subr.mxu0 0.0
        %963 = vmatpush1.msra.mxu0 0.0
        %964 = vmatprep.subr.mxu0 0.0
        %965 = vmatpush1.msra.mxu0 0.0
        %966 = vmatprep.subr.mxu0 0.0
        %967 = vmatpush1.msra.mxu0 0.0
        %968 = vmatprep.subr.mxu0 0.0
        %969 = vmatpush1.msra.mxu0 0.0
        %970 = vmatprep.subr.mxu0 0.0
        %971 = vmatpush1.msra.mxu0 0.0
        %972 = vmatprep.subr.mxu0 0.0
        %973 = vmatpush1.msra.mxu0 0.0
        %974 = vmatprep.subr.mxu0 0.0
        %975 = vmatpush1.msra.mxu0 0.0
        %976 = vmatprep.subr.mxu0 0.0
        %977 = vmatpush1.msra.mxu0 0.0
        %978 = vmatprep.subr.mxu0 0.0
        %979 = vmatpush1.msra.mxu0 0.0
        %980 = vmatprep.subr.mxu0 0.0
        %981 = vmatpush1.msra.mxu0 0.0
        %982 = vmatprep.subr.mxu0 0.0
        %983 = vmatpush1.msra.mxu0 0.0
        %984 = vmatprep.subr.mxu0 0.0
        %985 = vmatpush1.msra.mxu0 0.0
        %986 = vmatprep.subr.mxu0 0.0
        %987 = vmatpush1.msra.mxu0 0.0
        %988 = vmatprep.subr.mxu0 0.0
        %989 = vmatpush1.msra.mxu0 0.0
        %990 = vmatprep.subr.mxu0 0.0
        %991 = vmatpush1.msra.mxu0 0.0
        %992 = vmatprep.mubr.f32.mxu0 0.0
        %993 = vmatmul.mubr.f32.gmra.mrb[0].mxu0 %v926
        %v994 = vpop.f32.mrb[0].mxu0
        %v995 = vadd.f32 %v923, %v994
        %v996 = vpop.f32.mrb[0].mxu0
        %997 = vdwg.mxu0
        %v998 = vadd.f32 %v995, 0.0
        %v999 = vadd.f32 %v995, %v435
        %s1000 = scalar_lea.vmem %s1, 8
        %v1001 = vld [vmem:[%s1000] sm:$0xff]
        %s1002 = scalar_lea.vmem %s2, 8
        %v1003 = vld [vmem:[%s1002] sm:$0xff]
        %s1004 = scalar_lea.vmem %s3, 16
        %v1005 = vld [vmem:[%s1004] sm:$0xff]
        %v1006 = vld [vmem:[%s1004 + $0x8] sm:$0xff]
        %s1007 = scalar_lea.vmem %s4, 16
        %v1008 = vld [vmem:[%s1007] sm:$0xff]
        %v1009 = vld [vmem:[%s1007 + $0x8] sm:$0xff]
        %s1010 = scalar_lea.vmem %s5, 8
        %v1011 = vld [vmem:[%s1010] sm:$0x1f]
        %s1012 = scalar_lea.vmem %s6, 8
        %v1013 = vld [vmem:[%s1012] sm:$0x1f]
        %1015 = vset.pattern.permute.xlu0 0
        %1016 = vperm.xlu0 %1015, %v1001
        %v1017 = vpop.permute.xlu0 %1016
        %v1019 = vlaneseq
        %v1020 = vshrl.u32 %v1019, 7
        %v1021 = vsub.s32 4, %v1020
        %v1022 = vrot.slane %v999, %v1021
        %v1023 = vmul.f32 %v1017, %v1022
        %1025 = vset.pattern.permute.xlu0 0
        %1026 = vperm.xlu0 %1025, %v1003
        %v1027 = vpop.permute.xlu0 %1026
        %v1029 = vadd.f32 %v1023, %v1027
        %s1030 = scalar_lea.vmem [#allocation3], 8
        %v1031 = vld [vmem:[%s1030] sm:$0xff]
        %1032 = vst [vmem:[#allocation2] sm:$0xff] %v1031
        %1033 = vst [vmem:[#allocation2 + $0x8] sm:$0xff] %v1029
        %1034 = vst [vmem:[%s1030] sm:$0xff] %v1029
        %v1035 = vld [vmem:[#allocation2] sm:$0xff]
        %v1036 = vld [vmem:[#allocation2 + $0x8] sm:$0xff]
        %1039 = vrot.lane.b32.xlu0 %v1005, 120
        %v1040 = vpop.permute.xlu0 %1039
        %1041 = vrot.lane.b32.xlu0 %v1006, 120
        %v1042 = vpop.permute.xlu0 %1041
        %1045 = vrot.lane.b32.xlu0 %v1035, 6
        %v1046 = vpop.permute.xlu0 %1045
        %1047 = vrot.lane.b32.xlu0 %v1036, 6
        %v1048 = vpop.permute.xlu0 %1047
        %vm1049 = vcmask 48128
        %v1050 = vsel %vm1049, %v1046, %v1048
        %v1052 = vsel %vm465, %v1040, 0
        %v1054 = vsel %vm465, %v1042, 0
        %1056 = vmatprep.subr.mxu0 0.0
        %1057 = vmatpush1.msra.mxu0 %v1050
        %1058 = vmatprep.subr.mxu0 0.0
        %1059 = vmatpush1.msra.mxu0 0.0
        %1060 = vmatprep.subr.mxu0 0.0
        %1061 = vmatpush1.msra.mxu0 0.0
        %1062 = vmatprep.subr.mxu0 0.0
        %1063 = vmatpush1.msra.mxu0 0.0
        %1064 = vmatprep.subr.mxu0 0.0
        %1065 = vmatpush1.msra.mxu0 0.0
        %1066 = vmatprep.subr.mxu0 0.0
        %1067 = vmatpush1.msra.mxu0 0.0
        %1068 = vmatprep.subr.mxu0 0.0
        %1069 = vmatpush1.msra.mxu0 0.0
        %1070 = vmatprep.subr.mxu0 0.0
        %1071 = vmatpush1.msra.mxu0 0.0
        %1072 = vmatprep.subr.mxu0 0.0
        %1073 = vmatpush1.msra.mxu0 0.0
        %1074 = vmatprep.subr.mxu0 0.0
        %1075 = vmatpush1.msra.mxu0 0.0
        %1076 = vmatprep.subr.mxu0 0.0
        %1077 = vmatpush1.msra.mxu0 0.0
        %1078 = vmatprep.subr.mxu0 0.0
        %1079 = vmatpush1.msra.mxu0 0.0
        %1080 = vmatprep.subr.mxu0 0.0
        %1081 = vmatpush1.msra.mxu0 0.0
        %1082 = vmatprep.subr.mxu0 0.0
        %1083 = vmatpush1.msra.mxu0 0.0
        %1084 = vmatprep.subr.mxu0 0.0
        %1085 = vmatpush1.msra.mxu0 0.0
        %1086 = vmatprep.subr.mxu0 0.0
        %1087 = vmatpush1.msra.mxu0 0.0
        %1088 = vmatprep.subr.mxu0 0.0
        %1089 = vmatpush1.msra.mxu0 0.0
        %1090 = vmatprep.subr.mxu0 0.0
        %1091 = vmatpush1.msra.mxu0 0.0
        %1092 = vmatprep.subr.mxu0 0.0
        %1093 = vmatpush1.msra.mxu0 0.0
        %1094 = vmatprep.subr.mxu0 0.0
        %1095 = vmatpush1.msra.mxu0 0.0
        %1096 = vmatprep.subr.mxu0 0.0
        %1097 = vmatpush1.msra.mxu0 0.0
        %1098 = vmatprep.subr.mxu0 0.0
        %1099 = vmatpush1.msra.mxu0 0.0
        %1100 = vmatprep.subr.mxu0 0.0
        %1101 = vmatpush1.msra.mxu0 0.0
        %1102 = vmatprep.subr.mxu0 0.0
        %1103 = vmatpush1.msra.mxu0 0.0
        %1104 = vmatprep.subr.mxu0 0.0
        %1105 = vmatpush1.msra.mxu0 0.0
        %1106 = vmatprep.subr.mxu0 0.0
        %1107 = vmatpush1.msra.mxu0 0.0
        %1108 = vmatprep.subr.mxu0 0.0
        %1109 = vmatpush1.msra.mxu0 0.0
        %1110 = vmatprep.subr.mxu0 0.0
        %1111 = vmatpush1.msra.mxu0 0.0
        %1112 = vmatprep.subr.mxu0 0.0
        %1113 = vmatpush1.msra.mxu0 0.0
        %1114 = vmatprep.subr.mxu0 0.0
        %1115 = vmatpush1.msra.mxu0 0.0
        %1116 = vmatprep.subr.mxu0 0.0
        %1117 = vmatpush1.msra.mxu0 0.0
        %1118 = vmatprep.subr.mxu0 0.0
        %1119 = vmatpush1.msra.mxu0 0.0
        %1120 = vmatprep.mubr.f32.mxu0 0.0
        %1121 = vmatmul.mubr.f32.gmra.mrb[0].mxu0 %v1052
        %v1122 = vpop.f32.mrb[0].mxu0
        %v1123 = vadd.f32 0.0, %v1122
        %v1124 = vpop.f32.mrb[0].mxu0
        %1125 = vmatprep.mubr.f32.mxu0 0.0
        %1126 = vmatmul.mubr.f32.gmra.mrb[0].mxu0 %v1054
        %v1127 = vpop.f32.mrb[0].mxu0
        %v1128 = vadd.f32 0.0, %v1127
        %v1129 = vpop.f32.mrb[0].mxu0
        %1130 = vdwg.mxu0
        %1131 = vrot.lane.b32.xlu0 %v1035, 8
        %v1132 = vpop.permute.xlu0 %1131
        %1133 = vrot.lane.b32.xlu0 %v1036, 8
        %v1134 = vpop.permute.xlu0 %1133
        %v1135 = vsel %vm465, %v1132, %v1134
        %v1137 = vsel %vm465, %v1005, 0
        %v1139 = vsel %vm465, %v1006, 0
        %1141 = vmatprep.subr.mxu0 0.0
        %1142 = vmatpush1.msra.mxu0 %v1135
        %1143 = vmatprep.subr.mxu0 0.0
        %1144 = vmatpush1.msra.mxu0 0.0
        %1145 = vmatprep.subr.mxu0 0.0
        %1146 = vmatpush1.msra.mxu0 0.0
        %1147 = vmatprep.subr.mxu0 0.0
        %1148 = vmatpush1.msra.mxu0 0.0
        %1149 = vmatprep.subr.mxu0 0.0
        %1150 = vmatpush1.msra.mxu0 0.0
        %1151 = vmatprep.subr.mxu0 0.0
        %1152 = vmatpush1.msra.mxu0 0.0
        %1153 = vmatprep.subr.mxu0 0.0
        %1154 = vmatpush1.msra.mxu0 0.0
        %1155 = vmatprep.subr.mxu0 0.0
        %1156 = vmatpush1.msra.mxu0 0.0
        %1157 = vmatprep.subr.mxu0 0.0
        %1158 = vmatpush1.msra.mxu0 0.0
        %1159 = vmatprep.subr.mxu0 0.0
        %1160 = vmatpush1.msra.mxu0 0.0
        %1161 = vmatprep.subr.mxu0 0.0
        %1162 = vmatpush1.msra.mxu0 0.0
        %1163 = vmatprep.subr.mxu0 0.0
        %1164 = vmatpush1.msra.mxu0 0.0
        %1165 = vmatprep.subr.mxu0 0.0
        %1166 = vmatpush1.msra.mxu0 0.0
        %1167 = vmatprep.subr.mxu0 0.0
        %1168 = vmatpush1.msra.mxu0 0.0
        %1169 = vmatprep.subr.mxu0 0.0
        %1170 = vmatpush1.msra.mxu0 0.0
        %1171 = vmatprep.subr.mxu0 0.0
        %1172 = vmatpush1.msra.mxu0 0.0
        %1173 = vmatprep.subr.mxu0 0.0
        %1174 = vmatpush1.msra.mxu0 0.0
        %1175 = vmatprep.subr.mxu0 0.0
        %1176 = vmatpush1.msra.mxu0 0.0
        %1177 = vmatprep.subr.mxu0 0.0
        %1178 = vmatpush1.msra.mxu0 0.0
        %1179 = vmatprep.subr.mxu0 0.0
        %1180 = vmatpush1.msra.mxu0 0.0
        %1181 = vmatprep.subr.mxu0 0.0
        %1182 = vmatpush1.msra.mxu0 0.0
        %1183 = vmatprep.subr.mxu0 0.0
        %1184 = vmatpush1.msra.mxu0 0.0
        %1185 = vmatprep.subr.mxu0 0.0
        %1186 = vmatpush1.msra.mxu0 0.0
        %1187 = vmatprep.subr.mxu0 0.0
        %1188 = vmatpush1.msra.mxu0 0.0
        %1189 = vmatprep.subr.mxu0 0.0
        %1190 = vmatpush1.msra.mxu0 0.0
        %1191 = vmatprep.subr.mxu0 0.0
        %1192 = vmatpush1.msra.mxu0 0.0
        %1193 = vmatprep.subr.mxu0 0.0
        %1194 = vmatpush1.msra.mxu0 0.0
        %1195 = vmatprep.subr.mxu0 0.0
        %1196 = vmatpush1.msra.mxu0 0.0
        %1197 = vmatprep.subr.mxu0 0.0
        %1198 = vmatpush1.msra.mxu0 0.0
        %1199 = vmatprep.subr.mxu0 0.0
        %1200 = vmatpush1.msra.mxu0 0.0
        %1201 = vmatprep.subr.mxu0 0.0
        %1202 = vmatpush1.msra.mxu0 0.0
        %1203 = vmatprep.subr.mxu0 0.0
        %1204 = vmatpush1.msra.mxu0 0.0
        %1205 = vmatprep.mubr.f32.mxu0 0.0
        %1206 = vmatmul.mubr.f32.gmra.mrb[0].mxu0 %v1137
        %v1207 = vpop.f32.mrb[0].mxu0
        %v1208 = vadd.f32 %v1123, %v1207
        %v1209 = vpop.f32.mrb[0].mxu0
        %1210 = vmatprep.mubr.f32.mxu0 0.0
        %1211 = vmatmul.mubr.f32.gmra.mrb[0].mxu0 %v1139
        %v1212 = vpop.f32.mrb[0].mxu0
        %v1213 = vadd.f32 %v1128, %v1212
        %v1214 = vpop.f32.mrb[0].mxu0
        %1215 = vdwg.mxu0
        %1216 = vrot.lane.b32.xlu0 %v1005, 112
        %v1217 = vpop.permute.xlu0 %1216
        %1218 = vrot.lane.b32.xlu0 %v1006, 112
        %v1219 = vpop.permute.xlu0 %1218
        %1220 = vrot.lane.b32.xlu0 %v1035, 4
        %v1221 = vpop.permute.xlu0 %1220
        %1222 = vrot.lane.b32.xlu0 %v1036, 4
        %v1223 = vpop.permute.xlu0 %1222
        %v1224 = vsel %vm549, %v1221, %v1223
        %v1226 = vsel %vm465, %v1217, 0
        %v1228 = vsel %vm465, %v1219, 0
        %1230 = vmatprep.subr.mxu0 0.0
        %1231 = vmatpush1.msra.mxu0 %v1224
        %1232 = vmatprep.subr.mxu0 0.0
        %1233 = vmatpush1.msra.mxu0 0.0
        %1234 = vmatprep.subr.mxu0 0.0
        %1235 = vmatpush1.msra.mxu0 0.0
        %1236 = vmatprep.subr.mxu0 0.0
        %1237 = vmatpush1.msra.mxu0 0.0
        %1238 = vmatprep.subr.mxu0 0.0
        %1239 = vmatpush1.msra.mxu0 0.0
        %1240 = vmatprep.subr.mxu0 0.0
        %1241 = vmatpush1.msra.mxu0 0.0
        %1242 = vmatprep.subr.mxu0 0.0
        %1243 = vmatpush1.msra.mxu0 0.0
        %1244 = vmatprep.subr.mxu0 0.0
        %1245 = vmatpush1.msra.mxu0 0.0
        %1246 = vmatprep.subr.mxu0 0.0
        %1247 = vmatpush1.msra.mxu0 0.0
        %1248 = vmatprep.subr.mxu0 0.0
        %1249 = vmatpush1.msra.mxu0 0.0
        %1250 = vmatprep.subr.mxu0 0.0
        %1251 = vmatpush1.msra.mxu0 0.0
        %1252 = vmatprep.subr.mxu0 0.0
        %1253 = vmatpush1.msra.mxu0 0.0
        %1254 = vmatprep.subr.mxu0 0.0
        %1255 = vmatpush1.msra.mxu0 0.0
        %1256 = vmatprep.subr.mxu0 0.0
        %1257 = vmatpush1.msra.mxu0 0.0
        %1258 = vmatprep.subr.mxu0 0.0
        %1259 = vmatpush1.msra.mxu0 0.0
        %1260 = vmatprep.subr.mxu0 0.0
        %1261 = vmatpush1.msra.mxu0 0.0
        %1262 = vmatprep.subr.mxu0 0.0
        %1263 = vmatpush1.msra.mxu0 0.0
        %1264 = vmatprep.subr.mxu0 0.0
        %1265 = vmatpush1.msra.mxu0 0.0
        %1266 = vmatprep.subr.mxu0 0.0
        %1267 = vmatpush1.msra.mxu0 0.0
        %1268 = vmatprep.subr.mxu0 0.0
        %1269 = vmatpush1.msra.mxu0 0.0
        %1270 = vmatprep.subr.mxu0 0.0
        %1271 = vmatpush1.msra.mxu0 0.0
        %1272 = vmatprep.subr.mxu0 0.0
        %1273 = vmatpush1.msra.mxu0 0.0
        %1274 = vmatprep.subr.mxu0 0.0
        %1275 = vmatpush1.msra.mxu0 0.0
        %1276 = vmatprep.subr.mxu0 0.0
        %1277 = vmatpush1.msra.mxu0 0.0
        %1278 = vmatprep.subr.mxu0 0.0
        %1279 = vmatpush1.msra.mxu0 0.0
        %1280 = vmatprep.subr.mxu0 0.0
        %1281 = vmatpush1.msra.mxu0 0.0
        %1282 = vmatprep.subr.mxu0 0.0
        %1283 = vmatpush1.msra.mxu0 0.0
        %1284 = vmatprep.subr.mxu0 0.0
        %1285 = vmatpush1.msra.mxu0 0.0
        %1286 = vmatprep.subr.mxu0 0.0
        %1287 = vmatpush1.msra.mxu0 0.0
        %1288 = vmatprep.subr.mxu0 0.0
        %1289 = vmatpush1.msra.mxu0 0.0
        %1290 = vmatprep.subr.mxu0 0.0
        %1291 = vmatpush1.msra.mxu0 0.0
        %1292 = vmatprep.subr.mxu0 0.0
        %1293 = vmatpush1.msra.mxu0 0.0
        %1294 = vmatprep.mubr.f32.mxu0 0.0
        %1295 = vmatmul.mubr.f32.gmra.mrb[0].mxu0 %v1226
        %v1296 = vpop.f32.mrb[0].mxu0
        %v1297 = vadd.f32 0.0, %v1296
        %v1298 = vpop.f32.mrb[0].mxu0
        %1299 = vmatprep.mubr.f32.mxu0 0.0
        %1300 = vmatmul.mubr.f32.gmra.mrb[0].mxu0 %v1228
        %v1301 = vpop.f32.mrb[0].mxu0
        %v1302 = vadd.f32 0.0, %v1301
        %v1303 = vpop.f32.mrb[0].mxu0
        %1304 = vdwg.mxu0
        %v1305 = vadd.f32 %v1208, %v1297
        %v1306 = vadd.f32 %v1213, %v1302
        %1307 = vrot.lane.b32.xlu0 %v1005, 104
        %v1308 = vpop.permute.xlu0 %1307
        %1309 = vrot.lane.b32.xlu0 %v1006, 104
        %v1310 = vpop.permute.xlu0 %1309
        %1311 = vrot.lane.b32.xlu0 %v1035, 2
        %v1312 = vpop.permute.xlu0 %1311
        %1313 = vrot.lane.b32.xlu0 %v1036, 2
        %v1314 = vpop.permute.xlu0 %1313
        %v1315 = vsel %vm639, %v1312, %v1314
        %v1317 = vsel %vm465, %v1308, 0
        %v1319 = vsel %vm465, %v1310, 0
        %1321 = vmatprep.subr.mxu0 0.0
        %1322 = vmatpush1.msra.mxu0 %v1315
        %1323 = vmatprep.subr.mxu0 0.0
        %1324 = vmatpush1.msra.mxu0 0.0
        %1325 = vmatprep.subr.mxu0 0.0
        %1326 = vmatpush1.msra.mxu0 0.0
        %1327 = vmatprep.subr.mxu0 0.0
        %1328 = vmatpush1.msra.mxu0 0.0
        %1329 = vmatprep.subr.mxu0 0.0
        %1330 = vmatpush1.msra.mxu0 0.0
        %1331 = vmatprep.subr.mxu0 0.0
        %1332 = vmatpush1.msra.mxu0 0.0
        %1333 = vmatprep.subr.mxu0 0.0
        %1334 = vmatpush1.msra.mxu0 0.0
        %1335 = vmatprep.subr.mxu0 0.0
        %1336 = vmatpush1.msra.mxu0 0.0
        %1337 = vmatprep.subr.mxu0 0.0
        %1338 = vmatpush1.msra.mxu0 0.0
        %1339 = vmatprep.subr.mxu0 0.0
        %1340 = vmatpush1.msra.mxu0 0.0
        %1341 = vmatprep.subr.mxu0 0.0
        %1342 = vmatpush1.msra.mxu0 0.0
        %1343 = vmatprep.subr.mxu0 0.0
        %1344 = vmatpush1.msra.mxu0 0.0
        %1345 = vmatprep.subr.mxu0 0.0
        %1346 = vmatpush1.msra.mxu0 0.0
        %1347 = vmatprep.subr.mxu0 0.0
        %1348 = vmatpush1.msra.mxu0 0.0
        %1349 = vmatprep.subr.mxu0 0.0
        %1350 = vmatpush1.msra.mxu0 0.0
        %1351 = vmatprep.subr.mxu0 0.0
        %1352 = vmatpush1.msra.mxu0 0.0
        %1353 = vmatprep.subr.mxu0 0.0
        %1354 = vmatpush1.msra.mxu0 0.0
        %1355 = vmatprep.subr.mxu0 0.0
        %1356 = vmatpush1.msra.mxu0 0.0
        %1357 = vmatprep.subr.mxu0 0.0
        %1358 = vmatpush1.msra.mxu0 0.0
        %1359 = vmatprep.subr.mxu0 0.0
        %1360 = vmatpush1.msra.mxu0 0.0
        %1361 = vmatprep.subr.mxu0 0.0
        %1362 = vmatpush1.msra.mxu0 0.0
        %1363 = vmatprep.subr.mxu0 0.0
        %1364 = vmatpush1.msra.mxu0 0.0
        %1365 = vmatprep.subr.mxu0 0.0
        %1366 = vmatpush1.msra.mxu0 0.0
        %1367 = vmatprep.subr.mxu0 0.0
        %1368 = vmatpush1.msra.mxu0 0.0
        %1369 = vmatprep.subr.mxu0 0.0
        %1370 = vmatpush1.msra.mxu0 0.0
        %1371 = vmatprep.subr.mxu0 0.0
        %1372 = vmatpush1.msra.mxu0 0.0
        %1373 = vmatprep.subr.mxu0 0.0
        %1374 = vmatpush1.msra.mxu0 0.0
        %1375 = vmatprep.subr.mxu0 0.0
        %1376 = vmatpush1.msra.mxu0 0.0
        %1377 = vmatprep.subr.mxu0 0.0
        %1378 = vmatpush1.msra.mxu0 0.0
        %1379 = vmatprep.subr.mxu0 0.0
        %1380 = vmatpush1.msra.mxu0 0.0
        %1381 = vmatprep.subr.mxu0 0.0
        %1382 = vmatpush1.msra.mxu0 0.0
        %1383 = vmatprep.subr.mxu0 0.0
        %1384 = vmatpush1.msra.mxu0 0.0
        %1385 = vmatprep.mubr.f32.mxu0 0.0
        %1386 = vmatmul.mubr.f32.gmra.mrb[0].mxu0 %v1317
        %v1387 = vpop.f32.mrb[0].mxu0
        %v1388 = vadd.f32 0.0, %v1387
        %v1389 = vpop.f32.mrb[0].mxu0
        %1390 = vmatprep.mubr.f32.mxu0 0.0
        %1391 = vmatmul.mubr.f32.gmra.mrb[0].mxu0 %v1319
        %v1392 = vpop.f32.mrb[0].mxu0
        %v1393 = vadd.f32 0.0, %v1392
        %v1394 = vpop.f32.mrb[0].mxu0
        %1395 = vdwg.mxu0
        %v1396 = vadd.f32 %v1305, %v1388
        %v1397 = vadd.f32 %v1306, %v1393
        %1398 = vrot.lane.b32.xlu0 %v1005, 96
        %v1399 = vpop.permute.xlu0 %1398
        %1400 = vrot.lane.b32.xlu0 %v1006, 96
        %v1401 = vpop.permute.xlu0 %1400
        %v1402 = vsel %vm465, %v1399, 0
        %v1404 = vsel %vm465, %v1401, 0
        %1406 = vmatprep.subr.mxu0 0.0
        %1407 = vmatpush1.msra.mxu0 %v1036
        %1408 = vmatprep.subr.mxu0 0.0
        %1409 = vmatpush1.msra.mxu0 0.0
        %1410 = vmatprep.subr.mxu0 0.0
        %1411 = vmatpush1.msra.mxu0 0.0
        %1412 = vmatprep.subr.mxu0 0.0
        %1413 = vmatpush1.msra.mxu0 0.0
        %1414 = vmatprep.subr.mxu0 0.0
        %1415 = vmatpush1.msra.mxu0 0.0
        %1416 = vmatprep.subr.mxu0 0.0
        %1417 = vmatpush1.msra.mxu0 0.0
        %1418 = vmatprep.subr.mxu0 0.0
        %1419 = vmatpush1.msra.mxu0 0.0
        %1420 = vmatprep.subr.mxu0 0.0
        %1421 = vmatpush1.msra.mxu0 0.0
        %1422 = vmatprep.subr.mxu0 0.0
        %1423 = vmatpush1.msra.mxu0 0.0
        %1424 = vmatprep.subr.mxu0 0.0
        %1425 = vmatpush1.msra.mxu0 0.0
        %1426 = vmatprep.subr.mxu0 0.0
        %1427 = vmatpush1.msra.mxu0 0.0
        %1428 = vmatprep.subr.mxu0 0.0
        %1429 = vmatpush1.msra.mxu0 0.0
        %1430 = vmatprep.subr.mxu0 0.0
        %1431 = vmatpush1.msra.mxu0 0.0
        %1432 = vmatprep.subr.mxu0 0.0
        %1433 = vmatpush1.msra.mxu0 0.0
        %1434 = vmatprep.subr.mxu0 0.0
        %1435 = vmatpush1.msra.mxu0 0.0
        %1436 = vmatprep.subr.mxu0 0.0
        %1437 = vmatpush1.msra.mxu0 0.0
        %1438 = vmatprep.subr.mxu0 0.0
        %1439 = vmatpush1.msra.mxu0 0.0
        %1440 = vmatprep.subr.mxu0 0.0
        %1441 = vmatpush1.msra.mxu0 0.0
        %1442 = vmatprep.subr.mxu0 0.0
        %1443 = vmatpush1.msra.mxu0 0.0
        %1444 = vmatprep.subr.mxu0 0.0
        %1445 = vmatpush1.msra.mxu0 0.0
        %1446 = vmatprep.subr.mxu0 0.0
        %1447 = vmatpush1.msra.mxu0 0.0
        %1448 = vmatprep.subr.mxu0 0.0
        %1449 = vmatpush1.msra.mxu0 0.0
        %1450 = vmatprep.subr.mxu0 0.0
        %1451 = vmatpush1.msra.mxu0 0.0
        %1452 = vmatprep.subr.mxu0 0.0
        %1453 = vmatpush1.msra.mxu0 0.0
        %1454 = vmatprep.subr.mxu0 0.0
        %1455 = vmatpush1.msra.mxu0 0.0
        %1456 = vmatprep.subr.mxu0 0.0
        %1457 = vmatpush1.msra.mxu0 0.0
        %1458 = vmatprep.subr.mxu0 0.0
        %1459 = vmatpush1.msra.mxu0 0.0
        %1460 = vmatprep.subr.mxu0 0.0
        %1461 = vmatpush1.msra.mxu0 0.0
        %1462 = vmatprep.subr.mxu0 0.0
        %1463 = vmatpush1.msra.mxu0 0.0
        %1464 = vmatprep.subr.mxu0 0.0
        %1465 = vmatpush1.msra.mxu0 0.0
        %1466 = vmatprep.subr.mxu0 0.0
        %1467 = vmatpush1.msra.mxu0 0.0
        %1468 = vmatprep.subr.mxu0 0.0
        %1469 = vmatpush1.msra.mxu0 0.0
        %1470 = vmatprep.mubr.f32.mxu0 0.0
        %1471 = vmatmul.mubr.f32.gmra.mrb[0].mxu0 %v1402
        %v1472 = vpop.f32.mrb[0].mxu0
        %v1473 = vadd.f32 0.0, %v1472
        %v1474 = vpop.f32.mrb[0].mxu0
        %1475 = vmatprep.mubr.f32.mxu0 0.0
        %1476 = vmatmul.mubr.f32.gmra.mrb[0].mxu0 %v1404
        %v1477 = vpop.f32.mrb[0].mxu0
        %v1478 = vadd.f32 0.0, %v1477
        %v1479 = vpop.f32.mrb[0].mxu0
        %1480 = vdwg.mxu0
        %v1481 = vadd.f32 %v1396, %v1473
        %v1482 = vadd.f32 %v1397, %v1478
        %1484 = vset.pattern.permute.xlu0 0
        %1485 = vperm.xlu0 %1484, %v1008
        %v1486 = vpop.permute.xlu0 %1485
        %1489 = vset.pattern.permute.xlu0 0
        %1490 = vperm.xlu0 %1489, %v1009
        %v1491 = vpop.permute.xlu0 %1490
        %v1493 = vadd.f32 %v1481, %v1486
        %v1494 = vadd.f32 %v1482, %v1491
        %v1495 = vtanh.pop %v1493
        %v1496 = vxor.u32 %v1494, 2147483648
        %v1497 = vmul.f32 %v1496, 1.442695
        %v1498 = vpow.pop %v1497
        %v1499 = vadd.f32 %v1498, 1.0
        %v1500 = vrcp.pop %v1499
        %v1501 = vmul.f32 1.0, %v1500
        %v1502 = vmul.f32 %v1495, %v1501
        %1504 = vset.pattern.permute.xlu0 0
        %1505 = vperm.xlu0 %1504, %v1013
        %v1506 = vpop.permute.xlu0 %1505
        %v1509 = vsel %vm465, %v1011, 0
        %1511 = vmatprep.subr.mxu0 0.0
        %1512 = vmatpush1.msra.mxu0 %v1502
        %1513 = vmatprep.subr.mxu0 0.0
        %1514 = vmatpush1.msra.mxu0 0.0
        %1515 = vmatprep.subr.mxu0 0.0
        %1516 = vmatpush1.msra.mxu0 0.0
        %1517 = vmatprep.subr.mxu0 0.0
        %1518 = vmatpush1.msra.mxu0 0.0
        %1519 = vmatprep.subr.mxu0 0.0
        %1520 = vmatpush1.msra.mxu0 0.0
        %1521 = vmatprep.subr.mxu0 0.0
        %1522 = vmatpush1.msra.mxu0 0.0
        %1523 = vmatprep.subr.mxu0 0.0
        %1524 = vmatpush1.msra.mxu0 0.0
        %1525 = vmatprep.subr.mxu0 0.0
        %1526 = vmatpush1.msra.mxu0 0.0
        %1527 = vmatprep.subr.mxu0 0.0
        %1528 = vmatpush1.msra.mxu0 0.0
        %1529 = vmatprep.subr.mxu0 0.0
        %1530 = vmatpush1.msra.mxu0 0.0
        %1531 = vmatprep.subr.mxu0 0.0
        %1532 = vmatpush1.msra.mxu0 0.0
        %1533 = vmatprep.subr.mxu0 0.0
        %1534 = vmatpush1.msra.mxu0 0.0
        %1535 = vmatprep.subr.mxu0 0.0
        %1536 = vmatpush1.msra.mxu0 0.0
        %1537 = vmatprep.subr.mxu0 0.0
        %1538 = vmatpush1.msra.mxu0 0.0
        %1539 = vmatprep.subr.mxu0 0.0
        %1540 = vmatpush1.msra.mxu0 0.0
        %1541 = vmatprep.subr.mxu0 0.0
        %1542 = vmatpush1.msra.mxu0 0.0
        %1543 = vmatprep.subr.mxu0 0.0
        %1544 = vmatpush1.msra.mxu0 0.0
        %1545 = vmatprep.subr.mxu0 0.0
        %1546 = vmatpush1.msra.mxu0 0.0
        %1547 = vmatprep.subr.mxu0 0.0
        %1548 = vmatpush1.msra.mxu0 0.0
        %1549 = vmatprep.subr.mxu0 0.0
        %1550 = vmatpush1.msra.mxu0 0.0
        %1551 = vmatprep.subr.mxu0 0.0
        %1552 = vmatpush1.msra.mxu0 0.0
        %1553 = vmatprep.subr.mxu0 0.0
        %1554 = vmatpush1.msra.mxu0 0.0
        %1555 = vmatprep.subr.mxu0 0.0
        %1556 = vmatpush1.msra.mxu0 0.0
        %1557 = vmatprep.subr.mxu0 0.0
        %1558 = vmatpush1.msra.mxu0 0.0
        %1559 = vmatprep.subr.mxu0 0.0
        %1560 = vmatpush1.msra.mxu0 0.0
        %1561 = vmatprep.subr.mxu0 0.0
        %1562 = vmatpush1.msra.mxu0 0.0
        %1563 = vmatprep.subr.mxu0 0.0
        %1564 = vmatpush1.msra.mxu0 0.0
        %1565 = vmatprep.subr.mxu0 0.0
        %1566 = vmatpush1.msra.mxu0 0.0
        %1567 = vmatprep.subr.mxu0 0.0
        %1568 = vmatpush1.msra.mxu0 0.0
        %1569 = vmatprep.subr.mxu0 0.0
        %1570 = vmatpush1.msra.mxu0 0.0
        %1571 = vmatprep.subr.mxu0 0.0
        %1572 = vmatpush1.msra.mxu0 0.0
        %1573 = vmatprep.subr.mxu0 0.0
        %1574 = vmatpush1.msra.mxu0 0.0
        %1575 = vmatprep.mubr.f32.mxu0 0.0
        %1576 = vmatmul.mubr.f32.gmra.mrb[0].mxu0 %v1509
        %v1577 = vpop.f32.mrb[0].mxu0
        %v1578 = vadd.f32 %v1506, %v1577
        %v1579 = vpop.f32.mrb[0].mxu0
        %1580 = vdwg.mxu0
        %v1581 = vadd.f32 %v998, %v1578
        %v1582 = vadd.f32 %v1578, %v999
        %s1583 = scalar_lea.vmem %s1, 16
        %v1584 = vld [vmem:[%s1583] sm:$0xff]
        %s1585 = scalar_lea.vmem %s2, 16
        %v1586 = vld [vmem:[%s1585] sm:$0xff]
        %s1587 = scalar_lea.vmem %s3, 32
        %v1588 = vld [vmem:[%s1587] sm:$0xff]
        %v1589 = vld [vmem:[%s1587 + $0x8] sm:$0xff]
        %s1590 = scalar_lea.vmem %s4, 32
        %v1591 = vld [vmem:[%s1590] sm:$0xff]
        %v1592 = vld [vmem:[%s1590 + $0x8] sm:$0xff]
        %s1593 = scalar_lea.vmem %s5, 16
        %v1594 = vld [vmem:[%s1593] sm:$0x1f]
        %s1595 = scalar_lea.vmem %s6, 16
        %v1596 = vld [vmem:[%s1595] sm:$0x1f]
        %1598 = vset.pattern.permute.xlu0 0
        %1599 = vperm.xlu0 %1598, %v1584
        %v1600 = vpop.permute.xlu0 %1599
        %v1602 = vlaneseq
        %v1603 = vshrl.u32 %v1602, 7
        %v1604 = vsub.s32 4, %v1603
        %v1605 = vrot.slane %v1582, %v1604
        %v1606 = vmul.f32 %v1600, %v1605
        %1608 = vset.pattern.permute.xlu0 0
        %1609 = vperm.xlu0 %1608, %v1586
        %v1610 = vpop.permute.xlu0 %1609
        %v1612 = vadd.f32 %v1606, %v1610
        %s1613 = scalar_lea.vmem [#allocation3], 16
        %v1614 = vld [vmem:[%s1613] sm:$0xff]
        %1615 = vst [vmem:[#allocation2] sm:$0xff] %v1614
        %1616 = vst [vmem:[#allocation2 + $0x8] sm:$0xff] %v1612
        %1617 = vst [vmem:[%s1613] sm:$0xff] %v1612
        %v1618 = vld [vmem:[#allocation2] sm:$0xff]
        %v1619 = vld [vmem:[#allocation2 + $0x8] sm:$0xff]
        %1622 = vrot.lane.b32.xlu0 %v1588, 120
        %v1623 = vpop.permute.xlu0 %1622
        %1624 = vrot.lane.b32.xlu0 %v1589, 120
        %v1625 = vpop.permute.xlu0 %1624
        %1628 = vrot.lane.b32.xlu0 %v1618, 12
        %v1629 = vpop.permute.xlu0 %1628
        %1630 = vrot.lane.b32.xlu0 %v1619, 12
        %v1631 = vpop.permute.xlu0 %1630
        %vm1632 = vcmask 97280
        %v1633 = vsel %vm1632, %v1629, %v1631
        %v1635 = vsel %vm465, %v1623, 0
        %v1637 = vsel %vm465, %v1625, 0
        %1639 = vmatprep.subr.mxu0 0.0
        %1640 = vmatpush1.msra.mxu0 %v1633
        %1641 = vmatprep.subr.mxu0 0.0
        %1642 = vmatpush1.msra.mxu0 0.0
        %1643 = vmatprep.subr.mxu0 0.0
        %1644 = vmatpush1.msra.mxu0 0.0
        %1645 = vmatprep.subr.mxu0 0.0
        %1646 = vmatpush1.msra.mxu0 0.0
        %1647 = vmatprep.subr.mxu0 0.0
        %1648 = vmatpush1.msra.mxu0 0.0
        %1649 = vmatprep.subr.mxu0 0.0
        %1650 = vmatpush1.msra.mxu0 0.0
        %1651 = vmatprep.subr.mxu0 0.0
        %1652 = vmatpush1.msra.mxu0 0.0
        %1653 = vmatprep.subr.mxu0 0.0
        %1654 = vmatpush1.msra.mxu0 0.0
        %1655 = vmatprep.subr.mxu0 0.0
        %1656 = vmatpush1.msra.mxu0 0.0
        %1657 = vmatprep.subr.mxu0 0.0
        %1658 = vmatpush1.msra.mxu0 0.0
        %1659 = vmatprep.subr.mxu0 0.0
        %1660 = vmatpush1.msra.mxu0 0.0
        %1661 = vmatprep.subr.mxu0 0.0
        %1662 = vmatpush1.msra.mxu0 0.0
        %1663 = vmatprep.subr.mxu0 0.0
        %1664 = vmatpush1.msra.mxu0 0.0
        %1665 = vmatprep.subr.mxu0 0.0
        %1666 = vmatpush1.msra.mxu0 0.0
        %1667 = vmatprep.subr.mxu0 0.0
        %1668 = vmatpush1.msra.mxu0 0.0
        %1669 = vmatprep.subr.mxu0 0.0
        %1670 = vmatpush1.msra.mxu0 0.0
        %1671 = vmatprep.subr.mxu0 0.0
        %1672 = vmatpush1.msra.mxu0 0.0
        %1673 = vmatprep.subr.mxu0 0.0
        %1674 = vmatpush1.msra.mxu0 0.0
        %1675 = vmatprep.subr.mxu0 0.0
        %1676 = vmatpush1.msra.mxu0 0.0
        %1677 = vmatprep.subr.mxu0 0.0
        %1678 = vmatpush1.msra.mxu0 0.0
        %1679 = vmatprep.subr.mxu0 0.0
        %1680 = vmatpush1.msra.mxu0 0.0
        %1681 = vmatprep.subr.mxu0 0.0
        %1682 = vmatpush1.msra.mxu0 0.0
        %1683 = vmatprep.subr.mxu0 0.0
        %1684 = vmatpush1.msra.mxu0 0.0
        %1685 = vmatprep.subr.mxu0 0.0
        %1686 = vmatpush1.msra.mxu0 0.0
        %1687 = vmatprep.subr.mxu0 0.0
        %1688 = vmatpush1.msra.mxu0 0.0
        %1689 = vmatprep.subr.mxu0 0.0
        %1690 = vmatpush1.msra.mxu0 0.0
        %1691 = vmatprep.subr.mxu0 0.0
        %1692 = vmatpush1.msra.mxu0 0.0
        %1693 = vmatprep.subr.mxu0 0.0
        %1694 = vmatpush1.msra.mxu0 0.0
        %1695 = vmatprep.subr.mxu0 0.0
        %1696 = vmatpush1.msra.mxu0 0.0
        %1697 = vmatprep.subr.mxu0 0.0
        %1698 = vmatpush1.msra.mxu0 0.0
        %1699 = vmatprep.subr.mxu0 0.0
        %1700 = vmatpush1.msra.mxu0 0.0
        %1701 = vmatprep.subr.mxu0 0.0
        %1702 = vmatpush1.msra.mxu0 0.0
        %1703 = vmatprep.mubr.f32.mxu0 0.0
        %1704 = vmatmul.mubr.f32.gmra.mrb[0].mxu0 %v1635
        %v1705 = vpop.f32.mrb[0].mxu0
        %v1706 = vadd.f32 0.0, %v1705
        %v1707 = vpop.f32.mrb[0].mxu0
        %1708 = vmatprep.mubr.f32.mxu0 0.0
        %1709 = vmatmul.mubr.f32.gmra.mrb[0].mxu0 %v1637
        %v1710 = vpop.f32.mrb[0].mxu0
        %v1711 = vadd.f32 0.0, %v1710
        %v1712 = vpop.f32.mrb[0].mxu0
        %1713 = vdwg.mxu0
        %1714 = vrot.lane.b32.xlu0 %v1618, 16
        %v1715 = vpop.permute.xlu0 %1714
        %1716 = vrot.lane.b32.xlu0 %v1619, 16
        %v1717 = vpop.permute.xlu0 %1716
        %vm1718 = vcmask 130048
        %v1719 = vsel %vm1718, %v1715, %v1717
        %v1721 = vsel %vm465, %v1588, 0
        %v1723 = vsel %vm465, %v1589, 0
        %1725 = vmatprep.subr.mxu0 0.0
        %1726 = vmatpush1.msra.mxu0 %v1719
        %1727 = vmatprep.subr.mxu0 0.0
        %1728 = vmatpush1.msra.mxu0 0.0
        %1729 = vmatprep.subr.mxu0 0.0
        %1730 = vmatpush1.msra.mxu0 0.0
        %1731 = vmatprep.subr.mxu0 0.0
        %1732 = vmatpush1.msra.mxu0 0.0
        %1733 = vmatprep.subr.mxu0 0.0
        %1734 = vmatpush1.msra.mxu0 0.0
        %1735 = vmatprep.subr.mxu0 0.0
        %1736 = vmatpush1.msra.mxu0 0.0
        %1737 = vmatprep.subr.mxu0 0.0
        %1738 = vmatpush1.msra.mxu0 0.0
        %1739 = vmatprep.subr.mxu0 0.0
        %1740 = vmatpush1.msra.mxu0 0.0
        %1741 = vmatprep.subr.mxu0 0.0
        %1742 = vmatpush1.msra.mxu0 0.0
        %1743 = vmatprep.subr.mxu0 0.0
        %1744 = vmatpush1.msra.mxu0 0.0
        %1745 = vmatprep.subr.mxu0 0.0
        %1746 = vmatpush1.msra.mxu0 0.0
        %1747 = vmatprep.subr.mxu0 0.0
        %1748 = vmatpush1.msra.mxu0 0.0
        %1749 = vmatprep.subr.mxu0 0.0
        %1750 = vmatpush1.msra.mxu0 0.0
        %1751 = vmatprep.subr.mxu0 0.0
        %1752 = vmatpush1.msra.mxu0 0.0
        %1753 = vmatprep.subr.mxu0 0.0
        %1754 = vmatpush1.msra.mxu0 0.0
        %1755 = vmatprep.subr.mxu0 0.0
        %1756 = vmatpush1.msra.mxu0 0.0
        %1757 = vmatprep.subr.mxu0 0.0
        %1758 = vmatpush1.msra.mxu0 0.0
        %1759 = vmatprep.subr.mxu0 0.0
        %1760 = vmatpush1.msra.mxu0 0.0
        %1761 = vmatprep.subr.mxu0 0.0
        %1762 = vmatpush1.msra.mxu0 0.0
        %1763 = vmatprep.subr.mxu0 0.0
        %1764 = vmatpush1.msra.mxu0 0.0
        %1765 = vmatprep.subr.mxu0 0.0
        %1766 = vmatpush1.msra.mxu0 0.0
        %1767 = vmatprep.subr.mxu0 0.0
        %1768 = vmatpush1.msra.mxu0 0.0
        %1769 = vmatprep.subr.mxu0 0.0
        %1770 = vmatpush1.msra.mxu0 0.0
        %1771 = vmatprep.subr.mxu0 0.0
        %1772 = vmatpush1.msra.mxu0 0.0
        %1773 = vmatprep.subr.mxu0 0.0
        %1774 = vmatpush1.msra.mxu0 0.0
        %1775 = vmatprep.subr.mxu0 0.0
        %1776 = vmatpush1.msra.mxu0 0.0
        %1777 = vmatprep.subr.mxu0 0.0
        %1778 = vmatpush1.msra.mxu0 0.0
        %1779 = vmatprep.subr.mxu0 0.0
        %1780 = vmatpush1.msra.mxu0 0.0
        %1781 = vmatprep.subr.mxu0 0.0
        %1782 = vmatpush1.msra.mxu0 0.0
        %1783 = vmatprep.subr.mxu0 0.0
        %1784 = vmatpush1.msra.mxu0 0.0
        %1785 = vmatprep.subr.mxu0 0.0
        %1786 = vmatpush1.msra.mxu0 0.0
        %1787 = vmatprep.subr.mxu0 0.0
        %1788 = vmatpush1.msra.mxu0 0.0
        %1789 = vmatprep.mubr.f32.mxu0 0.0
        %1790 = vmatmul.mubr.f32.gmra.mrb[0].mxu0 %v1721
        %v1791 = vpop.f32.mrb[0].mxu0
        %v1792 = vadd.f32 %v1706, %v1791
        %v1793 = vpop.f32.mrb[0].mxu0
        %1794 = vmatprep.mubr.f32.mxu0 0.0
        %1795 = vmatmul.mubr.f32.gmra.mrb[0].mxu0 %v1723
        %v1796 = vpop.f32.mrb[0].mxu0
        %v1797 = vadd.f32 %v1711, %v1796
        %v1798 = vpop.f32.mrb[0].mxu0
        %1799 = vdwg.mxu0
        %1800 = vrot.lane.b32.xlu0 %v1588, 112
        %v1801 = vpop.permute.xlu0 %1800
        %1802 = vrot.lane.b32.xlu0 %v1589, 112
        %v1803 = vpop.permute.xlu0 %1802
        %1804 = vrot.lane.b32.xlu0 %v1618, 8
        %v1805 = vpop.permute.xlu0 %1804
        %1806 = vrot.lane.b32.xlu0 %v1619, 8
        %v1807 = vpop.permute.xlu0 %1806
        %v1808 = vsel %vm465, %v1805, %v1807
        %v1810 = vsel %vm465, %v1801, 0
        %v1812 = vsel %vm465, %v1803, 0
        %1814 = vmatprep.subr.mxu0 0.0
        %1815 = vmatpush1.msra.mxu0 %v1808
        %1816 = vmatprep.subr.mxu0 0.0
        %1817 = vmatpush1.msra.mxu0 0.0
        %1818 = vmatprep.subr.mxu0 0.0
        %1819 = vmatpush1.msra.mxu0 0.0
        %1820 = vmatprep.subr.mxu0 0.0
        %1821 = vmatpush1.msra.mxu0 0.0
        %1822 = vmatprep.subr.mxu0 0.0
        %1823 = vmatpush1.msra.mxu0 0.0
        %1824 = vmatprep.subr.mxu0 0.0
        %1825 = vmatpush1.msra.mxu0 0.0
        %1826 = vmatprep.subr.mxu0 0.0
        %1827 = vmatpush1.msra.mxu0 0.0
        %1828 = vmatprep.subr.mxu0 0.0
        %1829 = vmatpush1.msra.mxu0 0.0
        %1830 = vmatprep.subr.mxu0 0.0
        %1831 = vmatpush1.msra.mxu0 0.0
        %1832 = vmatprep.subr.mxu0 0.0
        %1833 = vmatpush1.msra.mxu0 0.0
        %1834 = vmatprep.subr.mxu0 0.0
        %1835 = vmatpush1.msra.mxu0 0.0
        %1836 = vmatprep.subr.mxu0 0.0
        %1837 = vmatpush1.msra.mxu0 0.0
        %1838 = vmatprep.subr.mxu0 0.0
        %1839 = vmatpush1.msra.mxu0 0.0
        %1840 = vmatprep.subr.mxu0 0.0
        %1841 = vmatpush1.msra.mxu0 0.0
        %1842 = vmatprep.subr.mxu0 0.0
        %1843 = vmatpush1.msra.mxu0 0.0
        %1844 = vmatprep.subr.mxu0 0.0
        %1845 = vmatpush1.msra.mxu0 0.0
        %1846 = vmatprep.subr.mxu0 0.0
        %1847 = vmatpush1.msra.mxu0 0.0
        %1848 = vmatprep.subr.mxu0 0.0
        %1849 = vmatpush1.msra.mxu0 0.0
        %1850 = vmatprep.subr.mxu0 0.0
        %1851 = vmatpush1.msra.mxu0 0.0
        %1852 = vmatprep.subr.mxu0 0.0
        %1853 = vmatpush1.msra.mxu0 0.0
        %1854 = vmatprep.subr.mxu0 0.0
        %1855 = vmatpush1.msra.mxu0 0.0
        %1856 = vmatprep.subr.mxu0 0.0
        %1857 = vmatpush1.msra.mxu0 0.0
        %1858 = vmatprep.subr.mxu0 0.0
        %1859 = vmatpush1.msra.mxu0 0.0
        %1860 = vmatprep.subr.mxu0 0.0
        %1861 = vmatpush1.msra.mxu0 0.0
        %1862 = vmatprep.subr.mxu0 0.0
        %1863 = vmatpush1.msra.mxu0 0.0
        %1864 = vmatprep.subr.mxu0 0.0
        %1865 = vmatpush1.msra.mxu0 0.0
        %1866 = vmatprep.subr.mxu0 0.0
        %1867 = vmatpush1.msra.mxu0 0.0
        %1868 = vmatprep.subr.mxu0 0.0
        %1869 = vmatpush1.msra.mxu0 0.0
        %1870 = vmatprep.subr.mxu0 0.0
        %1871 = vmatpush1.msra.mxu0 0.0
        %1872 = vmatprep.subr.mxu0 0.0
        %1873 = vmatpush1.msra.mxu0 0.0
        %1874 = vmatprep.subr.mxu0 0.0
        %1875 = vmatpush1.msra.mxu0 0.0
        %1876 = vmatprep.subr.mxu0 0.0
        %1877 = vmatpush1.msra.mxu0 0.0
        %1878 = vmatprep.mubr.f32.mxu0 0.0
        %1879 = vmatmul.mubr.f32.gmra.mrb[0].mxu0 %v1810
        %v1880 = vpop.f32.mrb[0].mxu0
        %v1881 = vadd.f32 0.0, %v1880
        %v1882 = vpop.f32.mrb[0].mxu0
        %1883 = vmatprep.mubr.f32.mxu0 0.0
        %1884 = vmatmul.mubr.f32.gmra.mrb[0].mxu0 %v1812
        %v1885 = vpop.f32.mrb[0].mxu0
        %v1886 = vadd.f32 0.0, %v1885
        %v1887 = vpop.f32.mrb[0].mxu0
        %1888 = vdwg.mxu0
        %v1889 = vadd.f32 %v1792, %v1881
        %v1890 = vadd.f32 %v1797, %v1886
        %1891 = vrot.lane.b32.xlu0 %v1588, 104
        %v1892 = vpop.permute.xlu0 %1891
        %1893 = vrot.lane.b32.xlu0 %v1589, 104
        %v1894 = vpop.permute.xlu0 %1893
        %1895 = vrot.lane.b32.xlu0 %v1618, 4
        %v1896 = vpop.permute.xlu0 %1895
        %1897 = vrot.lane.b32.xlu0 %v1619, 4
        %v1898 = vpop.permute.xlu0 %1897
        %v1899 = vsel %vm549, %v1896, %v1898
        %v1901 = vsel %vm465, %v1892, 0
        %v1903 = vsel %vm465, %v1894, 0
        %1905 = vmatprep.subr.mxu0 0.0
        %1906 = vmatpush1.msra.mxu0 %v1899
        %1907 = vmatprep.subr.mxu0 0.0
        %1908 = vmatpush1.msra.mxu0 0.0
        %1909 = vmatprep.subr.mxu0 0.0
        %1910 = vmatpush1.msra.mxu0 0.0
        %1911 = vmatprep.subr.mxu0 0.0
        %1912 = vmatpush1.msra.mxu0 0.0
        %1913 = vmatprep.subr.mxu0 0.0
        %1914 = vmatpush1.msra.mxu0 0.0
        %1915 = vmatprep.subr.mxu0 0.0
        %1916 = vmatpush1.msra.mxu0 0.0
        %1917 = vmatprep.subr.mxu0 0.0
        %1918 = vmatpush1.msra.mxu0 0.0
        %1919 = vmatprep.subr.mxu0 0.0
        %1920 = vmatpush1.msra.mxu0 0.0
        %1921 = vmatprep.subr.mxu0 0.0
        %1922 = vmatpush1.msra.mxu0 0.0
        %1923 = vmatprep.subr.mxu0 0.0
        %1924 = vmatpush1.msra.mxu0 0.0
        %1925 = vmatprep.subr.mxu0 0.0
        %1926 = vmatpush1.msra.mxu0 0.0
        %1927 = vmatprep.subr.mxu0 0.0
        %1928 = vmatpush1.msra.mxu0 0.0
        %1929 = vmatprep.subr.mxu0 0.0
        %1930 = vmatpush1.msra.mxu0 0.0
        %1931 = vmatprep.subr.mxu0 0.0
        %1932 = vmatpush1.msra.mxu0 0.0
        %1933 = vmatprep.subr.mxu0 0.0
        %1934 = vmatpush1.msra.mxu0 0.0
        %1935 = vmatprep.subr.mxu0 0.0
        %1936 = vmatpush1.msra.mxu0 0.0
        %1937 = vmatprep.subr.mxu0 0.0
        %1938 = vmatpush1.msra.mxu0 0.0
        %1939 = vmatprep.subr.mxu0 0.0
        %1940 = vmatpush1.msra.mxu0 0.0
        %1941 = vmatprep.subr.mxu0 0.0
        %1942 = vmatpush1.msra.mxu0 0.0
        %1943 = vmatprep.subr.mxu0 0.0
        %1944 = vmatpush1.msra.mxu0 0.0
        %1945 = vmatprep.subr.mxu0 0.0
        %1946 = vmatpush1.msra.mxu0 0.0
        %1947 = vmatprep.subr.mxu0 0.0
        %1948 = vmatpush1.msra.mxu0 0.0
        %1949 = vmatprep.subr.mxu0 0.0
        %1950 = vmatpush1.msra.mxu0 0.0
        %1951 = vmatprep.subr.mxu0 0.0
        %1952 = vmatpush1.msra.mxu0 0.0
        %1953 = vmatprep.subr.mxu0 0.0
        %1954 = vmatpush1.msra.mxu0 0.0
        %1955 = vmatprep.subr.mxu0 0.0
        %1956 = vmatpush1.msra.mxu0 0.0
        %1957 = vmatprep.subr.mxu0 0.0
        %1958 = vmatpush1.msra.mxu0 0.0
        %1959 = vmatprep.subr.mxu0 0.0
        %1960 = vmatpush1.msra.mxu0 0.0
        %1961 = vmatprep.subr.mxu0 0.0
        %1962 = vmatpush1.msra.mxu0 0.0
        %1963 = vmatprep.subr.mxu0 0.0
        %1964 = vmatpush1.msra.mxu0 0.0
        %1965 = vmatprep.subr.mxu0 0.0
        %1966 = vmatpush1.msra.mxu0 0.0
        %1967 = vmatprep.subr.mxu0 0.0
        %1968 = vmatpush1.msra.mxu0 0.0
        %1969 = vmatprep.mubr.f32.mxu0 0.0
        %1970 = vmatmul.mubr.f32.gmra.mrb[0].mxu0 %v1901
        %v1971 = vpop.f32.mrb[0].mxu0
        %v1972 = vadd.f32 0.0, %v1971
        %v1973 = vpop.f32.mrb[0].mxu0
        %1974 = vmatprep.mubr.f32.mxu0 0.0
        %1975 = vmatmul.mubr.f32.gmra.mrb[0].mxu0 %v1903
        %v1976 = vpop.f32.mrb[0].mxu0
        %v1977 = vadd.f32 0.0, %v1976
        %v1978 = vpop.f32.mrb[0].mxu0
        %1979 = vdwg.mxu0
        %v1980 = vadd.f32 %v1889, %v1972
        %v1981 = vadd.f32 %v1890, %v1977
        %1982 = vrot.lane.b32.xlu0 %v1588, 96
        %v1983 = vpop.permute.xlu0 %1982
        %1984 = vrot.lane.b32.xlu0 %v1589, 96
        %v1985 = vpop.permute.xlu0 %1984
        %v1986 = vsel %vm465, %v1983, 0
        %v1988 = vsel %vm465, %v1985, 0
        %1990 = vmatprep.subr.mxu0 0.0
        %1991 = vmatpush1.msra.mxu0 %v1619
        %1992 = vmatprep.subr.mxu0 0.0
        %1993 = vmatpush1.msra.mxu0 0.0
        %1994 = vmatprep.subr.mxu0 0.0
        %1995 = vmatpush1.msra.mxu0 0.0
        %1996 = vmatprep.subr.mxu0 0.0
        %1997 = vmatpush1.msra.mxu0 0.0
        %1998 = vmatprep.subr.mxu0 0.0
        %1999 = vmatpush1.msra.mxu0 0.0
        %2000 = vmatprep.subr.mxu0 0.0
        %2001 = vmatpush1.msra.mxu0 0.0
        %2002 = vmatprep.subr.mxu0 0.0
        %2003 = vmatpush1.msra.mxu0 0.0
        %2004 = vmatprep.subr.mxu0 0.0
        %2005 = vmatpush1.msra.mxu0 0.0
        %2006 = vmatprep.subr.mxu0 0.0
        %2007 = vmatpush1.msra.mxu0 0.0
        %2008 = vmatprep.subr.mxu0 0.0
        %2009 = vmatpush1.msra.mxu0 0.0
        %2010 = vmatprep.subr.mxu0 0.0
        %2011 = vmatpush1.msra.mxu0 0.0
        %2012 = vmatprep.subr.mxu0 0.0
        %2013 = vmatpush1.msra.mxu0 0.0
        %2014 = vmatprep.subr.mxu0 0.0
        %2015 = vmatpush1.msra.mxu0 0.0
        %2016 = vmatprep.subr.mxu0 0.0
        %2017 = vmatpush1.msra.mxu0 0.0
        %2018 = vmatprep.subr.mxu0 0.0
        %2019 = vmatpush1.msra.mxu0 0.0
        %2020 = vmatprep.subr.mxu0 0.0
        %2021 = vmatpush1.msra.mxu0 0.0
        %2022 = vmatprep.subr.mxu0 0.0
        %2023 = vmatpush1.msra.mxu0 0.0
        %2024 = vmatprep.subr.mxu0 0.0
        %2025 = vmatpush1.msra.mxu0 0.0
        %2026 = vmatprep.subr.mxu0 0.0
        %2027 = vmatpush1.msra.mxu0 0.0
        %2028 = vmatprep.subr.mxu0 0.0
        %2029 = vmatpush1.msra.mxu0 0.0
        %2030 = vmatprep.subr.mxu0 0.0
        %2031 = vmatpush1.msra.mxu0 0.0
        %2032 = vmatprep.subr.mxu0 0.0
        %2033 = vmatpush1.msra.mxu0 0.0
        %2034 = vmatprep.subr.mxu0 0.0
        %2035 = vmatpush1.msra.mxu0 0.0
        %2036 = vmatprep.subr.mxu0 0.0
        %2037 = vmatpush1.msra.mxu0 0.0
        %2038 = vmatprep.subr.mxu0 0.0
        %2039 = vmatpush1.msra.mxu0 0.0
        %2040 = vmatprep.subr.mxu0 0.0
        %2041 = vmatpush1.msra.mxu0 0.0
        %2042 = vmatprep.subr.mxu0 0.0
        %2043 = vmatpush1.msra.mxu0 0.0
        %2044 = vmatprep.subr.mxu0 0.0
        %2045 = vmatpush1.msra.mxu0 0.0
        %2046 = vmatprep.subr.mxu0 0.0
        %2047 = vmatpush1.msra.mxu0 0.0
        %2048 = vmatprep.subr.mxu0 0.0
        %2049 = vmatpush1.msra.mxu0 0.0
        %2050 = vmatprep.subr.mxu0 0.0
        %2051 = vmatpush1.msra.mxu0 0.0
        %2052 = vmatprep.subr.mxu0 0.0
        %2053 = vmatpush1.msra.mxu0 0.0
        %2054 = vmatprep.mubr.f32.mxu0 0.0
        %2055 = vmatmul.mubr.f32.gmra.mrb[0].mxu0 %v1986
        %v2056 = vpop.f32.mrb[0].mxu0
        %v2057 = vadd.f32 0.0, %v2056
        %v2058 = vpop.f32.mrb[0].mxu0
        %2059 = vmatprep.mubr.f32.mxu0 0.0
        %2060 = vmatmul.mubr.f32.gmra.mrb[0].mxu0 %v1988
        %v2061 = vpop.f32.mrb[0].mxu0
        %v2062 = vadd.f32 0.0, %v2061
        %v2063 = vpop.f32.mrb[0].mxu0
        %2064 = vdwg.mxu0
        %v2065 = vadd.f32 %v1980, %v2057
        %v2066 = vadd.f32 %v1981, %v2062
        %2068 = vset.pattern.permute.xlu0 0
        %2069 = vperm.xlu0 %2068, %v1591
        %v2070 = vpop.permute.xlu0 %2069
        %2073 = vset.pattern.permute.xlu0 0
        %2074 = vperm.xlu0 %2073, %v1592
        %v2075 = vpop.permute.xlu0 %2074
        %v2077 = vadd.f32 %v2065, %v2070
        %v2078 = vadd.f32 %v2066, %v2075
        %v2079 = vtanh.pop %v2077
        %v2080 = vxor.u32 %v2078, 2147483648
        %v2081 = vmul.f32 %v2080, 1.442695
        %v2082 = vpow.pop %v2081
        %v2083 = vadd.f32 %v2082, 1.0
        %v2084 = vrcp.pop %v2083
        %v2085 = vmul.f32 1.0, %v2084
        %v2086 = vmul.f32 %v2079, %v2085
        %2088 = vset.pattern.permute.xlu0 0
        %2089 = vperm.xlu0 %2088, %v1596
        %v2090 = vpop.permute.xlu0 %2089
        %v2093 = vsel %vm465, %v1594, 0
        %2095 = vmatprep.subr.mxu0 0.0
        %2096 = vmatpush1.msra.mxu0 %v2086
        %2097 = vmatprep.subr.mxu0 0.0
        %2098 = vmatpush1.msra.mxu0 0.0
        %2099 = vmatprep.subr.mxu0 0.0
        %2100 = vmatpush1.msra.mxu0 0.0
        %2101 = vmatprep.subr.mxu0 0.0
        %2102 = vmatpush1.msra.mxu0 0.0
        %2103 = vmatprep.subr.mxu0 0.0
        %2104 = vmatpush1.msra.mxu0 0.0
        %2105 = vmatprep.subr.mxu0 0.0
        %2106 = vmatpush1.msra.mxu0 0.0
        %2107 = vmatprep.subr.mxu0 0.0
        %2108 = vmatpush1.msra.mxu0 0.0
        %2109 = vmatprep.subr.mxu0 0.0
        %2110 = vmatpush1.msra.mxu0 0.0
        %2111 = vmatprep.subr.mxu0 0.0
        %2112 = vmatpush1.msra.mxu0 0.0
        %2113 = vmatprep.subr.mxu0 0.0
        %2114 = vmatpush1.msra.mxu0 0.0
        %2115 = vmatprep.subr.mxu0 0.0
        %2116 = vmatpush1.msra.mxu0 0.0
        %2117 = vmatprep.subr.mxu0 0.0
        %2118 = vmatpush1.msra.mxu0 0.0
        %2119 = vmatprep.subr.mxu0 0.0
        %2120 = vmatpush1.msra.mxu0 0.0
        %2121 = vmatprep.subr.mxu0 0.0
        %2122 = vmatpush1.msra.mxu0 0.0
        %2123 = vmatprep.subr.mxu0 0.0
        %2124 = vmatpush1.msra.mxu0 0.0
        %2125 = vmatprep.subr.mxu0 0.0
        %2126 = vmatpush1.msra.mxu0 0.0
        %2127 = vmatprep.subr.mxu0 0.0
        %2128 = vmatpush1.msra.mxu0 0.0
        %2129 = vmatprep.subr.mxu0 0.0
        %2130 = vmatpush1.msra.mxu0 0.0
        %2131 = vmatprep.subr.mxu0 0.0
        %2132 = vmatpush1.msra.mxu0 0.0
        %2133 = vmatprep.subr.mxu0 0.0
        %2134 = vmatpush1.msra.mxu0 0.0
        %2135 = vmatprep.subr.mxu0 0.0
        %2136 = vmatpush1.msra.mxu0 0.0
        %2137 = vmatprep.subr.mxu0 0.0
        %2138 = vmatpush1.msra.mxu0 0.0
        %2139 = vmatprep.subr.mxu0 0.0
        %2140 = vmatpush1.msra.mxu0 0.0
        %2141 = vmatprep.subr.mxu0 0.0
        %2142 = vmatpush1.msra.mxu0 0.0
        %2143 = vmatprep.subr.mxu0 0.0
        %2144 = vmatpush1.msra.mxu0 0.0
        %2145 = vmatprep.subr.mxu0 0.0
        %2146 = vmatpush1.msra.mxu0 0.0
        %2147 = vmatprep.subr.mxu0 0.0
        %2148 = vmatpush1.msra.mxu0 0.0
        %2149 = vmatprep.subr.mxu0 0.0
        %2150 = vmatpush1.msra.mxu0 0.0
        %2151 = vmatprep.subr.mxu0 0.0
        %2152 = vmatpush1.msra.mxu0 0.0
        %2153 = vmatprep.subr.mxu0 0.0
        %2154 = vmatpush1.msra.mxu0 0.0
        %2155 = vmatprep.subr.mxu0 0.0
        %2156 = vmatpush1.msra.mxu0 0.0
        %2157 = vmatprep.subr.mxu0 0.0
        %2158 = vmatpush1.msra.mxu0 0.0
        %2159 = vmatprep.mubr.f32.mxu0 0.0
        %2160 = vmatmul.mubr.f32.gmra.mrb[0].mxu0 %v2093
        %v2161 = vpop.f32.mrb[0].mxu0
        %v2162 = vadd.f32 %v2090, %v2161
        %v2163 = vpop.f32.mrb[0].mxu0
        %2164 = vdwg.mxu0
        %v2165 = vadd.f32 %v1581, %v2162
        %v2166 = vadd.f32 %v2162, %v1582
        %s2167 = scalar_lea.vmem %s1, 24
        %v2168 = vld [vmem:[%s2167] sm:$0xff]
        %s2169 = scalar_lea.vmem %s2, 24
        %v2170 = vld [vmem:[%s2169] sm:$0xff]
        %s2171 = scalar_lea.vmem %s3, 48
        %v2172 = vld [vmem:[%s2171] sm:$0xff]
        %v2173 = vld [vmem:[%s2171 + $0x8] sm:$0xff]
        %s2174 = scalar_lea.vmem %s4, 48
        %v2175 = vld [vmem:[%s2174] sm:$0xff]
        %v2176 = vld [vmem:[%s2174 + $0x8] sm:$0xff]
        %s2177 = scalar_lea.vmem %s5, 24
        %v2178 = vld [vmem:[%s2177] sm:$0x1f]
        %s2179 = scalar_lea.vmem %s6, 24
        %v2180 = vld [vmem:[%s2179] sm:$0x1f]
        %2182 = vset.pattern.permute.xlu0 0
        %2183 = vperm.xlu0 %2182, %v2168
        %v2184 = vpop.permute.xlu0 %2183
        %v2186 = vlaneseq
        %v2187 = vshrl.u32 %v2186, 7
        %v2188 = vsub.s32 4, %v2187
        %v2189 = vrot.slane %v2166, %v2188
        %v2190 = vmul.f32 %v2184, %v2189
        %2192 = vset.pattern.permute.xlu0 0
        %2193 = vperm.xlu0 %2192, %v2170
        %v2194 = vpop.permute.xlu0 %2193
        %v2196 = vadd.f32 %v2190, %v2194
        %s2197 = scalar_lea.vmem [#allocation3], 24
        %v2198 = vld [vmem:[%s2197] sm:$0xff]
        %2199 = vst [vmem:[#allocation2] sm:$0xff] %v2198
        %2200 = vst [vmem:[#allocation2 + $0x8] sm:$0xff] %v2196
        %2201 = vst [vmem:[%s2197] sm:$0xff] %v2196
        %v2202 = vld [vmem:[#allocation2] sm:$0xff]
        %v2203 = vld [vmem:[#allocation2 + $0x8] sm:$0xff]
        %2206 = vrot.lane.b32.xlu0 %v2172, 120
        %v2207 = vpop.permute.xlu0 %2206
        %2208 = vrot.lane.b32.xlu0 %v2173, 120
        %v2209 = vpop.permute.xlu0 %2208
        %2212 = vrot.lane.b32.xlu0 %v2202, 3
        %v2213 = vpop.permute.xlu0 %2212
        %2214 = vrot.lane.b32.xlu0 %v2203, 3
        %v2215 = vpop.permute.xlu0 %2214
        %v2216 = vsel %vm462, %v2213, %v2215
        %v2218 = vsel %vm465, %v2207, 0
        %v2220 = vsel %vm465, %v2209, 0
        %2222 = vmatprep.subr.mxu0 0.0
        %2223 = vmatpush1.msra.mxu0 %v2216
        %2224 = vmatprep.subr.mxu0 0.0
        %2225 = vmatpush1.msra.mxu0 0.0
        %2226 = vmatprep.subr.mxu0 0.0
        %2227 = vmatpush1.msra.mxu0 0.0
        %2228 = vmatprep.subr.mxu0 0.0
        %2229 = vmatpush1.msra.mxu0 0.0
        %2230 = vmatprep.subr.mxu0 0.0
        %2231 = vmatpush1.msra.mxu0 0.0
        %2232 = vmatprep.subr.mxu0 0.0
        %2233 = vmatpush1.msra.mxu0 0.0
        %2234 = vmatprep.subr.mxu0 0.0
        %2235 = vmatpush1.msra.mxu0 0.0
        %2236 = vmatprep.subr.mxu0 0.0
        %2237 = vmatpush1.msra.mxu0 0.0
        %2238 = vmatprep.subr.mxu0 0.0
        %2239 = vmatpush1.msra.mxu0 0.0
        %2240 = vmatprep.subr.mxu0 0.0
        %2241 = vmatpush1.msra.mxu0 0.0
        %2242 = vmatprep.subr.mxu0 0.0
        %2243 = vmatpush1.msra.mxu0 0.0
        %2244 = vmatprep.subr.mxu0 0.0
        %2245 = vmatpush1.msra.mxu0 0.0
        %2246 = vmatprep.subr.mxu0 0.0
        %2247 = vmatpush1.msra.mxu0 0.0
        %2248 = vmatprep.subr.mxu0 0.0
        %2249 = vmatpush1.msra.mxu0 0.0
        %2250 = vmatprep.subr.mxu0 0.0
        %2251 = vmatpush1.msra.mxu0 0.0
        %2252 = vmatprep.subr.mxu0 0.0
        %2253 = vmatpush1.msra.mxu0 0.0
        %2254 = vmatprep.subr.mxu0 0.0
        %2255 = vmatpush1.msra.mxu0 0.0
        %2256 = vmatprep.subr.mxu0 0.0
        %2257 = vmatpush1.msra.mxu0 0.0
        %2258 = vmatprep.subr.mxu0 0.0
        %2259 = vmatpush1.msra.mxu0 0.0
        %2260 = vmatprep.subr.mxu0 0.0
        %2261 = vmatpush1.msra.mxu0 0.0
        %2262 = vmatprep.subr.mxu0 0.0
        %2263 = vmatpush1.msra.mxu0 0.0
        %2264 = vmatprep.subr.mxu0 0.0
        %2265 = vmatpush1.msra.mxu0 0.0
        %2266 = vmatprep.subr.mxu0 0.0
        %2267 = vmatpush1.msra.mxu0 0.0
        %2268 = vmatprep.subr.mxu0 0.0
        %2269 = vmatpush1.msra.mxu0 0.0
        %2270 = vmatprep.subr.mxu0 0.0
        %2271 = vmatpush1.msra.mxu0 0.0
        %2272 = vmatprep.subr.mxu0 0.0
        %2273 = vmatpush1.msra.mxu0 0.0
        %2274 = vmatprep.subr.mxu0 0.0
        %2275 = vmatpush1.msra.mxu0 0.0
        %2276 = vmatprep.subr.mxu0 0.0
        %2277 = vmatpush1.msra.mxu0 0.0
        %2278 = vmatprep.subr.mxu0 0.0
        %2279 = vmatpush1.msra.mxu0 0.0
        %2280 = vmatprep.subr.mxu0 0.0
        %2281 = vmatpush1.msra.mxu0 0.0
        %2282 = vmatprep.subr.mxu0 0.0
        %2283 = vmatpush1.msra.mxu0 0.0
        %2284 = vmatprep.subr.mxu0 0.0
        %2285 = vmatpush1.msra.mxu0 0.0
        %2286 = vmatprep.mubr.f32.mxu0 0.0
        %2287 = vmatmul.mubr.f32.gmra.mrb[0].mxu0 %v2218
        %v2288 = vpop.f32.mrb[0].mxu0
        %v2289 = vadd.f32 0.0, %v2288
        %v2290 = vpop.f32.mrb[0].mxu0
        %2291 = vmatprep.mubr.f32.mxu0 0.0
        %2292 = vmatmul.mubr.f32.gmra.mrb[0].mxu0 %v2220
        %v2293 = vpop.f32.mrb[0].mxu0
        %v2294 = vadd.f32 0.0, %v2293
        %v2295 = vpop.f32.mrb[0].mxu0
        %2296 = vdwg.mxu0
        %2297 = vrot.lane.b32.xlu0 %v2202, 4
        %v2298 = vpop.permute.xlu0 %2297
        %2299 = vrot.lane.b32.xlu0 %v2203, 4
        %v2300 = vpop.permute.xlu0 %2299
        %v2301 = vsel %vm549, %v2298, %v2300
        %v2303 = vsel %vm465, %v2172, 0
        %v2305 = vsel %vm465, %v2173, 0
        %2307 = vmatprep.subr.mxu0 0.0
        %2308 = vmatpush1.msra.mxu0 %v2301
        %2309 = vmatprep.subr.mxu0 0.0
        %2310 = vmatpush1.msra.mxu0 0.0
        %2311 = vmatprep.subr.mxu0 0.0
        %2312 = vmatpush1.msra.mxu0 0.0
        %2313 = vmatprep.subr.mxu0 0.0
        %2314 = vmatpush1.msra.mxu0 0.0
        %2315 = vmatprep.subr.mxu0 0.0
        %2316 = vmatpush1.msra.mxu0 0.0
        %2317 = vmatprep.subr.mxu0 0.0
        %2318 = vmatpush1.msra.mxu0 0.0
        %2319 = vmatprep.subr.mxu0 0.0
        %2320 = vmatpush1.msra.mxu0 0.0
        %2321 = vmatprep.subr.mxu0 0.0
        %2322 = vmatpush1.msra.mxu0 0.0
        %2323 = vmatprep.subr.mxu0 0.0
        %2324 = vmatpush1.msra.mxu0 0.0
        %2325 = vmatprep.subr.mxu0 0.0
        %2326 = vmatpush1.msra.mxu0 0.0
        %2327 = vmatprep.subr.mxu0 0.0
        %2328 = vmatpush1.msra.mxu0 0.0
        %2329 = vmatprep.subr.mxu0 0.0
        %2330 = vmatpush1.msra.mxu0 0.0
        %2331 = vmatprep.subr.mxu0 0.0
        %2332 = vmatpush1.msra.mxu0 0.0
        %2333 = vmatprep.subr.mxu0 0.0
        %2334 = vmatpush1.msra.mxu0 0.0
        %2335 = vmatprep.subr.mxu0 0.0
        %2336 = vmatpush1.msra.mxu0 0.0
        %2337 = vmatprep.subr.mxu0 0.0
        %2338 = vmatpush1.msra.mxu0 0.0
        %2339 = vmatprep.subr.mxu0 0.0
        %2340 = vmatpush1.msra.mxu0 0.0
        %2341 = vmatprep.subr.mxu0 0.0
        %2342 = vmatpush1.msra.mxu0 0.0
        %2343 = vmatprep.subr.mxu0 0.0
        %2344 = vmatpush1.msra.mxu0 0.0
        %2345 = vmatprep.subr.mxu0 0.0
        %2346 = vmatpush1.msra.mxu0 0.0
        %2347 = vmatprep.subr.mxu0 0.0
        %2348 = vmatpush1.msra.mxu0 0.0
        %2349 = vmatprep.subr.mxu0 0.0
        %2350 = vmatpush1.msra.mxu0 0.0
        %2351 = vmatprep.subr.mxu0 0.0
        %2352 = vmatpush1.msra.mxu0 0.0
        %2353 = vmatprep.subr.mxu0 0.0
        %2354 = vmatpush1.msra.mxu0 0.0
        %2355 = vmatprep.subr.mxu0 0.0
        %2356 = vmatpush1.msra.mxu0 0.0
        %2357 = vmatprep.subr.mxu0 0.0
        %2358 = vmatpush1.msra.mxu0 0.0
        %2359 = vmatprep.subr.mxu0 0.0
        %2360 = vmatpush1.msra.mxu0 0.0
        %2361 = vmatprep.subr.mxu0 0.0
        %2362 = vmatpush1.msra.mxu0 0.0
        %2363 = vmatprep.subr.mxu0 0.0
        %2364 = vmatpush1.msra.mxu0 0.0
        %2365 = vmatprep.subr.mxu0 0.0
        %2366 = vmatpush1.msra.mxu0 0.0
        %2367 = vmatprep.subr.mxu0 0.0
        %2368 = vmatpush1.msra.mxu0 0.0
        %2369 = vmatprep.subr.mxu0 0.0
        %2370 = vmatpush1.msra.mxu0 0.0
        %2371 = vmatprep.mubr.f32.mxu0 0.0
        %2372 = vmatmul.mubr.f32.gmra.mrb[0].mxu0 %v2303
        %v2373 = vpop.f32.mrb[0].mxu0
        %v2374 = vadd.f32 %v2289, %v2373
        %v2375 = vpop.f32.mrb[0].mxu0
        %2376 = vmatprep.mubr.f32.mxu0 0.0
        %2377 = vmatmul.mubr.f32.gmra.mrb[0].mxu0 %v2305
        %v2378 = vpop.f32.mrb[0].mxu0
        %v2379 = vadd.f32 %v2294, %v2378
        %v2380 = vpop.f32.mrb[0].mxu0
        %2381 = vdwg.mxu0
        %2382 = vrot.lane.b32.xlu0 %v2172, 112
        %v2383 = vpop.permute.xlu0 %2382
        %2384 = vrot.lane.b32.xlu0 %v2173, 112
        %v2385 = vpop.permute.xlu0 %2384
        %2386 = vrot.lane.b32.xlu0 %v2202, 2
        %v2387 = vpop.permute.xlu0 %2386
        %2388 = vrot.lane.b32.xlu0 %v2203, 2
        %v2389 = vpop.permute.xlu0 %2388
        %v2390 = vsel %vm639, %v2387, %v2389
        %v2392 = vsel %vm465, %v2383, 0
        %v2394 = vsel %vm465, %v2385, 0
        %2396 = vmatprep.subr.mxu0 0.0
        %2397 = vmatpush1.msra.mxu0 %v2390
        %2398 = vmatprep.subr.mxu0 0.0
        %2399 = vmatpush1.msra.mxu0 0.0
        %2400 = vmatprep.subr.mxu0 0.0
        %2401 = vmatpush1.msra.mxu0 0.0
        %2402 = vmatprep.subr.mxu0 0.0
        %2403 = vmatpush1.msra.mxu0 0.0
        %2404 = vmatprep.subr.mxu0 0.0
        %2405 = vmatpush1.msra.mxu0 0.0
        %2406 = vmatprep.subr.mxu0 0.0
        %2407 = vmatpush1.msra.mxu0 0.0
        %2408 = vmatprep.subr.mxu0 0.0
        %2409 = vmatpush1.msra.mxu0 0.0
        %2410 = vmatprep.subr.mxu0 0.0
        %2411 = vmatpush1.msra.mxu0 0.0
        %2412 = vmatprep.subr.mxu0 0.0
        %2413 = vmatpush1.msra.mxu0 0.0
        %2414 = vmatprep.subr.mxu0 0.0
        %2415 = vmatpush1.msra.mxu0 0.0
        %2416 = vmatprep.subr.mxu0 0.0
        %2417 = vmatpush1.msra.mxu0 0.0
        %2418 = vmatprep.subr.mxu0 0.0
        %2419 = vmatpush1.msra.mxu0 0.0
        %2420 = vmatprep.subr.mxu0 0.0
        %2421 = vmatpush1.msra.mxu0 0.0
        %2422 = vmatprep.subr.mxu0 0.0
        %2423 = vmatpush1.msra.mxu0 0.0
        %2424 = vmatprep.subr.mxu0 0.0
        %2425 = vmatpush1.msra.mxu0 0.0
        %2426 = vmatprep.subr.mxu0 0.0
        %2427 = vmatpush1.msra.mxu0 0.0
        %2428 = vmatprep.subr.mxu0 0.0
        %2429 = vmatpush1.msra.mxu0 0.0
        %2430 = vmatprep.subr.mxu0 0.0
        %2431 = vmatpush1.msra.mxu0 0.0
        %2432 = vmatprep.subr.mxu0 0.0
        %2433 = vmatpush1.msra.mxu0 0.0
        %2434 = vmatprep.subr.mxu0 0.0
        %2435 = vmatpush1.msra.mxu0 0.0
        %2436 = vmatprep.subr.mxu0 0.0
        %2437 = vmatpush1.msra.mxu0 0.0
        %2438 = vmatprep.subr.mxu0 0.0
        %2439 = vmatpush1.msra.mxu0 0.0
        %2440 = vmatprep.subr.mxu0 0.0
        %2441 = vmatpush1.msra.mxu0 0.0
        %2442 = vmatprep.subr.mxu0 0.0
        %2443 = vmatpush1.msra.mxu0 0.0
        %2444 = vmatprep.subr.mxu0 0.0
        %2445 = vmatpush1.msra.mxu0 0.0
        %2446 = vmatprep.subr.mxu0 0.0
        %2447 = vmatpush1.msra.mxu0 0.0
        %2448 = vmatprep.subr.mxu0 0.0
        %2449 = vmatpush1.msra.mxu0 0.0
        %2450 = vmatprep.subr.mxu0 0.0
        %2451 = vmatpush1.msra.mxu0 0.0
        %2452 = vmatprep.subr.mxu0 0.0
        %2453 = vmatpush1.msra.mxu0 0.0
        %2454 = vmatprep.subr.mxu0 0.0
        %2455 = vmatpush1.msra.mxu0 0.0
        %2456 = vmatprep.subr.mxu0 0.0
        %2457 = vmatpush1.msra.mxu0 0.0
        %2458 = vmatprep.subr.mxu0 0.0
        %2459 = vmatpush1.msra.mxu0 0.0
        %2460 = vmatprep.mubr.f32.mxu0 0.0
        %2461 = vmatmul.mubr.f32.gmra.mrb[0].mxu0 %v2392
        %v2462 = vpop.f32.mrb[0].mxu0
        %v2463 = vadd.f32 0.0, %v2462
        %v2464 = vpop.f32.mrb[0].mxu0
        %2465 = vmatprep.mubr.f32.mxu0 0.0
        %2466 = vmatmul.mubr.f32.gmra.mrb[0].mxu0 %v2394
        %v2467 = vpop.f32.mrb[0].mxu0
        %v2468 = vadd.f32 0.0, %v2467
        %v2469 = vpop.f32.mrb[0].mxu0
        %2470 = vdwg.mxu0
        %v2471 = vadd.f32 %v2374, %v2463
        %v2472 = vadd.f32 %v2379, %v2468
        %2473 = vrot.lane.b32.xlu0 %v2172, 104
        %v2474 = vpop.permute.xlu0 %2473
        %2475 = vrot.lane.b32.xlu0 %v2173, 104
        %v2476 = vpop.permute.xlu0 %2475
        %2477 = vrot.lane.b32.xlu0 %v2202, 1
        %v2478 = vpop.permute.xlu0 %2477
        %2479 = vrot.lane.b32.xlu0 %v2203, 1
        %v2480 = vpop.permute.xlu0 %2479
        %v2481 = vsel %vm731, %v2478, %v2480
        %v2483 = vsel %vm465, %v2474, 0
        %v2485 = vsel %vm465, %v2476, 0
        %2487 = vmatprep.subr.mxu0 0.0
        %2488 = vmatpush1.msra.mxu0 %v2481
        %2489 = vmatprep.subr.mxu0 0.0
        %2490 = vmatpush1.msra.mxu0 0.0
        %2491 = vmatprep.subr.mxu0 0.0
        %2492 = vmatpush1.msra.mxu0 0.0
        %2493 = vmatprep.subr.mxu0 0.0
        %2494 = vmatpush1.msra.mxu0 0.0
        %2495 = vmatprep.subr.mxu0 0.0
        %2496 = vmatpush1.msra.mxu0 0.0
        %2497 = vmatprep.subr.mxu0 0.0
        %2498 = vmatpush1.msra.mxu0 0.0
        %2499 = vmatprep.subr.mxu0 0.0
        %2500 = vmatpush1.msra.mxu0 0.0
        %2501 = vmatprep.subr.mxu0 0.0
        %2502 = vmatpush1.msra.mxu0 0.0
        %2503 = vmatprep.subr.mxu0 0.0
        %2504 = vmatpush1.msra.mxu0 0.0
        %2505 = vmatprep.subr.mxu0 0.0
        %2506 = vmatpush1.msra.mxu0 0.0
        %2507 = vmatprep.subr.mxu0 0.0
        %2508 = vmatpush1.msra.mxu0 0.0
        %2509 = vmatprep.subr.mxu0 0.0
        %2510 = vmatpush1.msra.mxu0 0.0
        %2511 = vmatprep.subr.mxu0 0.0
        %2512 = vmatpush1.msra.mxu0 0.0
        %2513 = vmatprep.subr.mxu0 0.0
        %2514 = vmatpush1.msra.mxu0 0.0
        %2515 = vmatprep.subr.mxu0 0.0
        %2516 = vmatpush1.msra.mxu0 0.0
        %2517 = vmatprep.subr.mxu0 0.0
        %2518 = vmatpush1.msra.mxu0 0.0
        %2519 = vmatprep.subr.mxu0 0.0
        %2520 = vmatpush1.msra.mxu0 0.0
        %2521 = vmatprep.subr.mxu0 0.0
        %2522 = vmatpush1.msra.mxu0 0.0
        %2523 = vmatprep.subr.mxu0 0.0
        %2524 = vmatpush1.msra.mxu0 0.0
        %2525 = vmatprep.subr.mxu0 0.0
        %2526 = vmatpush1.msra.mxu0 0.0
        %2527 = vmatprep.subr.mxu0 0.0
        %2528 = vmatpush1.msra.mxu0 0.0
        %2529 = vmatprep.subr.mxu0 0.0
        %2530 = vmatpush1.msra.mxu0 0.0
        %2531 = vmatprep.subr.mxu0 0.0
        %2532 = vmatpush1.msra.mxu0 0.0
        %2533 = vmatprep.subr.mxu0 0.0
        %2534 = vmatpush1.msra.mxu0 0.0
        %2535 = vmatprep.subr.mxu0 0.0
        %2536 = vmatpush1.msra.mxu0 0.0
        %2537 = vmatprep.subr.mxu0 0.0
        %2538 = vmatpush1.msra.mxu0 0.0
        %2539 = vmatprep.subr.mxu0 0.0
        %2540 = vmatpush1.msra.mxu0 0.0
        %2541 = vmatprep.subr.mxu0 0.0
        %2542 = vmatpush1.msra.mxu0 0.0
        %2543 = vmatprep.subr.mxu0 0.0
        %2544 = vmatpush1.msra.mxu0 0.0
        %2545 = vmatprep.subr.mxu0 0.0
        %2546 = vmatpush1.msra.mxu0 0.0
        %2547 = vmatprep.subr.mxu0 0.0
        %2548 = vmatpush1.msra.mxu0 0.0
        %2549 = vmatprep.subr.mxu0 0.0
        %2550 = vmatpush1.msra.mxu0 0.0
        %2551 = vmatprep.mubr.f32.mxu0 0.0
        %2552 = vmatmul.mubr.f32.gmra.mrb[0].mxu0 %v2483
        %v2553 = vpop.f32.mrb[0].mxu0
        %v2554 = vadd.f32 0.0, %v2553
        %v2555 = vpop.f32.mrb[0].mxu0
        %2556 = vmatprep.mubr.f32.mxu0 0.0
        %2557 = vmatmul.mubr.f32.gmra.mrb[0].mxu0 %v2485
        %v2558 = vpop.f32.mrb[0].mxu0
        %v2559 = vadd.f32 0.0, %v2558
        %v2560 = vpop.f32.mrb[0].mxu0
        %2561 = vdwg.mxu0
        %v2562 = vadd.f32 %v2471, %v2554
        %v2563 = vadd.f32 %v2472, %v2559
        %2564 = vrot.lane.b32.xlu0 %v2172, 96
        %v2565 = vpop.permute.xlu0 %2564
        %2566 = vrot.lane.b32.xlu0 %v2173, 96
        %v2567 = vpop.permute.xlu0 %2566
        %v2568 = vsel %vm465, %v2565, 0
        %v2570 = vsel %vm465, %v2567, 0
        %2572 = vmatprep.subr.mxu0 0.0
        %2573 = vmatpush1.msra.mxu0 %v2203
        %2574 = vmatprep.subr.mxu0 0.0
        %2575 = vmatpush1.msra.mxu0 0.0
        %2576 = vmatprep.subr.mxu0 0.0
        %2577 = vmatpush1.msra.mxu0 0.0
        %2578 = vmatprep.subr.mxu0 0.0
        %2579 = vmatpush1.msra.mxu0 0.0
        %2580 = vmatprep.subr.mxu0 0.0
        %2581 = vmatpush1.msra.mxu0 0.0
        %2582 = vmatprep.subr.mxu0 0.0
        %2583 = vmatpush1.msra.mxu0 0.0
        %2584 = vmatprep.subr.mxu0 0.0
        %2585 = vmatpush1.msra.mxu0 0.0
        %2586 = vmatprep.subr.mxu0 0.0
        %2587 = vmatpush1.msra.mxu0 0.0
        %2588 = vmatprep.subr.mxu0 0.0
        %2589 = vmatpush1.msra.mxu0 0.0
        %2590 = vmatprep.subr.mxu0 0.0
        %2591 = vmatpush1.msra.mxu0 0.0
        %2592 = vmatprep.subr.mxu0 0.0
        %2593 = vmatpush1.msra.mxu0 0.0
        %2594 = vmatprep.subr.mxu0 0.0
        %2595 = vmatpush1.msra.mxu0 0.0
        %2596 = vmatprep.subr.mxu0 0.0
        %2597 = vmatpush1.msra.mxu0 0.0
        %2598 = vmatprep.subr.mxu0 0.0
        %2599 = vmatpush1.msra.mxu0 0.0
        %2600 = vmatprep.subr.mxu0 0.0
        %2601 = vmatpush1.msra.mxu0 0.0
        %2602 = vmatprep.subr.mxu0 0.0
        %2603 = vmatpush1.msra.mxu0 0.0
        %2604 = vmatprep.subr.mxu0 0.0
        %2605 = vmatpush1.msra.mxu0 0.0
        %2606 = vmatprep.subr.mxu0 0.0
        %2607 = vmatpush1.msra.mxu0 0.0
        %2608 = vmatprep.subr.mxu0 0.0
        %2609 = vmatpush1.msra.mxu0 0.0
        %2610 = vmatprep.subr.mxu0 0.0
        %2611 = vmatpush1.msra.mxu0 0.0
        %2612 = vmatprep.subr.mxu0 0.0
        %2613 = vmatpush1.msra.mxu0 0.0
        %2614 = vmatprep.subr.mxu0 0.0
        %2615 = vmatpush1.msra.mxu0 0.0
        %2616 = vmatprep.subr.mxu0 0.0
        %2617 = vmatpush1.msra.mxu0 0.0
        %2618 = vmatprep.subr.mxu0 0.0
        %2619 = vmatpush1.msra.mxu0 0.0
        %2620 = vmatprep.subr.mxu0 0.0
        %2621 = vmatpush1.msra.mxu0 0.0
        %2622 = vmatprep.subr.mxu0 0.0
        %2623 = vmatpush1.msra.mxu0 0.0
        %2624 = vmatprep.subr.mxu0 0.0
        %2625 = vmatpush1.msra.mxu0 0.0
        %2626 = vmatprep.subr.mxu0 0.0
        %2627 = vmatpush1.msra.mxu0 0.0
        %2628 = vmatprep.subr.mxu0 0.0
        %2629 = vmatpush1.msra.mxu0 0.0
        %2630 = vmatprep.subr.mxu0 0.0
        %2631 = vmatpush1.msra.mxu0 0.0
        %2632 = vmatprep.subr.mxu0 0.0
        %2633 = vmatpush1.msra.mxu0 0.0
        %2634 = vmatprep.subr.mxu0 0.0
        %2635 = vmatpush1.msra.mxu0 0.0
        %2636 = vmatprep.mubr.f32.mxu0 0.0
        %2637 = vmatmul.mubr.f32.gmra.mrb[0].mxu0 %v2568
        %v2638 = vpop.f32.mrb[0].mxu0
        %v2639 = vadd.f32 0.0, %v2638
        %v2640 = vpop.f32.mrb[0].mxu0
        %2641 = vmatprep.mubr.f32.mxu0 0.0
        %2642 = vmatmul.mubr.f32.gmra.mrb[0].mxu0 %v2570
        %v2643 = vpop.f32.mrb[0].mxu0
        %v2644 = vadd.f32 0.0, %v2643
        %v2645 = vpop.f32.mrb[0].mxu0
        %2646 = vdwg.mxu0
        %v2647 = vadd.f32 %v2562, %v2639
        %v2648 = vadd.f32 %v2563, %v2644
        %2650 = vset.pattern.permute.xlu0 0
        %2651 = vperm.xlu0 %2650, %v2175
        %v2652 = vpop.permute.xlu0 %2651
        %2655 = vset.pattern.permute.xlu0 0
        %2656 = vperm.xlu0 %2655, %v2176
        %v2657 = vpop.permute.xlu0 %2656
        %v2659 = vadd.f32 %v2647, %v2652
        %v2660 = vadd.f32 %v2648, %v2657
        %v2661 = vtanh.pop %v2659
        %v2662 = vxor.u32 %v2660, 2147483648
        %v2663 = vmul.f32 %v2662, 1.442695
        %v2664 = vpow.pop %v2663
        %v2665 = vadd.f32 %v2664, 1.0
        %v2666 = vrcp.pop %v2665
        %v2667 = vmul.f32 1.0, %v2666
        %v2668 = vmul.f32 %v2661, %v2667
        %2670 = vset.pattern.permute.xlu0 0
        %2671 = vperm.xlu0 %2670, %v2180
        %v2672 = vpop.permute.xlu0 %2671
        %v2675 = vsel %vm465, %v2178, 0
        %2677 = vmatprep.subr.mxu0 0.0
        %2678 = vmatpush1.msra.mxu0 %v2668
        %2679 = vmatprep.subr.mxu0 0.0
        %2680 = vmatpush1.msra.mxu0 0.0
        %2681 = vmatprep.subr.mxu0 0.0
        %2682 = vmatpush1.msra.mxu0 0.0
        %2683 = vmatprep.subr.mxu0 0.0
        %2684 = vmatpush1.msra.mxu0 0.0
        %2685 = vmatprep.subr.mxu0 0.0
        %2686 = vmatpush1.msra.mxu0 0.0
        %2687 = vmatprep.subr.mxu0 0.0
        %2688 = vmatpush1.msra.mxu0 0.0
        %2689 = vmatprep.subr.mxu0 0.0
        %2690 = vmatpush1.msra.mxu0 0.0
        %2691 = vmatprep.subr.mxu0 0.0
        %2692 = vmatpush1.msra.mxu0 0.0
        %2693 = vmatprep.subr.mxu0 0.0
        %2694 = vmatpush1.msra.mxu0 0.0
        %2695 = vmatprep.subr.mxu0 0.0
        %2696 = vmatpush1.msra.mxu0 0.0
        %2697 = vmatprep.subr.mxu0 0.0
        %2698 = vmatpush1.msra.mxu0 0.0
        %2699 = vmatprep.subr.mxu0 0.0
        %2700 = vmatpush1.msra.mxu0 0.0
        %2701 = vmatprep.subr.mxu0 0.0
        %2702 = vmatpush1.msra.mxu0 0.0
        %2703 = vmatprep.subr.mxu0 0.0
        %2704 = vmatpush1.msra.mxu0 0.0
        %2705 = vmatprep.subr.mxu0 0.0
        %2706 = vmatpush1.msra.mxu0 0.0
        %2707 = vmatprep.subr.mxu0 0.0
        %2708 = vmatpush1.msra.mxu0 0.0
        %2709 = vmatprep.subr.mxu0 0.0
        %2710 = vmatpush1.msra.mxu0 0.0
        %2711 = vmatprep.subr.mxu0 0.0
        %2712 = vmatpush1.msra.mxu0 0.0
        %2713 = vmatprep.subr.mxu0 0.0
        %2714 = vmatpush1.msra.mxu0 0.0
        %2715 = vmatprep.subr.mxu0 0.0
        %2716 = vmatpush1.msra.mxu0 0.0
        %2717 = vmatprep.subr.mxu0 0.0
        %2718 = vmatpush1.msra.mxu0 0.0
        %2719 = vmatprep.subr.mxu0 0.0
        %2720 = vmatpush1.msra.mxu0 0.0
        %2721 = vmatprep.subr.mxu0 0.0
        %2722 = vmatpush1.msra.mxu0 0.0
        %2723 = vmatprep.subr.mxu0 0.0
        %2724 = vmatpush1.msra.mxu0 0.0
        %2725 = vmatprep.subr.mxu0 0.0
        %2726 = vmatpush1.msra.mxu0 0.0
        %2727 = vmatprep.subr.mxu0 0.0
        %2728 = vmatpush1.msra.mxu0 0.0
        %2729 = vmatprep.subr.mxu0 0.0
        %2730 = vmatpush1.msra.mxu0 0.0
        %2731 = vmatprep.subr.mxu0 0.0
        %2732 = vmatpush1.msra.mxu0 0.0
        %2733 = vmatprep.subr.mxu0 0.0
        %2734 = vmatpush1.msra.mxu0 0.0
        %2735 = vmatprep.subr.mxu0 0.0
        %2736 = vmatpush1.msra.mxu0 0.0
        %2737 = vmatprep.subr.mxu0 0.0
        %2738 = vmatpush1.msra.mxu0 0.0
        %2739 = vmatprep.subr.mxu0 0.0
        %2740 = vmatpush1.msra.mxu0 0.0
        %2741 = vmatprep.mubr.f32.mxu0 0.0
        %2742 = vmatmul.mubr.f32.gmra.mrb[0].mxu0 %v2675
        %v2743 = vpop.f32.mrb[0].mxu0
        %v2744 = vadd.f32 %v2672, %v2743
        %v2745 = vpop.f32.mrb[0].mxu0
        %2746 = vdwg.mxu0
        %v2747 = vadd.f32 %v2165, %v2744
        %v2748 = vadd.f32 %v2744, %v2166
        %s2749 = scalar_lea.vmem %s1, 32
        %v2750 = vld [vmem:[%s2749] sm:$0xff]
        %s2751 = scalar_lea.vmem %s2, 32
        %v2752 = vld [vmem:[%s2751] sm:$0xff]
        %s2753 = scalar_lea.vmem %s3, 64
        %v2754 = vld [vmem:[%s2753] sm:$0xff]
        %v2755 = vld [vmem:[%s2753 + $0x8] sm:$0xff]
        %s2756 = scalar_lea.vmem %s4, 64
        %v2757 = vld [vmem:[%s2756] sm:$0xff]
        %v2758 = vld [vmem:[%s2756 + $0x8] sm:$0xff]
        %s2759 = scalar_lea.vmem %s5, 32
        %v2760 = vld [vmem:[%s2759] sm:$0x1f]
        %s2761 = scalar_lea.vmem %s6, 32
        %v2762 = vld [vmem:[%s2761] sm:$0x1f]
        %2764 = vset.pattern.permute.xlu0 0
        %2765 = vperm.xlu0 %2764, %v2750
        %v2766 = vpop.permute.xlu0 %2765
        %v2768 = vlaneseq
        %v2769 = vshrl.u32 %v2768, 7
        %v2770 = vsub.s32 4, %v2769
        %v2771 = vrot.slane %v2748, %v2770
        %v2772 = vmul.f32 %v2766, %v2771
        %2774 = vset.pattern.permute.xlu0 0
        %2775 = vperm.xlu0 %2774, %v2752
        %v2776 = vpop.permute.xlu0 %2775
        %v2778 = vadd.f32 %v2772, %v2776
        %s2779 = scalar_lea.vmem [#allocation3], 32
        %v2780 = vld [vmem:[%s2779] sm:$0xff]
        %2781 = vst [vmem:[#allocation2] sm:$0xff] %v2780
        %2782 = vst [vmem:[#allocation2 + $0x8] sm:$0xff] %v2778
        %2783 = vst [vmem:[%s2779] sm:$0xff] %v2778
        %v2784 = vld [vmem:[#allocation2] sm:$0xff]
        %v2785 = vld [vmem:[#allocation2 + $0x8] sm:$0xff]
        %2788 = vrot.lane.b32.xlu0 %v2754, 120
        %v2789 = vpop.permute.xlu0 %2788
        %2790 = vrot.lane.b32.xlu0 %v2755, 120
        %v2791 = vpop.permute.xlu0 %2790
        %2794 = vrot.lane.b32.xlu0 %v2784, 6
        %v2795 = vpop.permute.xlu0 %2794
        %2796 = vrot.lane.b32.xlu0 %v2785, 6
        %v2797 = vpop.permute.xlu0 %2796
        %v2798 = vsel %vm1049, %v2795, %v2797
        %v2800 = vsel %vm465, %v2789, 0
        %v2802 = vsel %vm465, %v2791, 0
        %2804 = vmatprep.subr.mxu0 0.0
        %2805 = vmatpush1.msra.mxu0 %v2798
        %2806 = vmatprep.subr.mxu0 0.0
        %2807 = vmatpush1.msra.mxu0 0.0
        %2808 = vmatprep.subr.mxu0 0.0
        %2809 = vmatpush1.msra.mxu0 0.0
        %2810 = vmatprep.subr.mxu0 0.0
        %2811 = vmatpush1.msra.mxu0 0.0
        %2812 = vmatprep.subr.mxu0 0.0
        %2813 = vmatpush1.msra.mxu0 0.0
        %2814 = vmatprep.subr.mxu0 0.0
        %2815 = vmatpush1.msra.mxu0 0.0
        %2816 = vmatprep.subr.mxu0 0.0
        %2817 = vmatpush1.msra.mxu0 0.0
        %2818 = vmatprep.subr.mxu0 0.0
        %2819 = vmatpush1.msra.mxu0 0.0
        %2820 = vmatprep.subr.mxu0 0.0
        %2821 = vmatpush1.msra.mxu0 0.0
        %2822 = vmatprep.subr.mxu0 0.0
        %2823 = vmatpush1.msra.mxu0 0.0
        %2824 = vmatprep.subr.mxu0 0.0
        %2825 = vmatpush1.msra.mxu0 0.0
        %2826 = vmatprep.subr.mxu0 0.0
        %2827 = vmatpush1.msra.mxu0 0.0
        %2828 = vmatprep.subr.mxu0 0.0
        %2829 = vmatpush1.msra.mxu0 0.0
        %2830 = vmatprep.subr.mxu0 0.0
        %2831 = vmatpush1.msra.mxu0 0.0
        %2832 = vmatprep.subr.mxu0 0.0
        %2833 = vmatpush1.msra.mxu0 0.0
        %2834 = vmatprep.subr.mxu0 0.0
        %2835 = vmatpush1.msra.mxu0 0.0
        %2836 = vmatprep.subr.mxu0 0.0
        %2837 = vmatpush1.msra.mxu0 0.0
        %2838 = vmatprep.subr.mxu0 0.0
        %2839 = vmatpush1.msra.mxu0 0.0
        %2840 = vmatprep.subr.mxu0 0.0
        %2841 = vmatpush1.msra.mxu0 0.0
        %2842 = vmatprep.subr.mxu0 0.0
        %2843 = vmatpush1.msra.mxu0 0.0
        %2844 = vmatprep.subr.mxu0 0.0
        %2845 = vmatpush1.msra.mxu0 0.0
        %2846 = vmatprep.subr.mxu0 0.0
        %2847 = vmatpush1.msra.mxu0 0.0
        %2848 = vmatprep.subr.mxu0 0.0
        %2849 = vmatpush1.msra.mxu0 0.0
        %2850 = vmatprep.subr.mxu0 0.0
        %2851 = vmatpush1.msra.mxu0 0.0
        %2852 = vmatprep.subr.mxu0 0.0
        %2853 = vmatpush1.msra.mxu0 0.0
        %2854 = vmatprep.subr.mxu0 0.0
        %2855 = vmatpush1.msra.mxu0 0.0
        %2856 = vmatprep.subr.mxu0 0.0
        %2857 = vmatpush1.msra.mxu0 0.0
        %2858 = vmatprep.subr.mxu0 0.0
        %2859 = vmatpush1.msra.mxu0 0.0
        %2860 = vmatprep.subr.mxu0 0.0
        %2861 = vmatpush1.msra.mxu0 0.0
        %2862 = vmatprep.subr.mxu0 0.0
        %2863 = vmatpush1.msra.mxu0 0.0
        %2864 = vmatprep.subr.mxu0 0.0
        %2865 = vmatpush1.msra.mxu0 0.0
        %2866 = vmatprep.subr.mxu0 0.0
        %2867 = vmatpush1.msra.mxu0 0.0
        %2868 = vmatprep.mubr.f32.mxu0 0.0
        %2869 = vmatmul.mubr.f32.gmra.mrb[0].mxu0 %v2800
        %v2870 = vpop.f32.mrb[0].mxu0
        %v2871 = vadd.f32 0.0, %v2870
        %v2872 = vpop.f32.mrb[0].mxu0
        %2873 = vmatprep.mubr.f32.mxu0 0.0
        %2874 = vmatmul.mubr.f32.gmra.mrb[0].mxu0 %v2802
        %v2875 = vpop.f32.mrb[0].mxu0
        %v2876 = vadd.f32 0.0, %v2875
        %v2877 = vpop.f32.mrb[0].mxu0
        %2878 = vdwg.mxu0
        %2879 = vrot.lane.b32.xlu0 %v2784, 8
        %v2880 = vpop.permute.xlu0 %2879
        %2881 = vrot.lane.b32.xlu0 %v2785, 8
        %v2882 = vpop.permute.xlu0 %2881
        %v2883 = vsel %vm465, %v2880, %v2882
        %v2885 = vsel %vm465, %v2754, 0
        %v2887 = vsel %vm465, %v2755, 0
        %2889 = vmatprep.subr.mxu0 0.0
        %2890 = vmatpush1.msra.mxu0 %v2883
        %2891 = vmatprep.subr.mxu0 0.0
        %2892 = vmatpush1.msra.mxu0 0.0
        %2893 = vmatprep.subr.mxu0 0.0
        %2894 = vmatpush1.msra.mxu0 0.0
        %2895 = vmatprep.subr.mxu0 0.0
        %2896 = vmatpush1.msra.mxu0 0.0
        %2897 = vmatprep.subr.mxu0 0.0
        %2898 = vmatpush1.msra.mxu0 0.0
        %2899 = vmatprep.subr.mxu0 0.0
        %2900 = vmatpush1.msra.mxu0 0.0
        %2901 = vmatprep.subr.mxu0 0.0
        %2902 = vmatpush1.msra.mxu0 0.0
        %2903 = vmatprep.subr.mxu0 0.0
        %2904 = vmatpush1.msra.mxu0 0.0
        %2905 = vmatprep.subr.mxu0 0.0
        %2906 = vmatpush1.msra.mxu0 0.0
        %2907 = vmatprep.subr.mxu0 0.0
        %2908 = vmatpush1.msra.mxu0 0.0
        %2909 = vmatprep.subr.mxu0 0.0
        %2910 = vmatpush1.msra.mxu0 0.0
        %2911 = vmatprep.subr.mxu0 0.0
        %2912 = vmatpush1.msra.mxu0 0.0
        %2913 = vmatprep.subr.mxu0 0.0
        %2914 = vmatpush1.msra.mxu0 0.0
        %2915 = vmatprep.subr.mxu0 0.0
        %2916 = vmatpush1.msra.mxu0 0.0
        %2917 = vmatprep.subr.mxu0 0.0
        %2918 = vmatpush1.msra.mxu0 0.0
        %2919 = vmatprep.subr.mxu0 0.0
        %2920 = vmatpush1.msra.mxu0 0.0
        %2921 = vmatprep.subr.mxu0 0.0
        %2922 = vmatpush1.msra.mxu0 0.0
        %2923 = vmatprep.subr.mxu0 0.0
        %2924 = vmatpush1.msra.mxu0 0.0
        %2925 = vmatprep.subr.mxu0 0.0
        %2926 = vmatpush1.msra.mxu0 0.0
        %2927 = vmatprep.subr.mxu0 0.0
        %2928 = vmatpush1.msra.mxu0 0.0
        %2929 = vmatprep.subr.mxu0 0.0
        %2930 = vmatpush1.msra.mxu0 0.0
        %2931 = vmatprep.subr.mxu0 0.0
        %2932 = vmatpush1.msra.mxu0 0.0
        %2933 = vmatprep.subr.mxu0 0.0
        %2934 = vmatpush1.msra.mxu0 0.0
        %2935 = vmatprep.subr.mxu0 0.0
        %2936 = vmatpush1.msra.mxu0 0.0
        %2937 = vmatprep.subr.mxu0 0.0
        %2938 = vmatpush1.msra.mxu0 0.0
        %2939 = vmatprep.subr.mxu0 0.0
        %2940 = vmatpush1.msra.mxu0 0.0
        %2941 = vmatprep.subr.mxu0 0.0
        %2942 = vmatpush1.msra.mxu0 0.0
        %2943 = vmatprep.subr.mxu0 0.0
        %2944 = vmatpush1.msra.mxu0 0.0
        %2945 = vmatprep.subr.mxu0 0.0
        %2946 = vmatpush1.msra.mxu0 0.0
        %2947 = vmatprep.subr.mxu0 0.0
        %2948 = vmatpush1.msra.mxu0 0.0
        %2949 = vmatprep.subr.mxu0 0.0
        %2950 = vmatpush1.msra.mxu0 0.0
        %2951 = vmatprep.subr.mxu0 0.0
        %2952 = vmatpush1.msra.mxu0 0.0
        %2953 = vmatprep.mubr.f32.mxu0 0.0
        %2954 = vmatmul.mubr.f32.gmra.mrb[0].mxu0 %v2885
        %v2955 = vpop.f32.mrb[0].mxu0
        %v2956 = vadd.f32 %v2871, %v2955
        %v2957 = vpop.f32.mrb[0].mxu0
        %2958 = vmatprep.mubr.f32.mxu0 0.0
        %2959 = vmatmul.mubr.f32.gmra.mrb[0].mxu0 %v2887
        %v2960 = vpop.f32.mrb[0].mxu0
        %v2961 = vadd.f32 %v2876, %v2960
        %v2962 = vpop.f32.mrb[0].mxu0
        %2963 = vdwg.mxu0
        %2964 = vrot.lane.b32.xlu0 %v2754, 112
        %v2965 = vpop.permute.xlu0 %2964
        %2966 = vrot.lane.b32.xlu0 %v2755, 112
        %v2967 = vpop.permute.xlu0 %2966
        %2968 = vrot.lane.b32.xlu0 %v2784, 4
        %v2969 = vpop.permute.xlu0 %2968
        %2970 = vrot.lane.b32.xlu0 %v2785, 4
        %v2971 = vpop.permute.xlu0 %2970
        %v2972 = vsel %vm549, %v2969, %v2971
        %v2974 = vsel %vm465, %v2965, 0
        %v2976 = vsel %vm465, %v2967, 0
        %2978 = vmatprep.subr.mxu0 0.0
        %2979 = vmatpush1.msra.mxu0 %v2972
        %2980 = vmatprep.subr.mxu0 0.0
        %2981 = vmatpush1.msra.mxu0 0.0
        %2982 = vmatprep.subr.mxu0 0.0
        %2983 = vmatpush1.msra.mxu0 0.0
        %2984 = vmatprep.subr.mxu0 0.0
        %2985 = vmatpush1.msra.mxu0 0.0
        %2986 = vmatprep.subr.mxu0 0.0
        %2987 = vmatpush1.msra.mxu0 0.0
        %2988 = vmatprep.subr.mxu0 0.0
        %2989 = vmatpush1.msra.mxu0 0.0
        %2990 = vmatprep.subr.mxu0 0.0
        %2991 = vmatpush1.msra.mxu0 0.0
        %2992 = vmatprep.subr.mxu0 0.0
        %2993 = vmatpush1.msra.mxu0 0.0
        %2994 = vmatprep.subr.mxu0 0.0
        %2995 = vmatpush1.msra.mxu0 0.0
        %2996 = vmatprep.subr.mxu0 0.0
        %2997 = vmatpush1.msra.mxu0 0.0
        %2998 = vmatprep.subr.mxu0 0.0
        %2999 = vmatpush1.msra.mxu0 0.0
        %3000 = vmatprep.subr.mxu0 0.0
        %3001 = vmatpush1.msra.mxu0 0.0
        %3002 = vmatprep.subr.mxu0 0.0
        %3003 = vmatpush1.msra.mxu0 0.0
        %3004 = vmatprep.subr.mxu0 0.0
        %3005 = vmatpush1.msra.mxu0 0.0
        %3006 = vmatprep.subr.mxu0 0.0
        %3007 = vmatpush1.msra.mxu0 0.0
        %3008 = vmatprep.subr.mxu0 0.0
        %3009 = vmatpush1.msra.mxu0 0.0
        %3010 = vmatprep.subr.mxu0 0.0
        %3011 = vmatpush1.msra.mxu0 0.0
        %3012 = vmatprep.subr.mxu0 0.0
        %3013 = vmatpush1.msra.mxu0 0.0
        %3014 = vmatprep.subr.mxu0 0.0
        %3015 = vmatpush1.msra.mxu0 0.0
        %3016 = vmatprep.subr.mxu0 0.0
        %3017 = vmatpush1.msra.mxu0 0.0
        %3018 = vmatprep.subr.mxu0 0.0
        %3019 = vmatpush1.msra.mxu0 0.0
        %3020 = vmatprep.subr.mxu0 0.0
        %3021 = vmatpush1.msra.mxu0 0.0
        %3022 = vmatprep.subr.mxu0 0.0
        %3023 = vmatpush1.msra.mxu0 0.0
        %3024 = vmatprep.subr.mxu0 0.0
        %3025 = vmatpush1.msra.mxu0 0.0
        %3026 = vmatprep.subr.mxu0 0.0
        %3027 = vmatpush1.msra.mxu0 0.0
        %3028 = vmatprep.subr.mxu0 0.0
        %3029 = vmatpush1.msra.mxu0 0.0
        %3030 = vmatprep.subr.mxu0 0.0
        %3031 = vmatpush1.msra.mxu0 0.0
        %3032 = vmatprep.subr.mxu0 0.0
        %3033 = vmatpush1.msra.mxu0 0.0
        %3034 = vmatprep.subr.mxu0 0.0
        %3035 = vmatpush1.msra.mxu0 0.0
        %3036 = vmatprep.subr.mxu0 0.0
        %3037 = vmatpush1.msra.mxu0 0.0
        %3038 = vmatprep.subr.mxu0 0.0
        %3039 = vmatpush1.msra.mxu0 0.0
        %3040 = vmatprep.subr.mxu0 0.0
        %3041 = vmatpush1.msra.mxu0 0.0
        %3042 = vmatprep.mubr.f32.mxu0 0.0
        %3043 = vmatmul.mubr.f32.gmra.mrb[0].mxu0 %v2974
        %v3044 = vpop.f32.mrb[0].mxu0
        %v3045 = vadd.f32 0.0, %v3044
        %v3046 = vpop.f32.mrb[0].mxu0
        %3047 = vmatprep.mubr.f32.mxu0 0.0
        %3048 = vmatmul.mubr.f32.gmra.mrb[0].mxu0 %v2976
        %v3049 = vpop.f32.mrb[0].mxu0
        %v3050 = vadd.f32 0.0, %v3049
        %v3051 = vpop.f32.mrb[0].mxu0
        %3052 = vdwg.mxu0
        %v3053 = vadd.f32 %v2956, %v3045
        %v3054 = vadd.f32 %v2961, %v3050
        %3055 = vrot.lane.b32.xlu0 %v2754, 104
        %v3056 = vpop.permute.xlu0 %3055
        %3057 = vrot.lane.b32.xlu0 %v2755, 104
        %v3058 = vpop.permute.xlu0 %3057
        %3059 = vrot.lane.b32.xlu0 %v2784, 2
        %v3060 = vpop.permute.xlu0 %3059
        %3061 = vrot.lane.b32.xlu0 %v2785, 2
        %v3062 = vpop.permute.xlu0 %3061
        %v3063 = vsel %vm639, %v3060, %v3062
        %v3065 = vsel %vm465, %v3056, 0
        %v3067 = vsel %vm465, %v3058, 0
        %3069 = vmatprep.subr.mxu0 0.0
        %3070 = vmatpush1.msra.mxu0 %v3063
        %3071 = vmatprep.subr.mxu0 0.0
        %3072 = vmatpush1.msra.mxu0 0.0
        %3073 = vmatprep.subr.mxu0 0.0
        %3074 = vmatpush1.msra.mxu0 0.0
        %3075 = vmatprep.subr.mxu0 0.0
        %3076 = vmatpush1.msra.mxu0 0.0
        %3077 = vmatprep.subr.mxu0 0.0
        %3078 = vmatpush1.msra.mxu0 0.0
        %3079 = vmatprep.subr.mxu0 0.0
        %3080 = vmatpush1.msra.mxu0 0.0
        %3081 = vmatprep.subr.mxu0 0.0
        %3082 = vmatpush1.msra.mxu0 0.0
        %3083 = vmatprep.subr.mxu0 0.0
        %3084 = vmatpush1.msra.mxu0 0.0
        %3085 = vmatprep.subr.mxu0 0.0
        %3086 = vmatpush1.msra.mxu0 0.0
        %3087 = vmatprep.subr.mxu0 0.0
        %3088 = vmatpush1.msra.mxu0 0.0
        %3089 = vmatprep.subr.mxu0 0.0
        %3090 = vmatpush1.msra.mxu0 0.0
        %3091 = vmatprep.subr.mxu0 0.0
        %3092 = vmatpush1.msra.mxu0 0.0
        %3093 = vmatprep.subr.mxu0 0.0
        %3094 = vmatpush1.msra.mxu0 0.0
        %3095 = vmatprep.subr.mxu0 0.0
        %3096 = vmatpush1.msra.mxu0 0.0
        %3097 = vmatprep.subr.mxu0 0.0
        %3098 = vmatpush1.msra.mxu0 0.0
        %3099 = vmatprep.subr.mxu0 0.0
        %3100 = vmatpush1.msra.mxu0 0.0
        %3101 = vmatprep.subr.mxu0 0.0
        %3102 = vmatpush1.msra.mxu0 0.0
        %3103 = vmatprep.subr.mxu0 0.0
        %3104 = vmatpush1.msra.mxu0 0.0
        %3105 = vmatprep.subr.mxu0 0.0
        %3106 = vmatpush1.msra.mxu0 0.0
        %3107 = vmatprep.subr.mxu0 0.0
        %3108 = vmatpush1.msra.mxu0 0.0
        %3109 = vmatprep.subr.mxu0 0.0
        %3110 = vmatpush1.msra.mxu0 0.0
        %3111 = vmatprep.subr.mxu0 0.0
        %3112 = vmatpush1.msra.mxu0 0.0
        %3113 = vmatprep.subr.mxu0 0.0
        %3114 = vmatpush1.msra.mxu0 0.0
        %3115 = vmatprep.subr.mxu0 0.0
        %3116 = vmatpush1.msra.mxu0 0.0
        %3117 = vmatprep.subr.mxu0 0.0
        %3118 = vmatpush1.msra.mxu0 0.0
        %3119 = vmatprep.subr.mxu0 0.0
        %3120 = vmatpush1.msra.mxu0 0.0
        %3121 = vmatprep.subr.mxu0 0.0
        %3122 = vmatpush1.msra.mxu0 0.0
        %3123 = vmatprep.subr.mxu0 0.0
        %3124 = vmatpush1.msra.mxu0 0.0
        %3125 = vmatprep.subr.mxu0 0.0
        %3126 = vmatpush1.msra.mxu0 0.0
        %3127 = vmatprep.subr.mxu0 0.0
        %3128 = vmatpush1.msra.mxu0 0.0
        %3129 = vmatprep.subr.mxu0 0.0
        %3130 = vmatpush1.msra.mxu0 0.0
        %3131 = vmatprep.subr.mxu0 0.0
        %3132 = vmatpush1.msra.mxu0 0.0
        %3133 = vmatprep.mubr.f32.mxu0 0.0
        %3134 = vmatmul.mubr.f32.gmra.mrb[0].mxu0 %v3065
        %v3135 = vpop.f32.mrb[0].mxu0
        %v3136 = vadd.f32 0.0, %v3135
        %v3137 = vpop.f32.mrb[0].mxu0
        %3138 = vmatprep.mubr.f32.mxu0 0.0
        %3139 = vmatmul.mubr.f32.gmra.mrb[0].mxu0 %v3067
        %v3140 = vpop.f32.mrb[0].mxu0
        %v3141 = vadd.f32 0.0, %v3140
        %v3142 = vpop.f32.mrb[0].mxu0
        %3143 = vdwg.mxu0
        %v3144 = vadd.f32 %v3053, %v3136
        %v3145 = vadd.f32 %v3054, %v3141
        %3146 = vrot.lane.b32.xlu0 %v2754, 96
        %v3147 = vpop.permute.xlu0 %3146
        %3148 = vrot.lane.b32.xlu0 %v2755, 96
        %v3149 = vpop.permute.xlu0 %3148
        %v3150 = vsel %vm465, %v3147, 0
        %v3152 = vsel %vm465, %v3149, 0
        %3154 = vmatprep.subr.mxu0 0.0
        %3155 = vmatpush1.msra.mxu0 %v2785
        %3156 = vmatprep.subr.mxu0 0.0
        %3157 = vmatpush1.msra.mxu0 0.0
        %3158 = vmatprep.subr.mxu0 0.0
        %3159 = vmatpush1.msra.mxu0 0.0
        %3160 = vmatprep.subr.mxu0 0.0
        %3161 = vmatpush1.msra.mxu0 0.0
        %3162 = vmatprep.subr.mxu0 0.0
        %3163 = vmatpush1.msra.mxu0 0.0
        %3164 = vmatprep.subr.mxu0 0.0
        %3165 = vmatpush1.msra.mxu0 0.0
        %3166 = vmatprep.subr.mxu0 0.0
        %3167 = vmatpush1.msra.mxu0 0.0
        %3168 = vmatprep.subr.mxu0 0.0
        %3169 = vmatpush1.msra.mxu0 0.0
        %3170 = vmatprep.subr.mxu0 0.0
        %3171 = vmatpush1.msra.mxu0 0.0
        %3172 = vmatprep.subr.mxu0 0.0
        %3173 = vmatpush1.msra.mxu0 0.0
        %3174 = vmatprep.subr.mxu0 0.0
        %3175 = vmatpush1.msra.mxu0 0.0
        %3176 = vmatprep.subr.mxu0 0.0
        %3177 = vmatpush1.msra.mxu0 0.0
        %3178 = vmatprep.subr.mxu0 0.0
        %3179 = vmatpush1.msra.mxu0 0.0
        %3180 = vmatprep.subr.mxu0 0.0
        %3181 = vmatpush1.msra.mxu0 0.0
        %3182 = vmatprep.subr.mxu0 0.0
        %3183 = vmatpush1.msra.mxu0 0.0
        %3184 = vmatprep.subr.mxu0 0.0
        %3185 = vmatpush1.msra.mxu0 0.0
        %3186 = vmatprep.subr.mxu0 0.0
        %3187 = vmatpush1.msra.mxu0 0.0
        %3188 = vmatprep.subr.mxu0 0.0
        %3189 = vmatpush1.msra.mxu0 0.0
        %3190 = vmatprep.subr.mxu0 0.0
        %3191 = vmatpush1.msra.mxu0 0.0
        %3192 = vmatprep.subr.mxu0 0.0
        %3193 = vmatpush1.msra.mxu0 0.0
        %3194 = vmatprep.subr.mxu0 0.0
        %3195 = vmatpush1.msra.mxu0 0.0
        %3196 = vmatprep.subr.mxu0 0.0
        %3197 = vmatpush1.msra.mxu0 0.0
        %3198 = vmatprep.subr.mxu0 0.0
        %3199 = vmatpush1.msra.mxu0 0.0
        %3200 = vmatprep.subr.mxu0 0.0
        %3201 = vmatpush1.msra.mxu0 0.0
        %3202 = vmatprep.subr.mxu0 0.0
        %3203 = vmatpush1.msra.mxu0 0.0
        %3204 = vmatprep.subr.mxu0 0.0
        %3205 = vmatpush1.msra.mxu0 0.0
        %3206 = vmatprep.subr.mxu0 0.0
        %3207 = vmatpush1.msra.mxu0 0.0
        %3208 = vmatprep.subr.mxu0 0.0
        %3209 = vmatpush1.msra.mxu0 0.0
        %3210 = vmatprep.subr.mxu0 0.0
        %3211 = vmatpush1.msra.mxu0 0.0
        %3212 = vmatprep.subr.mxu0 0.0
        %3213 = vmatpush1.msra.mxu0 0.0
        %3214 = vmatprep.subr.mxu0 0.0
        %3215 = vmatpush1.msra.mxu0 0.0
        %3216 = vmatprep.subr.mxu0 0.0
        %3217 = vmatpush1.msra.mxu0 0.0
        %3218 = vmatprep.mubr.f32.mxu0 0.0
        %3219 = vmatmul.mubr.f32.gmra.mrb[0].mxu0 %v3150
        %v3220 = vpop.f32.mrb[0].mxu0
        %v3221 = vadd.f32 0.0, %v3220
        %v3222 = vpop.f32.mrb[0].mxu0
        %3223 = vmatprep.mubr.f32.mxu0 0.0
        %3224 = vmatmul.mubr.f32.gmra.mrb[0].mxu0 %v3152
        %v3225 = vpop.f32.mrb[0].mxu0
        %v3226 = vadd.f32 0.0, %v3225
        %v3227 = vpop.f32.mrb[0].mxu0
        %3228 = vdwg.mxu0
        %v3229 = vadd.f32 %v3144, %v3221
        %v3230 = vadd.f32 %v3145, %v3226
        %3232 = vset.pattern.permute.xlu0 0
        %3233 = vperm.xlu0 %3232, %v2757
        %v3234 = vpop.permute.xlu0 %3233
        %3237 = vset.pattern.permute.xlu0 0
        %3238 = vperm.xlu0 %3237, %v2758
        %v3239 = vpop.permute.xlu0 %3238
        %v3241 = vadd.f32 %v3229, %v3234
        %v3242 = vadd.f32 %v3230, %v3239
        %v3243 = vtanh.pop %v3241
        %v3244 = vxor.u32 %v3242, 2147483648
        %v3245 = vmul.f32 %v3244, 1.442695
        %v3246 = vpow.pop %v3245
        %v3247 = vadd.f32 %v3246, 1.0
        %v3248 = vrcp.pop %v3247
        %v3249 = vmul.f32 1.0, %v3248
        %v3250 = vmul.f32 %v3243, %v3249
        %3252 = vset.pattern.permute.xlu0 0
        %3253 = vperm.xlu0 %3252, %v2762
        %v3254 = vpop.permute.xlu0 %3253
        %v3257 = vsel %vm465, %v2760, 0
        %3259 = vmatprep.subr.mxu0 0.0
        %3260 = vmatpush1.msra.mxu0 %v3250
        %3261 = vmatprep.subr.mxu0 0.0
        %3262 = vmatpush1.msra.mxu0 0.0
        %3263 = vmatprep.subr.mxu0 0.0
        %3264 = vmatpush1.msra.mxu0 0.0
        %3265 = vmatprep.subr.mxu0 0.0
        %3266 = vmatpush1.msra.mxu0 0.0
        %3267 = vmatprep.subr.mxu0 0.0
        %3268 = vmatpush1.msra.mxu0 0.0
        %3269 = vmatprep.subr.mxu0 0.0
        %3270 = vmatpush1.msra.mxu0 0.0
        %3271 = vmatprep.subr.mxu0 0.0
        %3272 = vmatpush1.msra.mxu0 0.0
        %3273 = vmatprep.subr.mxu0 0.0
        %3274 = vmatpush1.msra.mxu0 0.0
        %3275 = vmatprep.subr.mxu0 0.0
        %3276 = vmatpush1.msra.mxu0 0.0
        %3277 = vmatprep.subr.mxu0 0.0
        %3278 = vmatpush1.msra.mxu0 0.0
        %3279 = vmatprep.subr.mxu0 0.0
        %3280 = vmatpush1.msra.mxu0 0.0
        %3281 = vmatprep.subr.mxu0 0.0
        %3282 = vmatpush1.msra.mxu0 0.0
        %3283 = vmatprep.subr.mxu0 0.0
        %3284 = vmatpush1.msra.mxu0 0.0
        %3285 = vmatprep.subr.mxu0 0.0
        %3286 = vmatpush1.msra.mxu0 0.0
        %3287 = vmatprep.subr.mxu0 0.0
        %3288 = vmatpush1.msra.mxu0 0.0
        %3289 = vmatprep.subr.mxu0 0.0
        %3290 = vmatpush1.msra.mxu0 0.0
        %3291 = vmatprep.subr.mxu0 0.0
        %3292 = vmatpush1.msra.mxu0 0.0
        %3293 = vmatprep.subr.mxu0 0.0
        %3294 = vmatpush1.msra.mxu0 0.0
        %3295 = vmatprep.subr.mxu0 0.0
        %3296 = vmatpush1.msra.mxu0 0.0
        %3297 = vmatprep.subr.mxu0 0.0
        %3298 = vmatpush1.msra.mxu0 0.0
        %3299 = vmatprep.subr.mxu0 0.0
        %3300 = vmatpush1.msra.mxu0 0.0
        %3301 = vmatprep.subr.mxu0 0.0
        %3302 = vmatpush1.msra.mxu0 0.0
        %3303 = vmatprep.subr.mxu0 0.0
        %3304 = vmatpush1.msra.mxu0 0.0
        %3305 = vmatprep.subr.mxu0 0.0
        %3306 = vmatpush1.msra.mxu0 0.0
        %3307 = vmatprep.subr.mxu0 0.0
        %3308 = vmatpush1.msra.mxu0 0.0
        %3309 = vmatprep.subr.mxu0 0.0
        %3310 = vmatpush1.msra.mxu0 0.0
        %3311 = vmatprep.subr.mxu0 0.0
        %3312 = vmatpush1.msra.mxu0 0.0
        %3313 = vmatprep.subr.mxu0 0.0
        %3314 = vmatpush1.msra.mxu0 0.0
        %3315 = vmatprep.subr.mxu0 0.0
        %3316 = vmatpush1.msra.mxu0 0.0
        %3317 = vmatprep.subr.mxu0 0.0
        %3318 = vmatpush1.msra.mxu0 0.0
        %3319 = vmatprep.subr.mxu0 0.0
        %3320 = vmatpush1.msra.mxu0 0.0
        %3321 = vmatprep.subr.mxu0 0.0
        %3322 = vmatpush1.msra.mxu0 0.0
        %3323 = vmatprep.mubr.f32.mxu0 0.0
        %3324 = vmatmul.mubr.f32.gmra.mrb[0].mxu0 %v3257
        %v3325 = vpop.f32.mrb[0].mxu0
        %v3326 = vadd.f32 %v3254, %v3325
        %v3327 = vpop.f32.mrb[0].mxu0
        %3328 = vdwg.mxu0
        %v3329 = vadd.f32 %v2747, %v3326
        %v3330 = vadd.f32 %v3326, %v2748
        %s3331 = scalar_lea.vmem %s1, 40
        %v3332 = vld [vmem:[%s3331] sm:$0xff]
        %s3333 = scalar_lea.vmem %s2, 40
        %v3334 = vld [vmem:[%s3333] sm:$0xff]
        %s3335 = scalar_lea.vmem %s3, 80
        %v3336 = vld [vmem:[%s3335] sm:$0xff]
        %v3337 = vld [vmem:[%s3335 + $0x8] sm:$0xff]
        %s3338 = scalar_lea.vmem %s4, 80
        %v3339 = vld [vmem:[%s3338] sm:$0xff]
        %v3340 = vld [vmem:[%s3338 + $0x8] sm:$0xff]
        %s3341 = scalar_lea.vmem %s5, 40
        %v3342 = vld [vmem:[%s3341] sm:$0x1f]
        %s3343 = scalar_lea.vmem %s6, 40
        %v3344 = vld [vmem:[%s3343] sm:$0x1f]
        %3346 = vset.pattern.permute.xlu0 0
        %3347 = vperm.xlu0 %3346, %v3332
        %v3348 = vpop.permute.xlu0 %3347
        %v3350 = vlaneseq
        %v3351 = vshrl.u32 %v3350, 7
        %v3352 = vsub.s32 4, %v3351
        %v3353 = vrot.slane %v3330, %v3352
        %v3354 = vmul.f32 %v3348, %v3353
        %3356 = vset.pattern.permute.xlu0 0
        %3357 = vperm.xlu0 %3356, %v3334
        %v3358 = vpop.permute.xlu0 %3357
        %v3360 = vadd.f32 %v3354, %v3358
        %s3361 = scalar_lea.vmem [#allocation3], 40
        %v3362 = vld [vmem:[%s3361] sm:$0xff]
        %3363 = vst [vmem:[#allocation2] sm:$0xff] %v3362
        %3364 = vst [vmem:[#allocation2 + $0x8] sm:$0xff] %v3360
        %3365 = vst [vmem:[%s3361] sm:$0xff] %v3360
        %v3366 = vld [vmem:[#allocation2] sm:$0xff]
        %v3367 = vld [vmem:[#allocation2 + $0x8] sm:$0xff]
        %3370 = vrot.lane.b32.xlu0 %v3336, 120
        %v3371 = vpop.permute.xlu0 %3370
        %3372 = vrot.lane.b32.xlu0 %v3337, 120
        %v3373 = vpop.permute.xlu0 %3372
        %3376 = vrot.lane.b32.xlu0 %v3366, 12
        %v3377 = vpop.permute.xlu0 %3376
        %3378 = vrot.lane.b32.xlu0 %v3367, 12
        %v3379 = vpop.permute.xlu0 %3378
        %v3380 = vsel %vm1632, %v3377, %v3379
        %v3382 = vsel %vm465, %v3371, 0
        %v3384 = vsel %vm465, %v3373, 0
        %3386 = vmatprep.subr.mxu0 0.0
        %3387 = vmatpush1.msra.mxu0 %v3380
        %3388 = vmatprep.subr.mxu0 0.0
        %3389 = vmatpush1.msra.mxu0 0.0
        %3390 = vmatprep.subr.mxu0 0.0
        %3391 = vmatpush1.msra.mxu0 0.0
        %3392 = vmatprep.subr.mxu0 0.0
        %3393 = vmatpush1.msra.mxu0 0.0
        %3394 = vmatprep.subr.mxu0 0.0
        %3395 = vmatpush1.msra.mxu0 0.0
        %3396 = vmatprep.subr.mxu0 0.0
        %3397 = vmatpush1.msra.mxu0 0.0
        %3398 = vmatprep.subr.mxu0 0.0
        %3399 = vmatpush1.msra.mxu0 0.0
        %3400 = vmatprep.subr.mxu0 0.0
        %3401 = vmatpush1.msra.mxu0 0.0
        %3402 = vmatprep.subr.mxu0 0.0
        %3403 = vmatpush1.msra.mxu0 0.0
        %3404 = vmatprep.subr.mxu0 0.0
        %3405 = vmatpush1.msra.mxu0 0.0
        %3406 = vmatprep.subr.mxu0 0.0
        %3407 = vmatpush1.msra.mxu0 0.0
        %3408 = vmatprep.subr.mxu0 0.0
        %3409 = vmatpush1.msra.mxu0 0.0
        %3410 = vmatprep.subr.mxu0 0.0
        %3411 = vmatpush1.msra.mxu0 0.0
        %3412 = vmatprep.subr.mxu0 0.0
        %3413 = vmatpush1.msra.mxu0 0.0
        %3414 = vmatprep.subr.mxu0 0.0
        %3415 = vmatpush1.msra.mxu0 0.0
        %3416 = vmatprep.subr.mxu0 0.0
        %3417 = vmatpush1.msra.mxu0 0.0
        %3418 = vmatprep.subr.mxu0 0.0
        %3419 = vmatpush1.msra.mxu0 0.0
        %3420 = vmatprep.subr.mxu0 0.0
        %3421 = vmatpush1.msra.mxu0 0.0
        %3422 = vmatprep.subr.mxu0 0.0
        %3423 = vmatpush1.msra.mxu0 0.0
        %3424 = vmatprep.subr.mxu0 0.0
        %3425 = vmatpush1.msra.mxu0 0.0
        %3426 = vmatprep.subr.mxu0 0.0
        %3427 = vmatpush1.msra.mxu0 0.0
        %3428 = vmatprep.subr.mxu0 0.0
        %3429 = vmatpush1.msra.mxu0 0.0
        %3430 = vmatprep.subr.mxu0 0.0
        %3431 = vmatpush1.msra.mxu0 0.0
        %3432 = vmatprep.subr.mxu0 0.0
        %3433 = vmatpush1.msra.mxu0 0.0
        %3434 = vmatprep.subr.mxu0 0.0
        %3435 = vmatpush1.msra.mxu0 0.0
        %3436 = vmatprep.subr.mxu0 0.0
        %3437 = vmatpush1.msra.mxu0 0.0
        %3438 = vmatprep.subr.mxu0 0.0
        %3439 = vmatpush1.msra.mxu0 0.0
        %3440 = vmatprep.subr.mxu0 0.0
        %3441 = vmatpush1.msra.mxu0 0.0
        %3442 = vmatprep.subr.mxu0 0.0
        %3443 = vmatpush1.msra.mxu0 0.0
        %3444 = vmatprep.subr.mxu0 0.0
        %3445 = vmatpush1.msra.mxu0 0.0
        %3446 = vmatprep.subr.mxu0 0.0
        %3447 = vmatpush1.msra.mxu0 0.0
        %3448 = vmatprep.subr.mxu0 0.0
        %3449 = vmatpush1.msra.mxu0 0.0
        %3450 = vmatprep.mubr.f32.mxu0 0.0
        %3451 = vmatmul.mubr.f32.gmra.mrb[0].mxu0 %v3382
        %v3452 = vpop.f32.mrb[0].mxu0
        %v3453 = vadd.f32 0.0, %v3452
        %v3454 = vpop.f32.mrb[0].mxu0
        %3455 = vmatprep.mubr.f32.mxu0 0.0
        %3456 = vmatmul.mubr.f32.gmra.mrb[0].mxu0 %v3384
        %v3457 = vpop.f32.mrb[0].mxu0
        %v3458 = vadd.f32 0.0, %v3457
        %v3459 = vpop.f32.mrb[0].mxu0
        %3460 = vdwg.mxu0
        %3461 = vrot.lane.b32.xlu0 %v3366, 16
        %v3462 = vpop.permute.xlu0 %3461
        %3463 = vrot.lane.b32.xlu0 %v3367, 16
        %v3464 = vpop.permute.xlu0 %3463
        %v3465 = vsel %vm1718, %v3462, %v3464
        %v3467 = vsel %vm465, %v3336, 0
        %v3469 = vsel %vm465, %v3337, 0
        %3471 = vmatprep.subr.mxu0 0.0
        %3472 = vmatpush1.msra.mxu0 %v3465
        %3473 = vmatprep.subr.mxu0 0.0
        %3474 = vmatpush1.msra.mxu0 0.0
        %3475 = vmatprep.subr.mxu0 0.0
        %3476 = vmatpush1.msra.mxu0 0.0
        %3477 = vmatprep.subr.mxu0 0.0
        %3478 = vmatpush1.msra.mxu0 0.0
        %3479 = vmatprep.subr.mxu0 0.0
        %3480 = vmatpush1.msra.mxu0 0.0
        %3481 = vmatprep.subr.mxu0 0.0
        %3482 = vmatpush1.msra.mxu0 0.0
        %3483 = vmatprep.subr.mxu0 0.0
        %3484 = vmatpush1.msra.mxu0 0.0
        %3485 = vmatprep.subr.mxu0 0.0
        %3486 = vmatpush1.msra.mxu0 0.0
        %3487 = vmatprep.subr.mxu0 0.0
        %3488 = vmatpush1.msra.mxu0 0.0
        %3489 = vmatprep.subr.mxu0 0.0
        %3490 = vmatpush1.msra.mxu0 0.0
        %3491 = vmatprep.subr.mxu0 0.0
        %3492 = vmatpush1.msra.mxu0 0.0
        %3493 = vmatprep.subr.mxu0 0.0
        %3494 = vmatpush1.msra.mxu0 0.0
        %3495 = vmatprep.subr.mxu0 0.0
        %3496 = vmatpush1.msra.mxu0 0.0
        %3497 = vmatprep.subr.mxu0 0.0
        %3498 = vmatpush1.msra.mxu0 0.0
        %3499 = vmatprep.subr.mxu0 0.0
        %3500 = vmatpush1.msra.mxu0 0.0
        %3501 = vmatprep.subr.mxu0 0.0
        %3502 = vmatpush1.msra.mxu0 0.0
        %3503 = vmatprep.subr.mxu0 0.0
        %3504 = vmatpush1.msra.mxu0 0.0
        %3505 = vmatprep.subr.mxu0 0.0
        %3506 = vmatpush1.msra.mxu0 0.0
        %3507 = vmatprep.subr.mxu0 0.0
        %3508 = vmatpush1.msra.mxu0 0.0
        %3509 = vmatprep.subr.mxu0 0.0
        %3510 = vmatpush1.msra.mxu0 0.0
        %3511 = vmatprep.subr.mxu0 0.0
        %3512 = vmatpush1.msra.mxu0 0.0
        %3513 = vmatprep.subr.mxu0 0.0
        %3514 = vmatpush1.msra.mxu0 0.0
        %3515 = vmatprep.subr.mxu0 0.0
        %3516 = vmatpush1.msra.mxu0 0.0
        %3517 = vmatprep.subr.mxu0 0.0
        %3518 = vmatpush1.msra.mxu0 0.0
        %3519 = vmatprep.subr.mxu0 0.0
        %3520 = vmatpush1.msra.mxu0 0.0
        %3521 = vmatprep.subr.mxu0 0.0
        %3522 = vmatpush1.msra.mxu0 0.0
        %3523 = vmatprep.subr.mxu0 0.0
        %3524 = vmatpush1.msra.mxu0 0.0
        %3525 = vmatprep.subr.mxu0 0.0
        %3526 = vmatpush1.msra.mxu0 0.0
        %3527 = vmatprep.subr.mxu0 0.0
        %3528 = vmatpush1.msra.mxu0 0.0
        %3529 = vmatprep.subr.mxu0 0.0
        %3530 = vmatpush1.msra.mxu0 0.0
        %3531 = vmatprep.subr.mxu0 0.0
        %3532 = vmatpush1.msra.mxu0 0.0
        %3533 = vmatprep.subr.mxu0 0.0
        %3534 = vmatpush1.msra.mxu0 0.0
        %3535 = vmatprep.mubr.f32.mxu0 0.0
        %3536 = vmatmul.mubr.f32.gmra.mrb[0].mxu0 %v3467
        %v3537 = vpop.f32.mrb[0].mxu0
        %v3538 = vadd.f32 %v3453, %v3537
        %v3539 = vpop.f32.mrb[0].mxu0
        %3540 = vmatprep.mubr.f32.mxu0 0.0
        %3541 = vmatmul.mubr.f32.gmra.mrb[0].mxu0 %v3469
        %v3542 = vpop.f32.mrb[0].mxu0
        %v3543 = vadd.f32 %v3458, %v3542
        %v3544 = vpop.f32.mrb[0].mxu0
        %3545 = vdwg.mxu0
        %3546 = vrot.lane.b32.xlu0 %v3336, 112
        %v3547 = vpop.permute.xlu0 %3546
        %3548 = vrot.lane.b32.xlu0 %v3337, 112
        %v3549 = vpop.permute.xlu0 %3548
        %3550 = vrot.lane.b32.xlu0 %v3366, 8
        %v3551 = vpop.permute.xlu0 %3550
        %3552 = vrot.lane.b32.xlu0 %v3367, 8
        %v3553 = vpop.permute.xlu0 %3552
        %v3554 = vsel %vm465, %v3551, %v3553
        %v3556 = vsel %vm465, %v3547, 0
        %v3558 = vsel %vm465, %v3549, 0
        %3560 = vmatprep.subr.mxu0 0.0
        %3561 = vmatpush1.msra.mxu0 %v3554
        %3562 = vmatprep.subr.mxu0 0.0
        %3563 = vmatpush1.msra.mxu0 0.0
        %3564 = vmatprep.subr.mxu0 0.0
        %3565 = vmatpush1.msra.mxu0 0.0
        %3566 = vmatprep.subr.mxu0 0.0
        %3567 = vmatpush1.msra.mxu0 0.0
        %3568 = vmatprep.subr.mxu0 0.0
        %3569 = vmatpush1.msra.mxu0 0.0
        %3570 = vmatprep.subr.mxu0 0.0
        %3571 = vmatpush1.msra.mxu0 0.0
        %3572 = vmatprep.subr.mxu0 0.0
        %3573 = vmatpush1.msra.mxu0 0.0
        %3574 = vmatprep.subr.mxu0 0.0
        %3575 = vmatpush1.msra.mxu0 0.0
        %3576 = vmatprep.subr.mxu0 0.0
        %3577 = vmatpush1.msra.mxu0 0.0
        %3578 = vmatprep.subr.mxu0 0.0
        %3579 = vmatpush1.msra.mxu0 0.0
        %3580 = vmatprep.subr.mxu0 0.0
        %3581 = vmatpush1.msra.mxu0 0.0
        %3582 = vmatprep.subr.mxu0 0.0
        %3583 = vmatpush1.msra.mxu0 0.0
        %3584 = vmatprep.subr.mxu0 0.0
        %3585 = vmatpush1.msra.mxu0 0.0
        %3586 = vmatprep.subr.mxu0 0.0
        %3587 = vmatpush1.msra.mxu0 0.0
        %3588 = vmatprep.subr.mxu0 0.0
        %3589 = vmatpush1.msra.mxu0 0.0
        %3590 = vmatprep.subr.mxu0 0.0
        %3591 = vmatpush1.msra.mxu0 0.0
        %3592 = vmatprep.subr.mxu0 0.0
        %3593 = vmatpush1.msra.mxu0 0.0
        %3594 = vmatprep.subr.mxu0 0.0
        %3595 = vmatpush1.msra.mxu0 0.0
        %3596 = vmatprep.subr.mxu0 0.0
        %3597 = vmatpush1.msra.mxu0 0.0
        %3598 = vmatprep.subr.mxu0 0.0
        %3599 = vmatpush1.msra.mxu0 0.0
        %3600 = vmatprep.subr.mxu0 0.0
        %3601 = vmatpush1.msra.mxu0 0.0
        %3602 = vmatprep.subr.mxu0 0.0
        %3603 = vmatpush1.msra.mxu0 0.0
        %3604 = vmatprep.subr.mxu0 0.0
        %3605 = vmatpush1.msra.mxu0 0.0
        %3606 = vmatprep.subr.mxu0 0.0
        %3607 = vmatpush1.msra.mxu0 0.0
        %3608 = vmatprep.subr.mxu0 0.0
        %3609 = vmatpush1.msra.mxu0 0.0
        %3610 = vmatprep.subr.mxu0 0.0
        %3611 = vmatpush1.msra.mxu0 0.0
        %3612 = vmatprep.subr.mxu0 0.0
        %3613 = vmatpush1.msra.mxu0 0.0
        %3614 = vmatprep.subr.mxu0 0.0
        %3615 = vmatpush1.msra.mxu0 0.0
        %3616 = vmatprep.subr.mxu0 0.0
        %3617 = vmatpush1.msra.mxu0 0.0
        %3618 = vmatprep.subr.mxu0 0.0
        %3619 = vmatpush1.msra.mxu0 0.0
        %3620 = vmatprep.subr.mxu0 0.0
        %3621 = vmatpush1.msra.mxu0 0.0
        %3622 = vmatprep.subr.mxu0 0.0
        %3623 = vmatpush1.msra.mxu0 0.0
        %3624 = vmatprep.mubr.f32.mxu0 0.0
        %3625 = vmatmul.mubr.f32.gmra.mrb[0].mxu0 %v3556
        %v3626 = vpop.f32.mrb[0].mxu0
        %v3627 = vadd.f32 0.0, %v3626
        %v3628 = vpop.f32.mrb[0].mxu0
        %3629 = vmatprep.mubr.f32.mxu0 0.0
        %3630 = vmatmul.mubr.f32.gmra.mrb[0].mxu0 %v3558
        %v3631 = vpop.f32.mrb[0].mxu0
        %v3632 = vadd.f32 0.0, %v3631
        %v3633 = vpop.f32.mrb[0].mxu0
        %3634 = vdwg.mxu0
        %v3635 = vadd.f32 %v3538, %v3627
        %v3636 = vadd.f32 %v3543, %v3632
        %3637 = vrot.lane.b32.xlu0 %v3336, 104
        %v3638 = vpop.permute.xlu0 %3637
        %3639 = vrot.lane.b32.xlu0 %v3337, 104
        %v3640 = vpop.permute.xlu0 %3639
        %3641 = vrot.lane.b32.xlu0 %v3366, 4
        %v3642 = vpop.permute.xlu0 %3641
        %3643 = vrot.lane.b32.xlu0 %v3367, 4
        %v3644 = vpop.permute.xlu0 %3643
        %v3645 = vsel %vm549, %v3642, %v3644
        %v3647 = vsel %vm465, %v3638, 0
        %v3649 = vsel %vm465, %v3640, 0
        %3651 = vmatprep.subr.mxu0 0.0
        %3652 = vmatpush1.msra.mxu0 %v3645
        %3653 = vmatprep.subr.mxu0 0.0
        %3654 = vmatpush1.msra.mxu0 0.0
        %3655 = vmatprep.subr.mxu0 0.0
        %3656 = vmatpush1.msra.mxu0 0.0
        %3657 = vmatprep.subr.mxu0 0.0
        %3658 = vmatpush1.msra.mxu0 0.0
        %3659 = vmatprep.subr.mxu0 0.0
        %3660 = vmatpush1.msra.mxu0 0.0
        %3661 = vmatprep.subr.mxu0 0.0
        %3662 = vmatpush1.msra.mxu0 0.0
        %3663 = vmatprep.subr.mxu0 0.0
        %3664 = vmatpush1.msra.mxu0 0.0
        %3665 = vmatprep.subr.mxu0 0.0
        %3666 = vmatpush1.msra.mxu0 0.0
        %3667 = vmatprep.subr.mxu0 0.0
        %3668 = vmatpush1.msra.mxu0 0.0
        %3669 = vmatprep.subr.mxu0 0.0
        %3670 = vmatpush1.msra.mxu0 0.0
        %3671 = vmatprep.subr.mxu0 0.0
        %3672 = vmatpush1.msra.mxu0 0.0
        %3673 = vmatprep.subr.mxu0 0.0
        %3674 = vmatpush1.msra.mxu0 0.0
        %3675 = vmatprep.subr.mxu0 0.0
        %3676 = vmatpush1.msra.mxu0 0.0
        %3677 = vmatprep.subr.mxu0 0.0
        %3678 = vmatpush1.msra.mxu0 0.0
        %3679 = vmatprep.subr.mxu0 0.0
        %3680 = vmatpush1.msra.mxu0 0.0
        %3681 = vmatprep.subr.mxu0 0.0
        %3682 = vmatpush1.msra.mxu0 0.0
        %3683 = vmatprep.subr.mxu0 0.0
        %3684 = vmatpush1.msra.mxu0 0.0
        %3685 = vmatprep.subr.mxu0 0.0
        %3686 = vmatpush1.msra.mxu0 0.0
        %3687 = vmatprep.subr.mxu0 0.0
        %3688 = vmatpush1.msra.mxu0 0.0
        %3689 = vmatprep.subr.mxu0 0.0
        %3690 = vmatpush1.msra.mxu0 0.0
        %3691 = vmatprep.subr.mxu0 0.0
        %3692 = vmatpush1.msra.mxu0 0.0
        %3693 = vmatprep.subr.mxu0 0.0
        %3694 = vmatpush1.msra.mxu0 0.0
        %3695 = vmatprep.subr.mxu0 0.0
        %3696 = vmatpush1.msra.mxu0 0.0
        %3697 = vmatprep.subr.mxu0 0.0
        %3698 = vmatpush1.msra.mxu0 0.0
        %3699 = vmatprep.subr.mxu0 0.0
        %3700 = vmatpush1.msra.mxu0 0.0
        %3701 = vmatprep.subr.mxu0 0.0
        %3702 = vmatpush1.msra.mxu0 0.0
        %3703 = vmatprep.subr.mxu0 0.0
        %3704 = vmatpush1.msra.mxu0 0.0
        %3705 = vmatprep.subr.mxu0 0.0
        %3706 = vmatpush1.msra.mxu0 0.0
        %3707 = vmatprep.subr.mxu0 0.0
        %3708 = vmatpush1.msra.mxu0 0.0
        %3709 = vmatprep.subr.mxu0 0.0
        %3710 = vmatpush1.msra.mxu0 0.0
        %3711 = vmatprep.subr.mxu0 0.0
        %3712 = vmatpush1.msra.mxu0 0.0
        %3713 = vmatprep.subr.mxu0 0.0
        %3714 = vmatpush1.msra.mxu0 0.0
        %3715 = vmatprep.mubr.f32.mxu0 0.0
        %3716 = vmatmul.mubr.f32.gmra.mrb[0].mxu0 %v3647
        %v3717 = vpop.f32.mrb[0].mxu0
        %v3718 = vadd.f32 0.0, %v3717
        %v3719 = vpop.f32.mrb[0].mxu0
        %3720 = vmatprep.mubr.f32.mxu0 0.0
        %3721 = vmatmul.mubr.f32.gmra.mrb[0].mxu0 %v3649
        %v3722 = vpop.f32.mrb[0].mxu0
        %v3723 = vadd.f32 0.0, %v3722
        %v3724 = vpop.f32.mrb[0].mxu0
        %3725 = vdwg.mxu0
        %v3726 = vadd.f32 %v3635, %v3718
        %v3727 = vadd.f32 %v3636, %v3723
        %3728 = vrot.lane.b32.xlu0 %v3336, 96
        %v3729 = vpop.permute.xlu0 %3728
        %3730 = vrot.lane.b32.xlu0 %v3337, 96
        %v3731 = vpop.permute.xlu0 %3730
        %v3732 = vsel %vm465, %v3729, 0
        %v3734 = vsel %vm465, %v3731, 0
        %3736 = vmatprep.subr.mxu0 0.0
        %3737 = vmatpush1.msra.mxu0 %v3367
        %3738 = vmatprep.subr.mxu0 0.0
        %3739 = vmatpush1.msra.mxu0 0.0
        %3740 = vmatprep.subr.mxu0 0.0
        %3741 = vmatpush1.msra.mxu0 0.0
        %3742 = vmatprep.subr.mxu0 0.0
        %3743 = vmatpush1.msra.mxu0 0.0
        %3744 = vmatprep.subr.mxu0 0.0
        %3745 = vmatpush1.msra.mxu0 0.0
        %3746 = vmatprep.subr.mxu0 0.0
        %3747 = vmatpush1.msra.mxu0 0.0
        %3748 = vmatprep.subr.mxu0 0.0
        %3749 = vmatpush1.msra.mxu0 0.0
        %3750 = vmatprep.subr.mxu0 0.0
        %3751 = vmatpush1.msra.mxu0 0.0
        %3752 = vmatprep.subr.mxu0 0.0
        %3753 = vmatpush1.msra.mxu0 0.0
        %3754 = vmatprep.subr.mxu0 0.0
        %3755 = vmatpush1.msra.mxu0 0.0
        %3756 = vmatprep.subr.mxu0 0.0
        %3757 = vmatpush1.msra.mxu0 0.0
        %3758 = vmatprep.subr.mxu0 0.0
        %3759 = vmatpush1.msra.mxu0 0.0
        %3760 = vmatprep.subr.mxu0 0.0
        %3761 = vmatpush1.msra.mxu0 0.0
        %3762 = vmatprep.subr.mxu0 0.0
        %3763 = vmatpush1.msra.mxu0 0.0
        %3764 = vmatprep.subr.mxu0 0.0
        %3765 = vmatpush1.msra.mxu0 0.0
        %3766 = vmatprep.subr.mxu0 0.0
        %3767 = vmatpush1.msra.mxu0 0.0
        %3768 = vmatprep.subr.mxu0 0.0
        %3769 = vmatpush1.msra.mxu0 0.0
        %3770 = vmatprep.subr.mxu0 0.0
        %3771 = vmatpush1.msra.mxu0 0.0
        %3772 = vmatprep.subr.mxu0 0.0
        %3773 = vmatpush1.msra.mxu0 0.0
        %3774 = vmatprep.subr.mxu0 0.0
        %3775 = vmatpush1.msra.mxu0 0.0
        %3776 = vmatprep.subr.mxu0 0.0
        %3777 = vmatpush1.msra.mxu0 0.0
        %3778 = vmatprep.subr.mxu0 0.0
        %3779 = vmatpush1.msra.mxu0 0.0
        %3780 = vmatprep.subr.mxu0 0.0
        %3781 = vmatpush1.msra.mxu0 0.0
        %3782 = vmatprep.subr.mxu0 0.0
        %3783 = vmatpush1.msra.mxu0 0.0
        %3784 = vmatprep.subr.mxu0 0.0
        %3785 = vmatpush1.msra.mxu0 0.0
        %3786 = vmatprep.subr.mxu0 0.0
        %3787 = vmatpush1.msra.mxu0 0.0
        %3788 = vmatprep.subr.mxu0 0.0
        %3789 = vmatpush1.msra.mxu0 0.0
        %3790 = vmatprep.subr.mxu0 0.0
        %3791 = vmatpush1.msra.mxu0 0.0
        %3792 = vmatprep.subr.mxu0 0.0
        %3793 = vmatpush1.msra.mxu0 0.0
        %3794 = vmatprep.subr.mxu0 0.0
        %3795 = vmatpush1.msra.mxu0 0.0
        %3796 = vmatprep.subr.mxu0 0.0
        %3797 = vmatpush1.msra.mxu0 0.0
        %3798 = vmatprep.subr.mxu0 0.0
        %3799 = vmatpush1.msra.mxu0 0.0
        %3800 = vmatprep.mubr.f32.mxu0 0.0
        %3801 = vmatmul.mubr.f32.gmra.mrb[0].mxu0 %v3732
        %v3802 = vpop.f32.mrb[0].mxu0
        %v3803 = vadd.f32 0.0, %v3802
        %v3804 = vpop.f32.mrb[0].mxu0
        %3805 = vmatprep.mubr.f32.mxu0 0.0
        %3806 = vmatmul.mubr.f32.gmra.mrb[0].mxu0 %v3734
        %v3807 = vpop.f32.mrb[0].mxu0
        %v3808 = vadd.f32 0.0, %v3807
        %v3809 = vpop.f32.mrb[0].mxu0
        %3810 = vdwg.mxu0
        %v3811 = vadd.f32 %v3726, %v3803
        %v3812 = vadd.f32 %v3727, %v3808
        %3814 = vset.pattern.permute.xlu0 0
        %3815 = vperm.xlu0 %3814, %v3339
        %v3816 = vpop.permute.xlu0 %3815
        %3819 = vset.pattern.permute.xlu0 0
        %3820 = vperm.xlu0 %3819, %v3340
        %v3821 = vpop.permute.xlu0 %3820
        %v3823 = vadd.f32 %v3811, %v3816
        %v3824 = vadd.f32 %v3812, %v3821
        %v3825 = vtanh.pop %v3823
        %v3826 = vxor.u32 %v3824, 2147483648
        %v3827 = vmul.f32 %v3826, 1.442695
        %v3828 = vpow.pop %v3827
        %v3829 = vadd.f32 %v3828, 1.0
        %v3830 = vrcp.pop %v3829
        %v3831 = vmul.f32 1.0, %v3830
        %v3832 = vmul.f32 %v3825, %v3831
        %3834 = vset.pattern.permute.xlu0 0
        %3835 = vperm.xlu0 %3834, %v3344
        %v3836 = vpop.permute.xlu0 %3835
        %v3839 = vsel %vm465, %v3342, 0
        %3841 = vmatprep.subr.mxu0 0.0
        %3842 = vmatpush1.msra.mxu0 %v3832
        %3843 = vmatprep.subr.mxu0 0.0
        %3844 = vmatpush1.msra.mxu0 0.0
        %3845 = vmatprep.subr.mxu0 0.0
        %3846 = vmatpush1.msra.mxu0 0.0
        %3847 = vmatprep.subr.mxu0 0.0
        %3848 = vmatpush1.msra.mxu0 0.0
        %3849 = vmatprep.subr.mxu0 0.0
        %3850 = vmatpush1.msra.mxu0 0.0
        %3851 = vmatprep.subr.mxu0 0.0
        %3852 = vmatpush1.msra.mxu0 0.0
        %3853 = vmatprep.subr.mxu0 0.0
        %3854 = vmatpush1.msra.mxu0 0.0
        %3855 = vmatprep.subr.mxu0 0.0
        %3856 = vmatpush1.msra.mxu0 0.0
        %3857 = vmatprep.subr.mxu0 0.0
        %3858 = vmatpush1.msra.mxu0 0.0
        %3859 = vmatprep.subr.mxu0 0.0
        %3860 = vmatpush1.msra.mxu0 0.0
        %3861 = vmatprep.subr.mxu0 0.0
        %3862 = vmatpush1.msra.mxu0 0.0
        %3863 = vmatprep.subr.mxu0 0.0
        %3864 = vmatpush1.msra.mxu0 0.0
        %3865 = vmatprep.subr.mxu0 0.0
        %3866 = vmatpush1.msra.mxu0 0.0
        %3867 = vmatprep.subr.mxu0 0.0
        %3868 = vmatpush1.msra.mxu0 0.0
        %3869 = vmatprep.subr.mxu0 0.0
        %3870 = vmatpush1.msra.mxu0 0.0
        %3871 = vmatprep.subr.mxu0 0.0
        %3872 = vmatpush1.msra.mxu0 0.0
        %3873 = vmatprep.subr.mxu0 0.0
        %3874 = vmatpush1.msra.mxu0 0.0
        %3875 = vmatprep.subr.mxu0 0.0
        %3876 = vmatpush1.msra.mxu0 0.0
        %3877 = vmatprep.subr.mxu0 0.0
        %3878 = vmatpush1.msra.mxu0 0.0
        %3879 = vmatprep.subr.mxu0 0.0
        %3880 = vmatpush1.msra.mxu0 0.0
        %3881 = vmatprep.subr.mxu0 0.0
        %3882 = vmatpush1.msra.mxu0 0.0
        %3883 = vmatprep.subr.mxu0 0.0
        %3884 = vmatpush1.msra.mxu0 0.0
        %3885 = vmatprep.subr.mxu0 0.0
        %3886 = vmatpush1.msra.mxu0 0.0
        %3887 = vmatprep.subr.mxu0 0.0
        %3888 = vmatpush1.msra.mxu0 0.0
        %3889 = vmatprep.subr.mxu0 0.0
        %3890 = vmatpush1.msra.mxu0 0.0
        %3891 = vmatprep.subr.mxu0 0.0
        %3892 = vmatpush1.msra.mxu0 0.0
        %3893 = vmatprep.subr.mxu0 0.0
        %3894 = vmatpush1.msra.mxu0 0.0
        %3895 = vmatprep.subr.mxu0 0.0
        %3896 = vmatpush1.msra.mxu0 0.0
        %3897 = vmatprep.subr.mxu0 0.0
        %3898 = vmatpush1.msra.mxu0 0.0
        %3899 = vmatprep.subr.mxu0 0.0
        %3900 = vmatpush1.msra.mxu0 0.0
        %3901 = vmatprep.subr.mxu0 0.0
        %3902 = vmatpush1.msra.mxu0 0.0
        %3903 = vmatprep.subr.mxu0 0.0
        %3904 = vmatpush1.msra.mxu0 0.0
        %3905 = vmatprep.mubr.f32.mxu0 0.0
        %3906 = vmatmul.mubr.f32.gmra.mrb[0].mxu0 %v3839
        %v3907 = vpop.f32.mrb[0].mxu0
        %v3908 = vadd.f32 %v3836, %v3907
        %v3909 = vpop.f32.mrb[0].mxu0
        %3910 = vdwg.mxu0
        %v3911 = vadd.f32 %v3329, %v3908
        %v3912 = vld [vmem:[%s7] sm:$0xf]
        %v3913 = vld [vmem:[%s8] sm:$0xf]
        %3915 = vset.pattern.permute.xlu0 0
        %3916 = vperm.xlu0 %3915, %v3913
        %v3917 = vpop.permute.xlu0 %3916
        %v3920 = vsel %vm549, %v3912, 0
        %vm3922 = vcmask 1043456
        %v3924 = vsel %vm3922, %v3911, 0
        %3926 = vmatprep.subr.mxu0 0.0
        %3927 = vmatpush1.msra.mxu0 %v3924
        %3928 = vmatprep.subr.mxu0 0.0
        %3929 = vmatpush1.msra.mxu0 0.0
        %3930 = vmatprep.subr.mxu0 0.0
        %3931 = vmatpush1.msra.mxu0 0.0
        %3932 = vmatprep.subr.mxu0 0.0
        %3933 = vmatpush1.msra.mxu0 0.0
        %3934 = vmatprep.subr.mxu0 0.0
        %3935 = vmatpush1.msra.mxu0 0.0
        %3936 = vmatprep.subr.mxu0 0.0
        %3937 = vmatpush1.msra.mxu0 0.0
        %3938 = vmatprep.subr.mxu0 0.0
        %3939 = vmatpush1.msra.mxu0 0.0
        %3940 = vmatprep.subr.mxu0 0.0
        %3941 = vmatpush1.msra.mxu0 0.0
        %3942 = vmatprep.subr.mxu0 0.0
        %3943 = vmatpush1.msra.mxu0 0.0
        %3944 = vmatprep.subr.mxu0 0.0
        %3945 = vmatpush1.msra.mxu0 0.0
        %3946 = vmatprep.subr.mxu0 0.0
        %3947 = vmatpush1.msra.mxu0 0.0
        %3948 = vmatprep.subr.mxu0 0.0
        %3949 = vmatpush1.msra.mxu0 0.0
        %3950 = vmatprep.subr.mxu0 0.0
        %3951 = vmatpush1.msra.mxu0 0.0
        %3952 = vmatprep.subr.mxu0 0.0
        %3953 = vmatpush1.msra.mxu0 0.0
        %3954 = vmatprep.subr.mxu0 0.0
        %3955 = vmatpush1.msra.mxu0 0.0
        %3956 = vmatprep.subr.mxu0 0.0
        %3957 = vmatpush1.msra.mxu0 0.0
        %3958 = vmatprep.subr.mxu0 0.0
        %3959 = vmatpush1.msra.mxu0 0.0
        %3960 = vmatprep.subr.mxu0 0.0
        %3961 = vmatpush1.msra.mxu0 0.0
        %3962 = vmatprep.subr.mxu0 0.0
        %3963 = vmatpush1.msra.mxu0 0.0
        %3964 = vmatprep.subr.mxu0 0.0
        %3965 = vmatpush1.msra.mxu0 0.0
        %3966 = vmatprep.subr.mxu0 0.0
        %3967 = vmatpush1.msra.mxu0 0.0
        %3968 = vmatprep.subr.mxu0 0.0
        %3969 = vmatpush1.msra.mxu0 0.0
        %3970 = vmatprep.subr.mxu0 0.0
        %3971 = vmatpush1.msra.mxu0 0.0
        %3972 = vmatprep.subr.mxu0 0.0
        %3973 = vmatpush1.msra.mxu0 0.0
        %3974 = vmatprep.subr.mxu0 0.0
        %3975 = vmatpush1.msra.mxu0 0.0
        %3976 = vmatprep.subr.mxu0 0.0
        %3977 = vmatpush1.msra.mxu0 0.0
        %3978 = vmatprep.subr.mxu0 0.0
        %3979 = vmatpush1.msra.mxu0 0.0
        %3980 = vmatprep.subr.mxu0 0.0
        %3981 = vmatpush1.msra.mxu0 0.0
        %3982 = vmatprep.subr.mxu0 0.0
        %3983 = vmatpush1.msra.mxu0 0.0
        %3984 = vmatprep.subr.mxu0 0.0
        %3985 = vmatpush1.msra.mxu0 0.0
        %3986 = vmatprep.subr.mxu0 0.0
        %3987 = vmatpush1.msra.mxu0 0.0
        %3988 = vmatprep.subr.mxu0 0.0
        %3989 = vmatpush1.msra.mxu0 0.0
        %3990 = vmatprep.mubr.f32.mxu0 0.0
        %3991 = vmatmul.mubr.f32.gmra.mrb[0].mxu0 %v3920
        %v3992 = vpop.f32.mrb[0].mxu0
        %v3993 = vadd.f32 %v3917, %v3992
        %v3994 = vpop.f32.mrb[0].mxu0
        %3995 = vdwg.mxu0
        %v3996 = vmax.f32 %v3993, 0.0
        %v3997 = vld [vmem:[%s9] sm:$0x3]
        %v3998 = vld [vmem:[%s10] sm:$0x3]
        %4000 = vset.pattern.permute.xlu0 0
        %4001 = vperm.xlu0 %4000, %v3998
        %v4002 = vpop.permute.xlu0 %4001
        %v4005 = vsel %vm549, %v3997, 0
        %v4008 = vsel %vm3922, %v3996, 0
        %4010 = vmatprep.subr.mxu0 0.0
        %4011 = vmatpush1.msra.mxu0 %v4008
        %4012 = vmatprep.subr.mxu0 0.0
        %4013 = vmatpush1.msra.mxu0 0.0
        %4014 = vmatprep.subr.mxu0 0.0
        %4015 = vmatpush1.msra.mxu0 0.0
        %4016 = vmatprep.subr.mxu0 0.0
        %4017 = vmatpush1.msra.mxu0 0.0
        %4018 = vmatprep.subr.mxu0 0.0
        %4019 = vmatpush1.msra.mxu0 0.0
        %4020 = vmatprep.subr.mxu0 0.0
        %4021 = vmatpush1.msra.mxu0 0.0
        %4022 = vmatprep.subr.mxu0 0.0
        %4023 = vmatpush1.msra.mxu0 0.0
        %4024 = vmatprep.subr.mxu0 0.0
        %4025 = vmatpush1.msra.mxu0 0.0
        %4026 = vmatprep.subr.mxu0 0.0
        %4027 = vmatpush1.msra.mxu0 0.0
        %4028 = vmatprep.subr.mxu0 0.0
        %4029 = vmatpush1.msra.mxu0 0.0
        %4030 = vmatprep.subr.mxu0 0.0
        %4031 = vmatpush1.msra.mxu0 0.0
        %4032 = vmatprep.subr.mxu0 0.0
        %4033 = vmatpush1.msra.mxu0 0.0
        %4034 = vmatprep.subr.mxu0 0.0
        %4035 = vmatpush1.msra.mxu0 0.0
        %4036 = vmatprep.subr.mxu0 0.0
        %4037 = vmatpush1.msra.mxu0 0.0
        %4038 = vmatprep.subr.mxu0 0.0
        %4039 = vmatpush1.msra.mxu0 0.0
        %4040 = vmatprep.subr.mxu0 0.0
        %4041 = vmatpush1.msra.mxu0 0.0
        %4042 = vmatprep.subr.mxu0 0.0
        %4043 = vmatpush1.msra.mxu0 0.0
        %4044 = vmatprep.subr.mxu0 0.0
        %4045 = vmatpush1.msra.mxu0 0.0
        %4046 = vmatprep.subr.mxu0 0.0
        %4047 = vmatpush1.msra.mxu0 0.0
        %4048 = vmatprep.subr.mxu0 0.0
        %4049 = vmatpush1.msra.mxu0 0.0
        %4050 = vmatprep.subr.mxu0 0.0
        %4051 = vmatpush1.msra.mxu0 0.0
        %4052 = vmatprep.subr.mxu0 0.0
        %4053 = vmatpush1.msra.mxu0 0.0
        %4054 = vmatprep.subr.mxu0 0.0
        %4055 = vmatpush1.msra.mxu0 0.0
        %4056 = vmatprep.subr.mxu0 0.0
        %4057 = vmatpush1.msra.mxu0 0.0
        %4058 = vmatprep.subr.mxu0 0.0
        %4059 = vmatpush1.msra.mxu0 0.0
        %4060 = vmatprep.subr.mxu0 0.0
        %4061 = vmatpush1.msra.mxu0 0.0
        %4062 = vmatprep.subr.mxu0 0.0
        %4063 = vmatpush1.msra.mxu0 0.0
        %4064 = vmatprep.subr.mxu0 0.0
        %4065 = vmatpush1.msra.mxu0 0.0
        %4066 = vmatprep.subr.mxu0 0.0
        %4067 = vmatpush1.msra.mxu0 0.0
        %4068 = vmatprep.subr.mxu0 0.0
        %4069 = vmatpush1.msra.mxu0 0.0
        %4070 = vmatprep.subr.mxu0 0.0
        %4071 = vmatpush1.msra.mxu0 0.0
        %4072 = vmatprep.subr.mxu0 0.0
        %4073 = vmatpush1.msra.mxu0 0.0
        %4074 = vmatprep.mubr.f32.mxu0 0.0
        %4075 = vmatmul.mubr.f32.gmra.mrb[0].mxu0 %v4005
        %v4076 = vpop.f32.mrb[0].mxu0
        %v4077 = vadd.f32 %v4002, %v4076
        %v4078 = vpop.f32.mrb[0].mxu0
        %4079 = vdwg.mxu0
        %4080 = vst [vmem:[%s399] sm:$0x1] %v4077
        %v4081 = vmul.f32 %v4077, 0.5
        %v4082 = vmul.f32 %v4081, 1.442695
        %v4083 = vpow.pop %v4082
        %4084 = vst [vmem:[%s399] sm:$0x2] %v4083
        %s4085 = sand.u32 %s285, 1
        %s4086 = scalar_lea.sflag [#allocation5], %s4085
        %s4087 = sand.u32 %s285, 1
        %s4088 = smul.addr %s4087, 2
        %s4089 = scalar_lea.vmem [#allocation4], %s4088
        // Predicated region
        $region69: #{tpu_custom_call.1} parent=63 // pred_check
          %p4090 = pneg %p295
        $region70: #{tpu_custom_call.1} parent=63 // pred_check_branch
          %4092 = sbr.rel (%p4090) target = $region72
        $region71: #{tpu_custom_call.1} parent=63 // pred_region
          %s4094 = ssub.s32 32, 32
          %4095 = vsyncadd %s4086, %s4094
          %s4096 = smul.addr %s29, 2
          %s4097 = sadd.s32 %s30, %s4096
          %s4098 = smul.addr %s4097, 32
          %s4099 = scalar_lea.hbm %s11, %s4098
          %s4101 = sshll.u32 %s4089, 4
          %s4102 = int_to_ptr.vmem [resolvable:$true] %s4101
          %4104 = dma.vmem_to_hbm [thread:$0]  %s4102, 32, %s4099, %s4086
        $region72: #{tpu_custom_call.1} parent=63 // pred_fallthru
          _
      $region64: #{tpu_custom_call.1} parent=5 // pred_fallthru
        _
      %p4105 = scmp.le.s32.totalorder 2, %s20
      // Predicated region
      $region73: #{tpu_custom_call.1} parent=5 // pred_check
        %p4106 = pneg %p4105
      $region74: #{tpu_custom_call.1} parent=5 // pred_check_branch
        %4108 = sbr.rel (%p4106) target = $region76
      $region75: #{tpu_custom_call.1} parent=5 // pred_region
        %s4109 = ssub.s32 %s20, 2
        // Predicated region
        $region77: #{tpu_custom_call.1} parent=75 // pred_check
          %p4110 = pneg %p301
        $region78: #{tpu_custom_call.1} parent=75 // pred_check_branch
          %4112 = sbr.rel (%p4110) target = $region80
        $region79: #{tpu_custom_call.1} parent=75 // pred_region
          %s4113 = sand.u32 %s286, 1
          %s4114 = scalar_lea.sflag [#allocation5], %s4113
          %s4115 = sand.u32 %s286, 1
          %s4116 = smul.addr %s4115, 2
          %s4117 = scalar_lea.vmem [#allocation4], %s4116
          %4118 = dma.done %s4114, 32
        $region80: #{tpu_custom_call.1} parent=75 // pred_fallthru
          _
      $region76: #{tpu_custom_call.1} parent=5 // pred_fallthru
        _
    $region6: #{tpu_custom_call.1} parent=1 // loop_footer
      %s24 = sadd.s32 1, %s20
    $region7: #{tpu_custom_call.1} parent=1 // loop_footer_branch
      %19 = sbr.rel target = $region3
    $region8: #{tpu_custom_call.1} parent=1 // loop_exit
      _
    %4119 = vsyncpa [#allocation5], 1
    %s4120 = scalar_lea.sflag [#allocation5], 1
    %4121 = vsyncpa %s4120, 1

</llo_original>
